<compile_context>
chip_gen: v7x
topology: tpu7x:2x2x1
jax: 0.10.0
libtpu: 0.0.40
codegen_flags: <defaults>
</compile_context>

<pallas_src>
import functools

import jax
import jax.numpy as jnp
import numpy as np
from jax.experimental import pallas as pl
from jax.experimental.pallas import tpu as pltpu

LANE = 128


def _round_up(x, m):
    return ((x + m - 1) // m) * m


def _lowest(dtype):
    dtype = jnp.dtype(dtype)
    if jnp.issubdtype(dtype, jnp.floating):
        return -jnp.inf
    return int(jnp.iinfo(dtype).min)


# ----------------------------------------------------------------------------
# Pallas kernel: separable 3-D spatial max pool (W -> H -> D) on one temporal
# frame and one lane-dense payload tile.
#
# Block layout: x_ref (1, Dp, Hp, Wp, tile_r, 128)  ->  o_ref (1, O1, O2, O3,
# tile_r, 128).  The payload (tile_r, 128) trailing dims are never pooled, so
# every tap below is a whole-tile load/max/store with static leading indices.
# ----------------------------------------------------------------------------
def _make_spatial_pool_kernel(K, S, O1, O2, O3):
    def kernel(x_ref, o_ref, t1_ref, t2_ref):
        # ---- W axis:  x (1,Dp,Hp,Wp,r,128) -> t1 (Dp,Hp,O3,r,128) ----------
        for w in range(O3):
            acc = x_ref[0, :, :, w * S, :, :]
            for k in range(1, K):
                acc = jnp.maximum(acc, x_ref[0, :, :, w * S + k, :, :])
            t1_ref[:, :, w, :, :] = acc
        # ---- H axis:  t1 -> t2 (Dp,O2,O3,r,128) -----------------------------
        for h in range(O2):
            acc = t1_ref[:, h * S, :, :, :]
            for k in range(1, K):
                acc = jnp.maximum(acc, t1_ref[:, h * S + k, :, :, :])
            t2_ref[:, h, :, :, :] = acc
        # ---- D axis:  t2 -> out (1,O1,O2,O3,r,128) --------------------------
        for d in range(O1):
            acc = t2_ref[d * S, :, :, :, :]
            for k in range(1, K):
                acc = jnp.maximum(acc, t2_ref[d * S + k, :, :, :, :])
            o_ref[0, d, :, :, :, :] = acc

    return kernel


# ----------------------------------------------------------------------------
# Wrapper: MaxPool4d forward (matches the PyTorch module semantics).
# ----------------------------------------------------------------------------
@functools.partial(jax.jit, static_argnames=("K", "S", "P"))
def maxpool4d_pallas(x, *, K, S=1, P=0):
    # x: (B, C, T, D, H, W)
    B, C, T, A1, A2, A3 = x.shape
    if not (0 <= P <= K // 2):
        raise ValueError("MaxPool4d requires 0 <= padding <= kernel_size // 2")

    def out_dim(L):
        return (L + 2 * P - K) // S + 1          # integer floor, as PyTorch

    O0, O1, O2, O3 = out_dim(T), out_dim(A1), out_dim(A2), out_dim(A3)
    if min(O0, O1, O2, O3) < 1:
        raise ValueError("pooling window larger than the padded input")

    dtype = x.dtype
    itemsize = jnp.dtype(dtype).itemsize
    low = _lowest(dtype)

    A1p, A2p, A3p = A1 + 2 * P, A2 + 2 * P, A3 + 2 * P
    M = B * C                                    # lane-dense payload
    R = -(-M // LANE)                            # 128-lane payload rows

    # ---- payload tile (sublane rows of 128 lanes) sized towards ~4 MiB -----
    in_rows = A1p * A2p * A3p
    bytes_per_r = in_rows * LANE * itemsize
    target_block_bytes = 4 * 1024 * 1024
    if R <= 8:
        tile_r = R                               # full dim (allowed by (8,128) rule)
    else:
        tile_r = max(8, min(_round_up(R, 8),
                            (target_block_bytes // bytes_per_r) // 8 * 8))
    Rp = _round_up(R, tile_r)
    n_r = Rp // tile_r
    Mp = Rp * LANE

    # ---- single layout pass on the RAW input (no K^3 expansion) ------------
    # (B, C, T, D, H, W) -> (T, D, H, W, B*C) -> pad -> (T, Dp, Hp, Wp, Rp, 128)
    xt = jnp.transpose(x, (2, 3, 4, 5, 0, 1)).reshape(T, A1, A2, A3, M)
    xp = jnp.pad(xt, ((0, 0), (P, P), (P, P), (P, P), (0, Mp - M)),
                 constant_values=low)
    xp = xp.reshape(T, A1p, A2p, A3p, Rp, LANE)

    # ---- VMEM budget from actual block bytes (double-buffered) -------------
    tr_eff = max(tile_r, 8)                      # internal sublane rounding
    blk_in = in_rows * tr_eff * LANE * itemsize
    blk_out = O1 * O2 * O3 * tr_eff * LANE * itemsize
    scr = (A1p * A2p * O3 + A1p * O2 * O3) * tr_eff * LANE * itemsize
    vmem_limit = int(max(2 * (blk_in + blk_out) + scr + (2 << 20), 8 << 20))

    kernel = _make_spatial_pool_kernel(K, S, O1, O2, O3)

    pooled = pl.pallas_call(
        kernel,
        out_shape=jax.ShapeDtypeStruct((T, O1, O2, O3, Rp, LANE), dtype),
        grid=(T, n_r),
        in_specs=[pl.BlockSpec((1, A1p, A2p, A3p, tile_r, LANE),
                               lambda t, r: (t, 0, 0, 0, r, 0))],
        out_specs=pl.BlockSpec((1, O1, O2, O3, tile_r, LANE),
                               lambda t, r: (t, 0, 0, 0, r, 0)),
        scratch_shapes=[pltpu.VMEM((A1p, A2p, O3, tile_r, LANE), dtype),
                        pltpu.VMEM((A1p, O2, O3, tile_r, LANE), dtype)],
        compiler_params=pltpu.CompilerParams(
            dimension_semantics=("parallel", "parallel"),
            vmem_limit_bytes=vmem_limit),
    )(xp)                                        # (T, O1, O2, O3, Rp, 128)

    # ---- temporal 1-D max pool: tiny pooled tensor, plain XLA --------------
    if P > 0:
        pooled = jnp.pad(pooled, ((P, P),) + ((0, 0),) * 5, constant_values=low)
    out = None
    for k in range(K):
        end = k + (O0 - 1) * S + 1
        tap = pooled[k:end:S] if S > 1 else pooled[k:end]
        out = tap if out is None else jnp.maximum(out, tap)

    # (O0, O1, O2, O3, Rp, 128) -> (B, C, O0, O1, O2, O3)
    out = out.reshape(O0, O1, O2, O3, Mp)[..., :M]
    out = out.reshape(O0, O1, O2, O3, B, C)
    return jnp.transpose(out, (4, 5, 0, 1, 2, 3))


# ----------------------------------------------------------------------------
# Pure-JAX reference mirroring the PyTorch module (pool3d per frame, stack,
# then pool1d over the temporal axis; max pooling pads with -inf).
# ----------------------------------------------------------------------------
def maxpool4d_reference(x, *, K, S=1, P=0):
    T = x.shape[2]
    low = _lowest(x.dtype)
    frames = [
        jax.lax.reduce_window(
            x[:, :, t], low, jax.lax.max,
            window_dimensions=(1, 1, K, K, K),
            window_strides=(1, 1, S, S, S),
            padding=((0, 0), (0, 0), (P, P), (P, P), (P, P)))
        for t in range(T)
    ]
    y = jnp.stack(frames, axis=2)                # (B, C, T, O1, O2, O3)
    y = jax.lax.reduce_window(
        y, low, jax.lax.max,
        window_dimensions=(1, 1, K, 1, 1, 1),
        window_strides=(1, 1, S, 1, 1, 1),
        padding=((0, 0), (0, 0), (P, P), (0, 0), (0, 0), (0, 0)))
    return y                                     # (B, C, O0, O1, O2, O3)


if __name__ == "__main__":
    # MaxPool4d(kernel_size=3, stride=2, padding=1) on a small 6-D input.
    K, S, P = 3, 2, 1
    B, C, T, A = 2, 4, 8, 8

    x = jax.random.normal(jax.random.PRNGKey(0), (B, C, T, A, A, A),
                          dtype=jnp.float32)

    out = jax.block_until_ready(maxpool4d_pallas(x, K=K, S=S, P=P))
    ref = jax.block_until_ready(maxpool4d_reference(x, K=K, S=S, P=P))

    assert out.shape == ref.shape, (out.shape, ref.shape)
    np.testing.assert_allclose(np.asarray(out), np.asarray(ref),
                               rtol=0.0, atol=0.0)
    print("KERNEL_OK")
</pallas_src>

<mosaic_0001>
module attributes {stable_mosaic.version = 11 : i64} {
  func.func @kernel(%arg0: i32, %arg1: i32, %arg2: memref<1x10x10x10x1x128xf32, #tpu.memory_space<vmem>>, %arg3: memref<1x4x4x4x1x128xf32, #tpu.memory_space<vmem>>, %arg4: memref<10x10x4x1x128xf32, #tpu.memory_space<vmem>>, %arg5: memref<10x4x4x1x128xf32, #tpu.memory_space<vmem>>) attributes {dimension_semantics = [#tpu.dimension_semantics<parallel>, #tpu.dimension_semantics<parallel>], iteration_bounds = array<i64: 8, 1>, scalar_prefetch = 0 : i64, scratch_operands = 2 : i64, tpu.core_type = #tpu.core_type<tc>, window_params = [{transform_indices = @transform_0, window_bounds = array<i64: 1, 10, 10, 10, 1, 128>}, {transform_indices = @transform_1, window_bounds = array<i64: 1, 4, 4, 4, 1, 128>}]} {
    %c0 = arith.constant 0 : index
    %c0_0 = arith.constant 0 : index
    %c0_1 = arith.constant 0 : index
    %c0_2 = arith.constant 0 : index
    %c0_3 = arith.constant 0 : index
    %c0_4 = arith.constant 0 : index
    %0 = vector.load %arg2[%c0, %c0_0, %c0_1, %c0_2, %c0_3, %c0_4] : memref<1x10x10x10x1x128xf32, #tpu.memory_space<vmem>>, vector<1x10x10x1x1x128xf32>
    %1 = vector.shape_cast %0 : vector<1x10x10x1x1x128xf32> to vector<10x10x1x128xf32>
    %c0_5 = arith.constant 0 : index
    %c0_6 = arith.constant 0 : index
    %c0_7 = arith.constant 0 : index
    %c1 = arith.constant 1 : index
    %c0_8 = arith.constant 0 : index
    %c0_9 = arith.constant 0 : index
    %2 = vector.load %arg2[%c0_5, %c0_6, %c0_7, %c1, %c0_8, %c0_9] : memref<1x10x10x10x1x128xf32, #tpu.memory_space<vmem>>, vector<1x10x10x1x1x128xf32>
    %3 = vector.shape_cast %2 : vector<1x10x10x1x1x128xf32> to vector<10x10x1x128xf32>
    %4 = arith.maximumf %1, %3 : vector<10x10x1x128xf32>
    %c0_10 = arith.constant 0 : index
    %c0_11 = arith.constant 0 : index
    %c0_12 = arith.constant 0 : index
    %c2 = arith.constant 2 : index
    %c0_13 = arith.constant 0 : index
    %c0_14 = arith.constant 0 : index
    %5 = vector.load %arg2[%c0_10, %c0_11, %c0_12, %c2, %c0_13, %c0_14] : memref<1x10x10x10x1x128xf32, #tpu.memory_space<vmem>>, vector<1x10x10x1x1x128xf32>
    %6 = vector.shape_cast %5 : vector<1x10x10x1x1x128xf32> to vector<10x10x1x128xf32>
    %7 = arith.maximumf %4, %6 : vector<10x10x1x128xf32>
    %c0_15 = arith.constant 0 : index
    %c0_16 = arith.constant 0 : index
    %c0_17 = arith.constant 0 : index
    %c0_18 = arith.constant 0 : index
    %c0_19 = arith.constant 0 : index
    %8 = vector.load %arg4[%c0_15, %c0_16, %c0_17, %c0_18, %c0_19] : memref<10x10x4x1x128xf32, #tpu.memory_space<vmem>>, vector<10x10x1x1x128xf32>
    %9 = vector.shape_cast %8 : vector<10x10x1x1x128xf32> to vector<10x10x1x128xf32>
    %10 = vector.shape_cast %7 : vector<10x10x1x128xf32> to vector<10x10x1x1x128xf32>
    tpu.vector_store %arg4[%c0_15, %c0_16, %c0_17, %c0_18, %c0_19], %10 {strides = array<i32>} : memref<10x10x4x1x128xf32, #tpu.memory_space<vmem>>, vector<10x10x1x1x128xf32>,
    %c0_20 = arith.constant 0 : index
    %c0_21 = arith.constant 0 : index
    %c0_22 = arith.constant 0 : index
    %c2_23 = arith.constant 2 : index
    %c0_24 = arith.constant 0 : index
    %c0_25 = arith.constant 0 : index
    %11 = vector.load %arg2[%c0_20, %c0_21, %c0_22, %c2_23, %c0_24, %c0_25] : memref<1x10x10x10x1x128xf32, #tpu.memory_space<vmem>>, vector<1x10x10x1x1x128xf32>
    %12 = vector.shape_cast %11 : vector<1x10x10x1x1x128xf32> to vector<10x10x1x128xf32>
    %c0_26 = arith.constant 0 : index
    %c0_27 = arith.constant 0 : index
    %c0_28 = arith.constant 0 : index
    %c3 = arith.constant 3 : index
    %c0_29 = arith.constant 0 : index
    %c0_30 = arith.constant 0 : index
    %13 = vector.load %arg2[%c0_26, %c0_27, %c0_28, %c3, %c0_29, %c0_30] : memref<1x10x10x10x1x128xf32, #tpu.memory_space<vmem>>, vector<1x10x10x1x1x128xf32>
    %14 = vector.shape_cast %13 : vector<1x10x10x1x1x128xf32> to vector<10x10x1x128xf32>
    %15 = arith.maximumf %12, %14 : vector<10x10x1x128xf32>
    %c0_31 = arith.constant 0 : index
    %c0_32 = arith.constant 0 : index
    %c0_33 = arith.constant 0 : index
    %c4 = arith.constant 4 : index
    %c0_34 = arith.constant 0 : index
    %c0_35 = arith.constant 0 : index
    %16 = vector.load %arg2[%c0_31, %c0_32, %c0_33, %c4, %c0_34, %c0_35] : memref<1x10x10x10x1x128xf32, #tpu.memory_space<vmem>>, vector<1x10x10x1x1x128xf32>
    %17 = vector.shape_cast %16 : vector<1x10x10x1x1x128xf32> to vector<10x10x1x128xf32>
    %18 = arith.maximumf %15, %17 : vector<10x10x1x128xf32>
    %c0_36 = arith.constant 0 : index
    %c0_37 = arith.constant 0 : index
    %c1_38 = arith.constant 1 : index
    %c0_39 = arith.constant 0 : index
    %c0_40 = arith.constant 0 : index
    %19 = vector.load %arg4[%c0_36, %c0_37, %c1_38, %c0_39, %c0_40] : memref<10x10x4x1x128xf32, #tpu.memory_space<vmem>>, vector<10x10x1x1x128xf32>
    %20 = vector.shape_cast %19 : vector<10x10x1x1x128xf32> to vector<10x10x1x128xf32>
    %21 = vector.shape_cast %18 : vector<10x10x1x128xf32> to vector<10x10x1x1x128xf32>
    tpu.vector_store %arg4[%c0_36, %c0_37, %c1_38, %c0_39, %c0_40], %21 {strides = array<i32>} : memref<10x10x4x1x128xf32, #tpu.memory_space<vmem>>, vector<10x10x1x1x128xf32>,
    %c0_41 = arith.constant 0 : index
    %c0_42 = arith.constant 0 : index
    %c0_43 = arith.constant 0 : index
    %c4_44 = arith.constant 4 : index
    %c0_45 = arith.constant 0 : index
    %c0_46 = arith.constant 0 : index
    %22 = vector.load %arg2[%c0_41, %c0_42, %c0_43, %c4_44, %c0_45, %c0_46] : memref<1x10x10x10x1x128xf32, #tpu.memory_space<vmem>>, vector<1x10x10x1x1x128xf32>
    %23 = vector.shape_cast %22 : vector<1x10x10x1x1x128xf32> to vector<10x10x1x128xf32>
    %c0_47 = arith.constant 0 : index
    %c0_48 = arith.constant 0 : index
    %c0_49 = arith.constant 0 : index
    %c5 = arith.constant 5 : index
    %c0_50 = arith.constant 0 : index
    %c0_51 = arith.constant 0 : index
    %24 = vector.load %arg2[%c0_47, %c0_48, %c0_49, %c5, %c0_50, %c0_51] : memref<1x10x10x10x1x128xf32, #tpu.memory_space<vmem>>, vector<1x10x10x1x1x128xf32>
    %25 = vector.shape_cast %24 : vector<1x10x10x1x1x128xf32> to vector<10x10x1x128xf32>
    %26 = arith.maximumf %23, %25 : vector<10x10x1x128xf32>
    %c0_52 = arith.constant 0 : index
    %c0_53 = arith.constant 0 : index
    %c0_54 = arith.constant 0 : index
    %c6 = arith.constant 6 : index
    %c0_55 = arith.constant 0 : index
    %c0_56 = arith.constant 0 : index
    %27 = vector.load %arg2[%c0_52, %c0_53, %c0_54, %c6, %c0_55, %c0_56] : memref<1x10x10x10x1x128xf32, #tpu.memory_space<vmem>>, vector<1x10x10x1x1x128xf32>
    %28 = vector.shape_cast %27 : vector<1x10x10x1x1x128xf32> to vector<10x10x1x128xf32>
    %29 = arith.maximumf %26, %28 : vector<10x10x1x128xf32>
    %c0_57 = arith.constant 0 : index
    %c0_58 = arith.constant 0 : index
    %c2_59 = arith.constant 2 : index
    %c0_60 = arith.constant 0 : index
    %c0_61 = arith.constant 0 : index
    %30 = vector.load %arg4[%c0_57, %c0_58, %c2_59, %c0_60, %c0_61] : memref<10x10x4x1x128xf32, #tpu.memory_space<vmem>>, vector<10x10x1x1x128xf32>
    %31 = vector.shape_cast %30 : vector<10x10x1x1x128xf32> to vector<10x10x1x128xf32>
    %32 = vector.shape_cast %29 : vector<10x10x1x128xf32> to vector<10x10x1x1x128xf32>
    tpu.vector_store %arg4[%c0_57, %c0_58, %c2_59, %c0_60, %c0_61], %32 {strides = array<i32>} : memref<10x10x4x1x128xf32, #tpu.memory_space<vmem>>, vector<10x10x1x1x128xf32>,
    %c0_62 = arith.constant 0 : index
    %c0_63 = arith.constant 0 : index
    %c0_64 = arith.constant 0 : index
    %c6_65 = arith.constant 6 : index
    %c0_66 = arith.constant 0 : index
    %c0_67 = arith.constant 0 : index
    %33 = vector.load %arg2[%c0_62, %c0_63, %c0_64, %c6_65, %c0_66, %c0_67] : memref<1x10x10x10x1x128xf32, #tpu.memory_space<vmem>>, vector<1x10x10x1x1x128xf32>
    %34 = vector.shape_cast %33 : vector<1x10x10x1x1x128xf32> to vector<10x10x1x128xf32>
    %c0_68 = arith.constant 0 : index
    %c0_69 = arith.constant 0 : index
    %c0_70 = arith.constant 0 : index
    %c7 = arith.constant 7 : index
    %c0_71 = arith.constant 0 : index
    %c0_72 = arith.constant 0 : index
    %35 = vector.load %arg2[%c0_68, %c0_69, %c0_70, %c7, %c0_71, %c0_72] : memref<1x10x10x10x1x128xf32, #tpu.memory_space<vmem>>, vector<1x10x10x1x1x128xf32>
    %36 = vector.shape_cast %35 : vector<1x10x10x1x1x128xf32> to vector<10x10x1x128xf32>
    %37 = arith.maximumf %34, %36 : vector<10x10x1x128xf32>
    %c0_73 = arith.constant 0 : index
    %c0_74 = arith.constant 0 : index
    %c0_75 = arith.constant 0 : index
    %c8 = arith.constant 8 : index
    %c0_76 = arith.constant 0 : index
    %c0_77 = arith.constant 0 : index
    %38 = vector.load %arg2[%c0_73, %c0_74, %c0_75, %c8, %c0_76, %c0_77] : memref<1x10x10x10x1x128xf32, #tpu.memory_space<vmem>>, vector<1x10x10x1x1x128xf32>
    %39 = vector.shape_cast %38 : vector<1x10x10x1x1x128xf32> to vector<10x10x1x128xf32>
    %40 = arith.maximumf %37, %39 : vector<10x10x1x128xf32>
    %c0_78 = arith.constant 0 : index
    %c0_79 = arith.constant 0 : index
    %c3_80 = arith.constant 3 : index
    %c0_81 = arith.constant 0 : index
    %c0_82 = arith.constant 0 : index
    %41 = vector.load %arg4[%c0_78, %c0_79, %c3_80, %c0_81, %c0_82] : memref<10x10x4x1x128xf32, #tpu.memory_space<vmem>>, vector<10x10x1x1x128xf32>
    %42 = vector.shape_cast %41 : vector<10x10x1x1x128xf32> to vector<10x10x1x128xf32>
    %43 = vector.shape_cast %40 : vector<10x10x1x128xf32> to vector<10x10x1x1x128xf32>
    tpu.vector_store %arg4[%c0_78, %c0_79, %c3_80, %c0_81, %c0_82], %43 {strides = array<i32>} : memref<10x10x4x1x128xf32, #tpu.memory_space<vmem>>, vector<10x10x1x1x128xf32>,
    %c0_83 = arith.constant 0 : index
    %c0_84 = arith.constant 0 : index
    %c0_85 = arith.constant 0 : index
    %c0_86 = arith.constant 0 : index
    %c0_87 = arith.constant 0 : index
    %44 = vector.load %arg4[%c0_83, %c0_84, %c0_85, %c0_86, %c0_87] : memref<10x10x4x1x128xf32, #tpu.memory_space<vmem>>, vector<10x1x4x1x128xf32>
    %45 = vector.shape_cast %44 : vector<10x1x4x1x128xf32> to vector<10x4x1x128xf32>
    %c0_88 = arith.constant 0 : index
    %c1_89 = arith.constant 1 : index
    %c0_90 = arith.constant 0 : index
    %c0_91 = arith.constant 0 : index
    %c0_92 = arith.constant 0 : index
    %46 = vector.load %arg4[%c0_88, %c1_89, %c0_90, %c0_91, %c0_92] : memref<10x10x4x1x128xf32, #tpu.memory_space<vmem>>, vector<10x1x4x1x128xf32>
    %47 = vector.shape_cast %46 : vector<10x1x4x1x128xf32> to vector<10x4x1x128xf32>
    %48 = arith.maximumf %45, %47 : vector<10x4x1x128xf32>
    %c0_93 = arith.constant 0 : index
    %c2_94 = arith.constant 2 : index
    %c0_95 = arith.constant 0 : index
    %c0_96 = arith.constant 0 : index
    %c0_97 = arith.constant 0 : index
    %49 = vector.load %arg4[%c0_93, %c2_94, %c0_95, %c0_96, %c0_97] : memref<10x10x4x1x128xf32, #tpu.memory_space<vmem>>, vector<10x1x4x1x128xf32>
    %50 = vector.shape_cast %49 : vector<10x1x4x1x128xf32> to vector<10x4x1x128xf32>
    %51 = arith.maximumf %48, %50 : vector<10x4x1x128xf32>
    %c0_98 = arith.constant 0 : index
    %c0_99 = arith.constant 0 : index
    %c0_100 = arith.constant 0 : index
    %c0_101 = arith.constant 0 : index
    %c0_102 = arith.constant 0 : index
    %52 = vector.load %arg5[%c0_98, %c0_99, %c0_100, %c0_101, %c0_102] : memref<10x4x4x1x128xf32, #tpu.memory_space<vmem>>, vector<10x1x4x1x128xf32>
    %53 = vector.shape_cast %52 : vector<10x1x4x1x128xf32> to vector<10x4x1x128xf32>
    %54 = vector.shape_cast %51 : vector<10x4x1x128xf32> to vector<10x1x4x1x128xf32>
    tpu.vector_store %arg5[%c0_98, %c0_99, %c0_100, %c0_101, %c0_102], %54 {strides = array<i32>} : memref<10x4x4x1x128xf32, #tpu.memory_space<vmem>>, vector<10x1x4x1x128xf32>,
    %c0_103 = arith.constant 0 : index
    %c2_104 = arith.constant 2 : index
    %c0_105 = arith.constant 0 : index
    %c0_106 = arith.constant 0 : index
    %c0_107 = arith.constant 0 : index
    %55 = vector.load %arg4[%c0_103, %c2_104, %c0_105, %c0_106, %c0_107] : memref<10x10x4x1x128xf32, #tpu.memory_space<vmem>>, vector<10x1x4x1x128xf32>
    %56 = vector.shape_cast %55 : vector<10x1x4x1x128xf32> to vector<10x4x1x128xf32>
    %c0_108 = arith.constant 0 : index
    %c3_109 = arith.constant 3 : index
    %c0_110 = arith.constant 0 : index
    %c0_111 = arith.constant 0 : index
    %c0_112 = arith.constant 0 : index
    %57 = vector.load %arg4[%c0_108, %c3_109, %c0_110, %c0_111, %c0_112] : memref<10x10x4x1x128xf32, #tpu.memory_space<vmem>>, vector<10x1x4x1x128xf32>
    %58 = vector.shape_cast %57 : vector<10x1x4x1x128xf32> to vector<10x4x1x128xf32>
    %59 = arith.maximumf %56, %58 : vector<10x4x1x128xf32>
    %c0_113 = arith.constant 0 : index
    %c4_114 = arith.constant 4 : index
    %c0_115 = arith.constant 0 : index
    %c0_116 = arith.constant 0 : index
    %c0_117 = arith.constant 0 : index
    %60 = vector.load %arg4[%c0_113, %c4_114, %c0_115, %c0_116, %c0_117] : memref<10x10x4x1x128xf32, #tpu.memory_space<vmem>>, vector<10x1x4x1x128xf32>
    %61 = vector.shape_cast %60 : vector<10x1x4x1x128xf32> to vector<10x4x1x128xf32>
    %62 = arith.maximumf %59, %61 : vector<10x4x1x128xf32>
    %c0_118 = arith.constant 0 : index
    %c1_119 = arith.constant 1 : index
    %c0_120 = arith.constant 0 : index
    %c0_121 = arith.constant 0 : index
    %c0_122 = arith.constant 0 : index
    %63 = vector.load %arg5[%c0_118, %c1_119, %c0_120, %c0_121, %c0_122] : memref<10x4x4x1x128xf32, #tpu.memory_space<vmem>>, vector<10x1x4x1x128xf32>
    %64 = vector.shape_cast %63 : vector<10x1x4x1x128xf32> to vector<10x4x1x128xf32>
    %65 = vector.shape_cast %62 : vector<10x4x1x128xf32> to vector<10x1x4x1x128xf32>
    tpu.vector_store %arg5[%c0_118, %c1_119, %c0_120, %c0_121, %c0_122], %65 {strides = array<i32>} : memref<10x4x4x1x128xf32, #tpu.memory_space<vmem>>, vector<10x1x4x1x128xf32>,
    %c0_123 = arith.constant 0 : index
    %c4_124 = arith.constant 4 : index
    %c0_125 = arith.constant 0 : index
    %c0_126 = arith.constant 0 : index
    %c0_127 = arith.constant 0 : index
    %66 = vector.load %arg4[%c0_123, %c4_124, %c0_125, %c0_126, %c0_127] : memref<10x10x4x1x128xf32, #tpu.memory_space<vmem>>, vector<10x1x4x1x128xf32>
    %67 = vector.shape_cast %66 : vector<10x1x4x1x128xf32> to vector<10x4x1x128xf32>
    %c0_128 = arith.constant 0 : index
    %c5_129 = arith.constant 5 : index
    %c0_130 = arith.constant 0 : index
    %c0_131 = arith.constant 0 : index
    %c0_132 = arith.constant 0 : index
    %68 = vector.load %arg4[%c0_128, %c5_129, %c0_130, %c0_131, %c0_132] : memref<10x10x4x1x128xf32, #tpu.memory_space<vmem>>, vector<10x1x4x1x128xf32>
    %69 = vector.shape_cast %68 : vector<10x1x4x1x128xf32> to vector<10x4x1x128xf32>
    %70 = arith.maximumf %67, %69 : vector<10x4x1x128xf32>
    %c0_133 = arith.constant 0 : index
    %c6_134 = arith.constant 6 : index
    %c0_135 = arith.constant 0 : index
    %c0_136 = arith.constant 0 : index
    %c0_137 = arith.constant 0 : index
    %71 = vector.load %arg4[%c0_133, %c6_134, %c0_135, %c0_136, %c0_137] : memref<10x10x4x1x128xf32, #tpu.memory_space<vmem>>, vector<10x1x4x1x128xf32>
    %72 = vector.shape_cast %71 : vector<10x1x4x1x128xf32> to vector<10x4x1x128xf32>
    %73 = arith.maximumf %70, %72 : vector<10x4x1x128xf32>
    %c0_138 = arith.constant 0 : index
    %c2_139 = arith.constant 2 : index
    %c0_140 = arith.constant 0 : index
    %c0_141 = arith.constant 0 : index
    %c0_142 = arith.constant 0 : index
    %74 = vector.load %arg5[%c0_138, %c2_139, %c0_140, %c0_141, %c0_142] : memref<10x4x4x1x128xf32, #tpu.memory_space<vmem>>, vector<10x1x4x1x128xf32>
    %75 = vector.shape_cast %74 : vector<10x1x4x1x128xf32> to vector<10x4x1x128xf32>
    %76 = vector.shape_cast %73 : vector<10x4x1x128xf32> to vector<10x1x4x1x128xf32>
    tpu.vector_store %arg5[%c0_138, %c2_139, %c0_140, %c0_141, %c0_142], %76 {strides = array<i32>} : memref<10x4x4x1x128xf32, #tpu.memory_space<vmem>>, vector<10x1x4x1x128xf32>,
    %c0_143 = arith.constant 0 : index
    %c6_144 = arith.constant 6 : index
    %c0_145 = arith.constant 0 : index
    %c0_146 = arith.constant 0 : index
    %c0_147 = arith.constant 0 : index
    %77 = vector.load %arg4[%c0_143, %c6_144, %c0_145, %c0_146, %c0_147] : memref<10x10x4x1x128xf32, #tpu.memory_space<vmem>>, vector<10x1x4x1x128xf32>
    %78 = vector.shape_cast %77 : vector<10x1x4x1x128xf32> to vector<10x4x1x128xf32>
    %c0_148 = arith.constant 0 : index
    %c7_149 = arith.constant 7 : index
    %c0_150 = arith.constant 0 : index
    %c0_151 = arith.constant 0 : index
    %c0_152 = arith.constant 0 : index
    %79 = vector.load %arg4[%c0_148, %c7_149, %c0_150, %c0_151, %c0_152] : memref<10x10x4x1x128xf32, #tpu.memory_space<vmem>>, vector<10x1x4x1x128xf32>
    %80 = vector.shape_cast %79 : vector<10x1x4x1x128xf32> to vector<10x4x1x128xf32>
    %81 = arith.maximumf %78, %80 : vector<10x4x1x128xf32>
    %c0_153 = arith.constant 0 : index
    %c8_154 = arith.constant 8 : index
    %c0_155 = arith.constant 0 : index
    %c0_156 = arith.constant 0 : index
    %c0_157 = arith.constant 0 : index
    %82 = vector.load %arg4[%c0_153, %c8_154, %c0_155, %c0_156, %c0_157] : memref<10x10x4x1x128xf32, #tpu.memory_space<vmem>>, vector<10x1x4x1x128xf32>
    %83 = vector.shape_cast %82 : vector<10x1x4x1x128xf32> to vector<10x4x1x128xf32>
    %84 = arith.maximumf %81, %83 : vector<10x4x1x128xf32>
    %c0_158 = arith.constant 0 : index
    %c3_159 = arith.constant 3 : index
    %c0_160 = arith.constant 0 : index
    %c0_161 = arith.constant 0 : index
    %c0_162 = arith.constant 0 : index
    %85 = vector.load %arg5[%c0_158, %c3_159, %c0_160, %c0_161, %c0_162] : memref<10x4x4x1x128xf32, #tpu.memory_space<vmem>>, vector<10x1x4x1x128xf32>
    %86 = vector.shape_cast %85 : vector<10x1x4x1x128xf32> to vector<10x4x1x128xf32>
    %87 = vector.shape_cast %84 : vector<10x4x1x128xf32> to vector<10x1x4x1x128xf32>
    tpu.vector_store %arg5[%c0_158, %c3_159, %c0_160, %c0_161, %c0_162], %87 {strides = array<i32>} : memref<10x4x4x1x128xf32, #tpu.memory_space<vmem>>, vector<10x1x4x1x128xf32>,
    %c0_163 = arith.constant 0 : index
    %c0_164 = arith.constant 0 : index
    %c0_165 = arith.constant 0 : index
    %c0_166 = arith.constant 0 : index
    %c0_167 = arith.constant 0 : index
    %88 = vector.load %arg5[%c0_163, %c0_164, %c0_165, %c0_166, %c0_167] : memref<10x4x4x1x128xf32, #tpu.memory_space<vmem>>, vector<1x4x4x1x128xf32>
    %89 = vector.shape_cast %88 : vector<1x4x4x1x128xf32> to vector<4x4x1x128xf32>
    %c1_168 = arith.constant 1 : index
    %c0_169 = arith.constant 0 : index
    %c0_170 = arith.constant 0 : index
    %c0_171 = arith.constant 0 : index
    %c0_172 = arith.constant 0 : index
    %90 = vector.load %arg5[%c1_168, %c0_169, %c0_170, %c0_171, %c0_172] : memref<10x4x4x1x128xf32, #tpu.memory_space<vmem>>, vector<1x4x4x1x128xf32>
    %91 = vector.shape_cast %90 : vector<1x4x4x1x128xf32> to vector<4x4x1x128xf32>
    %92 = arith.maximumf %89, %91 : vector<4x4x1x128xf32>
    %c2_173 = arith.constant 2 : index
    %c0_174 = arith.constant 0 : index
    %c0_175 = arith.constant 0 : index
    %c0_176 = arith.constant 0 : index
    %c0_177 = arith.constant 0 : index
    %93 = vector.load %arg5[%c2_173, %c0_174, %c0_175, %c0_176, %c0_177] : memref<10x4x4x1x128xf32, #tpu.memory_space<vmem>>, vector<1x4x4x1x128xf32>
    %94 = vector.shape_cast %93 : vector<1x4x4x1x128xf32> to vector<4x4x1x128xf32>
    %95 = arith.maximumf %92, %94 : vector<4x4x1x128xf32>
    %c0_178 = arith.constant 0 : index
    %c0_179 = arith.constant 0 : index
    %c0_180 = arith.constant 0 : index
    %c0_181 = arith.constant 0 : index
    %c0_182 = arith.constant 0 : index
    %c0_183 = arith.constant 0 : index
    %96 = vector.load %arg3[%c0_178, %c0_179, %c0_180, %c0_181, %c0_182, %c0_183] : memref<1x4x4x4x1x128xf32, #tpu.memory_space<vmem>>, vector<1x1x4x4x1x128xf32>
    %97 = vector.shape_cast %96 : vector<1x1x4x4x1x128xf32> to vector<4x4x1x128xf32>
    %98 = vector.shape_cast %95 : vector<4x4x1x128xf32> to vector<1x1x4x4x1x128xf32>
    tpu.vector_store %arg3[%c0_178, %c0_179, %c0_180, %c0_181, %c0_182, %c0_183], %98 {strides = array<i32>} : memref<1x4x4x4x1x128xf32, #tpu.memory_space<vmem>>, vector<1x1x4x4x1x128xf32>,
    %c2_184 = arith.constant 2 : index
    %c0_185 = arith.constant 0 : index
    %c0_186 = arith.constant 0 : index
    %c0_187 = arith.constant 0 : index
    %c0_188 = arith.constant 0 : index
    %99 = vector.load %arg5[%c2_184, %c0_185, %c0_186, %c0_187, %c0_188] : memref<10x4x4x1x128xf32, #tpu.memory_space<vmem>>, vector<1x4x4x1x128xf32>
    %100 = vector.shape_cast %99 : vector<1x4x4x1x128xf32> to vector<4x4x1x128xf32>
    %c3_189 = arith.constant 3 : index
    %c0_190 = arith.constant 0 : index
    %c0_191 = arith.constant 0 : index
    %c0_192 = arith.constant 0 : index
    %c0_193 = arith.constant 0 : index
    %101 = vector.load %arg5[%c3_189, %c0_190, %c0_191, %c0_192, %c0_193] : memref<10x4x4x1x128xf32, #tpu.memory_space<vmem>>, vector<1x4x4x1x128xf32>
    %102 = vector.shape_cast %101 : vector<1x4x4x1x128xf32> to vector<4x4x1x128xf32>
    %103 = arith.maximumf %100, %102 : vector<4x4x1x128xf32>
    %c4_194 = arith.constant 4 : index
    %c0_195 = arith.constant 0 : index
    %c0_196 = arith.constant 0 : index
    %c0_197 = arith.constant 0 : index
    %c0_198 = arith.constant 0 : index
    %104 = vector.load %arg5[%c4_194, %c0_195, %c0_196, %c0_197, %c0_198] : memref<10x4x4x1x128xf32, #tpu.memory_space<vmem>>, vector<1x4x4x1x128xf32>
    %105 = vector.shape_cast %104 : vector<1x4x4x1x128xf32> to vector<4x4x1x128xf32>
    %106 = arith.maximumf %103, %105 : vector<4x4x1x128xf32>
    %c0_199 = arith.constant 0 : index
    %c1_200 = arith.constant 1 : index
    %c0_201 = arith.constant 0 : index
    %c0_202 = arith.constant 0 : index
    %c0_203 = arith.constant 0 : index
    %c0_204 = arith.constant 0 : index
    %107 = vector.load %arg3[%c0_199, %c1_200, %c0_201, %c0_202, %c0_203, %c0_204] : memref<1x4x4x4x1x128xf32, #tpu.memory_space<vmem>>, vector<1x1x4x4x1x128xf32>
    %108 = vector.shape_cast %107 : vector<1x1x4x4x1x128xf32> to vector<4x4x1x128xf32>
    %109 = vector.shape_cast %106 : vector<4x4x1x128xf32> to vector<1x1x4x4x1x128xf32>
    tpu.vector_store %arg3[%c0_199, %c1_200, %c0_201, %c0_202, %c0_203, %c0_204], %109 {strides = array<i32>} : memref<1x4x4x4x1x128xf32, #tpu.memory_space<vmem>>, vector<1x1x4x4x1x128xf32>,
    %c4_205 = arith.constant 4 : index
    %c0_206 = arith.constant 0 : index
    %c0_207 = arith.constant 0 : index
    %c0_208 = arith.constant 0 : index
    %c0_209 = arith.constant 0 : index
    %110 = vector.load %arg5[%c4_205, %c0_206, %c0_207, %c0_208, %c0_209] : memref<10x4x4x1x128xf32, #tpu.memory_space<vmem>>, vector<1x4x4x1x128xf32>
    %111 = vector.shape_cast %110 : vector<1x4x4x1x128xf32> to vector<4x4x1x128xf32>
    %c5_210 = arith.constant 5 : index
    %c0_211 = arith.constant 0 : index
    %c0_212 = arith.constant 0 : index
    %c0_213 = arith.constant 0 : index
    %c0_214 = arith.constant 0 : index
    %112 = vector.load %arg5[%c5_210, %c0_211, %c0_212, %c0_213, %c0_214] : memref<10x4x4x1x128xf32, #tpu.memory_space<vmem>>, vector<1x4x4x1x128xf32>
    %113 = vector.shape_cast %112 : vector<1x4x4x1x128xf32> to vector<4x4x1x128xf32>
    %114 = arith.maximumf %111, %113 : vector<4x4x1x128xf32>
    %c6_215 = arith.constant 6 : index
    %c0_216 = arith.constant 0 : index
    %c0_217 = arith.constant 0 : index
    %c0_218 = arith.constant 0 : index
    %c0_219 = arith.constant 0 : index
    %115 = vector.load %arg5[%c6_215, %c0_216, %c0_217, %c0_218, %c0_219] : memref<10x4x4x1x128xf32, #tpu.memory_space<vmem>>, vector<1x4x4x1x128xf32>
    %116 = vector.shape_cast %115 : vector<1x4x4x1x128xf32> to vector<4x4x1x128xf32>
    %117 = arith.maximumf %114, %116 : vector<4x4x1x128xf32>
    %c0_220 = arith.constant 0 : index
    %c2_221 = arith.constant 2 : index
    %c0_222 = arith.constant 0 : index
    %c0_223 = arith.constant 0 : index
    %c0_224 = arith.constant 0 : index
    %c0_225 = arith.constant 0 : index
    %118 = vector.load %arg3[%c0_220, %c2_221, %c0_222, %c0_223, %c0_224, %c0_225] : memref<1x4x4x4x1x128xf32, #tpu.memory_space<vmem>>, vector<1x1x4x4x1x128xf32>
    %119 = vector.shape_cast %118 : vector<1x1x4x4x1x128xf32> to vector<4x4x1x128xf32>
    %120 = vector.shape_cast %117 : vector<4x4x1x128xf32> to vector<1x1x4x4x1x128xf32>
    tpu.vector_store %arg3[%c0_220, %c2_221, %c0_222, %c0_223, %c0_224, %c0_225], %120 {strides = array<i32>} : memref<1x4x4x4x1x128xf32, #tpu.memory_space<vmem>>, vector<1x1x4x4x1x128xf32>,
    %c6_226 = arith.constant 6 : index
    %c0_227 = arith.constant 0 : index
    %c0_228 = arith.constant 0 : index
    %c0_229 = arith.constant 0 : index
    %c0_230 = arith.constant 0 : index
    %121 = vector.load %arg5[%c6_226, %c0_227, %c0_228, %c0_229, %c0_230] : memref<10x4x4x1x128xf32, #tpu.memory_space<vmem>>, vector<1x4x4x1x128xf32>
    %122 = vector.shape_cast %121 : vector<1x4x4x1x128xf32> to vector<4x4x1x128xf32>
    %c7_231 = arith.constant 7 : index
    %c0_232 = arith.constant 0 : index
    %c0_233 = arith.constant 0 : index
    %c0_234 = arith.constant 0 : index
    %c0_235 = arith.constant 0 : index
    %123 = vector.load %arg5[%c7_231, %c0_232, %c0_233, %c0_234, %c0_235] : memref<10x4x4x1x128xf32, #tpu.memory_space<vmem>>, vector<1x4x4x1x128xf32>
    %124 = vector.shape_cast %123 : vector<1x4x4x1x128xf32> to vector<4x4x1x128xf32>
    %125 = arith.maximumf %122, %124 : vector<4x4x1x128xf32>
    %c8_236 = arith.constant 8 : index
    %c0_237 = arith.constant 0 : index
    %c0_238 = arith.constant 0 : index
    %c0_239 = arith.constant 0 : index
    %c0_240 = arith.constant 0 : index
    %126 = vector.load %arg5[%c8_236, %c0_237, %c0_238, %c0_239, %c0_240] : memref<10x4x4x1x128xf32, #tpu.memory_space<vmem>>, vector<1x4x4x1x128xf32>
    %127 = vector.shape_cast %126 : vector<1x4x4x1x128xf32> to vector<4x4x1x128xf32>
    %128 = arith.maximumf %125, %127 : vector<4x4x1x128xf32>
    %c0_241 = arith.constant 0 : index
    %c3_242 = arith.constant 3 : index
    %c0_243 = arith.constant 0 : index
    %c0_244 = arith.constant 0 : index
    %c0_245 = arith.constant 0 : index
    %c0_246 = arith.constant 0 : index
    %129 = vector.load %arg3[%c0_241, %c3_242, %c0_243, %c0_244, %c0_245, %c0_246] : memref<1x4x4x4x1x128xf32, #tpu.memory_space<vmem>>, vector<1x1x4x4x1x128xf32>
    %130 = vector.shape_cast %129 : vector<1x1x4x4x1x128xf32> to vector<4x4x1x128xf32>
    %131 = vector.shape_cast %128 : vector<4x4x1x128xf32> to vector<1x1x4x4x1x128xf32>
    tpu.vector_store %arg3[%c0_241, %c3_242, %c0_243, %c0_244, %c0_245, %c0_246], %131 {strides = array<i32>} : memref<1x4x4x4x1x128xf32, #tpu.memory_space<vmem>>, vector<1x1x4x4x1x128xf32>,
    return
  }
  func.func @transform_0(%arg0: i32, %arg1: i32) -> (i32, i32, i32, i32, i32, i32) {
    %c0_i32 = arith.constant 0 : i32
    %c0_i32_0 = arith.constant 0 : i32
    %c0_i32_1 = arith.constant 0 : i32
    %c0_i32_2 = arith.constant 0 : i32
    %c0_i32_3 = arith.constant 0 : i32
    return %arg0, %c0_i32, %c0_i32_0, %c0_i32_1, %arg1, %c0_i32_2 : i32, i32, i32, i32, i32, i32
  }
  func.func @transform_1(%arg0: i32, %arg1: i32) -> (i32, i32, i32, i32, i32, i32) {
    %c0_i32 = arith.constant 0 : i32
    %c0_i32_0 = arith.constant 0 : i32
    %c0_i32_1 = arith.constant 0 : i32
    %c0_i32_2 = arith.constant 0 : i32
    %c0_i32_3 = arith.constant 0 : i32
    return %arg0, %c0_i32, %c0_i32_0, %c0_i32_1, %arg1, %c0_i32_2 : i32, i32, i32, i32, i32, i32
  }
}

</mosaic_0001>

<llo_original>
// kernel: maxpool4d_pallas.1
$region0: #{maxpool4d_pallas.1}
  #allocation0 [shape = 'u32[]', space=smem, size = 0x4, offset = 0x4, fixed_abs, tag = 'smem constant byte address 0x4 - core index']
  #allocation1 [shape = 'u32[144,128]{1,0:T(1,128)}', space=vmem, size = 0x12000, scoped, tag = 'internal scratch']
  #allocation2 [shape = 'f32[10,10,4,1,128]{4,3,2,1,0:T(1,128)}', space=vmem, size = 0x32000, scoped, tag = 'scratch operand']
  #allocation3 [shape = 'f32[10,4,4,1,128]{4,3,2,1,0:T(1,128)}', space=vmem, size = 0x14000, scoped, tag = 'scratch operand']
  %s0 = inlined_call_operand.vmem [shape: f32[8,10,10,10,1,128], index: 0, kind: input, shape index: {}]
  %s1 = inlined_call_operand.vmem [shape: f32[8,4,4,4,1,128], index: 1, kind: output, shape index: {}]
  %s2 = sld [smem:[#allocation0]]
  $region37: #{maxpool4d_pallas.1} parent=0
    _
  %s4 = ssub.s32 1, %s2
  %s5 = scalar_select 0, %s4, %s2
  loop: start=0, step=1, limit=10
  $region2: #{maxpool4d_pallas.1} parent=0 // loop_pre_header
    _
  $region3: #{maxpool4d_pallas.1} parent=0 // loop_header
    %s7 = sphi 0, %s11
    %p8 = scmp.ge.s32.totalorder %s7, 10
    %s14 = sphi 0, %s26
    %s15 = sphi 0, %s22
    %s16 = sphi 0, %s14
    %s17 = sphi 0, %s15
    %s18 = sphi 0, %s16
    %s19 = sphi 0, %s17
    %s31 = sphi 0, %s33
    %s34 = sphi 0, %s31
    %s35 = sphi 0, %s34
    %s51 = sphi 0, %s35
    %s59 = sphi 0, %s61
    %s62 = sphi 0, %s59
    %s63 = sphi 0, %s62
    %s79 = sphi 0, %s63
  $region4: #{maxpool4d_pallas.1} parent=0 // loop_header_branch
    %10 = sbr.rel (%p8) target = $region8
  $region5: #{maxpool4d_pallas.1} parent=0 // loop_body
    %s12 = ssub.s32 %s7, 1
    %s13 = ssub.s32 %s7, 2
    %s20 = sadd.s32 1, %s15
    %p21 = scmp.ge.s32.totalorder %s20, 1
    %s22 = scalar_select %p21, 0, %s20
    %s23 = sadd.s32 1, %s14
    %s24 = scalar_select %p21, %s23, %s14
    %p25 = scmp.ge.s32.totalorder %s24, 8
    %s26 = scalar_select %p25, 0, %s24
    %s27 = ssub.s32 %s14, %s26
    %s28 = ssub.s32 %s15, %s22
    %s29 = sor.u32 %s27, %s28
    %p30 = scmp.eq.s32.totalorder %s29, 0
    %s32 = sadd.s32 %s31, 1
    %s33 = scalar_select %p30, %s31, %s32
    %p36 = pneg %p30
    %p37 = scmp.eq.s32.totalorder %s7, 7
    %p38 = por %p36, %p37
    %p39 = scmp.ne.s32.totalorder %s31, %s34
    %p40 = scmp.eq.s32.totalorder %s7, 0
    %p41 = por %p39, %p40
    %p42 = scmp.ne.s32.totalorder %s31, %s34
    %p43 = scmp.eq.s32.totalorder %s12, 7
    %p44 = por %p42, %p43
    %p45 = scmp.ne.s32.totalorder %s34, %s35
    %p46 = scmp.eq.s32.totalorder %s12, 0
    %p47 = por %p45, %p46
    %p48 = scmp.ne.s32.totalorder %s34, %s35
    %p49 = scmp.eq.s32.totalorder %s13, 7
    %p50 = por %p48, %p49
    %p52 = scmp.ne.s32.totalorder %s35, %s51
    %p53 = scmp.eq.s32.totalorder %s13, 0
    %p54 = por %p52, %p53
    %s55 = ssub.s32 %s14, %s26
    %s56 = ssub.s32 %s15, %s22
    %s57 = sor.u32 %s55, %s56
    %p58 = scmp.eq.s32.totalorder %s57, 0
    %s60 = sadd.s32 %s59, 1
    %s61 = scalar_select %p58, %s59, %s60
    %p64 = pneg %p58
    %p65 = scmp.eq.s32.totalorder %s7, 7
    %p66 = por %p64, %p65
    %p67 = scmp.ne.s32.totalorder %s59, %s62
    %p68 = scmp.eq.s32.totalorder %s7, 0
    %p69 = por %p67, %p68
    %p70 = scmp.ne.s32.totalorder %s59, %s62
    %p71 = scmp.eq.s32.totalorder %s12, 7
    %p72 = por %p70, %p71
    %p73 = scmp.ne.s32.totalorder %s62, %s63
    %p74 = scmp.eq.s32.totalorder %s12, 0
    %p75 = por %p73, %p74
    %p76 = scmp.ne.s32.totalorder %s62, %s63
    %p77 = scmp.eq.s32.totalorder %s13, 7
    %p78 = por %p76, %p77
    %p80 = scmp.ne.s32.totalorder %s63, %s79
    %p81 = scmp.eq.s32.totalorder %s13, 0
    %p82 = por %p80, %p81
    %p83 = scmp.le.s32.totalorder 1, %s7
    %p84 = scmp.lt.s32.totalorder %s7, 9
    %p85 = pnand %p83, %p84
    %p86 = pneg %p85
    // Predicated region
    $region9: #{maxpool4d_pallas.1} parent=5 // pred_check
      _
    $region10: #{maxpool4d_pallas.1} parent=5 // pred_check_branch
      %88 = sbr.rel (%p85) target = $region12
    $region11: #{maxpool4d_pallas.1} parent=5 // pred_region
      %s89 = ssub.s32 %s7, 1
    $region12: #{maxpool4d_pallas.1} parent=5 // pred_fallthru
      _
    %p90 = scmp.lt.s32.totalorder %s7, 8
    // Predicated region
    $region13: #{maxpool4d_pallas.1} parent=5 // pred_check
      %p91 = pneg %p90
    $region14: #{maxpool4d_pallas.1} parent=5 // pred_check_branch
      %93 = sbr.rel (%p91) target = $region16
    $region15: #{maxpool4d_pallas.1} parent=5 // pred_region
      // Predicated region
      $region17: #{maxpool4d_pallas.1} parent=15 // pred_check
        %p94 = pneg %p41
      $region18: #{maxpool4d_pallas.1} parent=15 // pred_check_branch
        %96 = sbr.rel (%p94) target = $region20
      $region19: #{maxpool4d_pallas.1} parent=15 // pred_region
        %p97 = scmp.lt.s32.totalorder %s14, 7
        %s98 = scalar_select %p97, %s14, 7
        %p99 = scmp.lt.s32.totalorder %s15, 0
        %s100 = scalar_select %p99, %s15, 0
        %s101 = smul.addr %s98, 1000
        %s102 = sadd.s32 %s100, %s101
        %s103 = scalar_lea.vmem %s0, %s102
      $region20: #{maxpool4d_pallas.1} parent=15 // pred_fallthru
        _
    $region16: #{maxpool4d_pallas.1} parent=5 // pred_fallthru
      _
    %p104 = scmp.le.s32.totalorder 1, %s7
    %p105 = scmp.lt.s32.totalorder %s7, 9
    %p106 = pnand %p104, %p105
    %p107 = pneg %p106
    // Predicated region
    $region21: #{maxpool4d_pallas.1} parent=5 // pred_check
      _
    $region22: #{maxpool4d_pallas.1} parent=5 // pred_check_branch
      %109 = sbr.rel (%p106) target = $region24
    $region23: #{maxpool4d_pallas.1} parent=5 // pred_region
      %s110 = ssub.s32 %s7, 1
      %p111 = scmp.lt.s32.totalorder %s16, 7
      %s112 = scalar_select %p111, %s16, 7
      %p113 = scmp.lt.s32.totalorder %s17, 0
      %s114 = scalar_select %p113, %s17, 0
      %s115 = smul.addr %s112, 1000
      %s116 = sadd.s32 %s114, %s115
      %s117 = scalar_lea.vmem %s0, %s116
      %p118 = pneg %p47
      %p119 = pneg %p44
      %p120 = pneg %p75
      %p121 = pneg %p72
      %p122 = scmp.lt.s32.totalorder %s16, 7
      %s123 = scalar_select %p122, %s16, 7
      %p124 = scmp.lt.s32.totalorder %s17, 0
      %s125 = scalar_select %p124, %s17, 0
      %s126 = smul.addr %s123, 64
      %s127 = sadd.s32 %s125, %s126
      %s128 = scalar_lea.vmem %s1, %s127
      %p129 = scmp.lt.s32.totalorder %s16, 7
      %s130 = scalar_select %p129, %s16, 7
      %p131 = scmp.lt.s32.totalorder %s17, 0
      %s132 = scalar_select %p131, %s17, 0
      %s133 = smul.addr %s130, 1000
      %s134 = sadd.s32 %s132, %s133
      %s135 = scalar_lea.vmem %s0, %s134
      %p136 = scmp.lt.s32.totalorder %s16, 7
      %s137 = scalar_select %p136, %s16, 7
      %p138 = scmp.lt.s32.totalorder %s17, 0
      %s139 = scalar_select %p138, %s17, 0
      %s140 = smul.addr %s137, 64
      %s141 = sadd.s32 %s139, %s140
      %s142 = scalar_lea.vmem %s1, %s141
      %v143 = vld [vmem:[%s135] sm:$0x1]
      %v144 = vld [vmem:[%s135 + $0xa] sm:$0x1]
      %v145 = vld [vmem:[%s135 + $0x14] sm:$0x1]
      %v146 = vld [vmem:[%s135 + $0x1e] sm:$0x1]
      %v147 = vld [vmem:[%s135 + $0x28] sm:$0x1]
      %v148 = vld [vmem:[%s135 + $0x32] sm:$0x1]
      %v149 = vld [vmem:[%s135 + $0x3c] sm:$0x1]
      %v150 = vld [vmem:[%s135 + $0x46] sm:$0x1]
      %v151 = vld [vmem:[%s135 + $0x50] sm:$0x1]
      %v152 = vld [vmem:[%s135 + $0x5a] sm:$0x1]
      %v153 = vld [vmem:[%s135 + $0x64] sm:$0x1]
      %v154 = vld [vmem:[%s135 + $0x6e] sm:$0x1]
      %v155 = vld [vmem:[%s135 + $0x78] sm:$0x1]
      %v156 = vld [vmem:[%s135 + $0x82] sm:$0x1]
      %v157 = vld [vmem:[%s135 + $0x8c] sm:$0x1]
      %v158 = vld [vmem:[%s135 + $0x96] sm:$0x1]
      %v159 = vld [vmem:[%s135 + $0xa0] sm:$0x1]
      %v160 = vld [vmem:[%s135 + $0xaa] sm:$0x1]
      %v161 = vld [vmem:[%s135 + $0xb4] sm:$0x1]
      %v162 = vld [vmem:[%s135 + $0xbe] sm:$0x1]
      %v163 = vld [vmem:[%s135 + $0xc8] sm:$0x1]
      %v164 = vld [vmem:[%s135 + $0xd2] sm:$0x1]
      %v165 = vld [vmem:[%s135 + $0xdc] sm:$0x1]
      %v166 = vld [vmem:[%s135 + $0xe6] sm:$0x1]
      %v167 = vld [vmem:[%s135 + $0xf0] sm:$0x1]
      %v168 = vld [vmem:[%s135 + $0xfa] sm:$0x1]
      %v169 = vld [vmem:[%s135 + $0x104] sm:$0x1]
      %v170 = vld [vmem:[%s135 + $0x10e] sm:$0x1]
      %v171 = vld [vmem:[%s135 + $0x118] sm:$0x1]
      %v172 = vld [vmem:[%s135 + $0x122] sm:$0x1]
      %v173 = vld [vmem:[%s135 + $0x12c] sm:$0x1]
      %v174 = vld [vmem:[%s135 + $0x136] sm:$0x1]
      %v175 = vld [vmem:[%s135 + $0x140] sm:$0x1]
      %v176 = vld [vmem:[%s135 + $0x14a] sm:$0x1]
      %v177 = vld [vmem:[%s135 + $0x154] sm:$0x1]
      %v178 = vld [vmem:[%s135 + $0x15e] sm:$0x1]
      %v179 = vld [vmem:[%s135 + $0x168] sm:$0x1]
      %v180 = vld [vmem:[%s135 + $0x172] sm:$0x1]
      %v181 = vld [vmem:[%s135 + $0x17c] sm:$0x1]
      %v182 = vld [vmem:[%s135 + $0x186] sm:$0x1]
      %v183 = vld [vmem:[%s135 + $0x190] sm:$0x1]
      %v184 = vld [vmem:[%s135 + $0x19a] sm:$0x1]
      %v185 = vld [vmem:[%s135 + $0x1a4] sm:$0x1]
      %v186 = vld [vmem:[%s135 + $0x1ae] sm:$0x1]
      %v187 = vld [vmem:[%s135 + $0x1b8] sm:$0x1]
      %v188 = vld [vmem:[%s135 + $0x1c2] sm:$0x1]
      %v189 = vld [vmem:[%s135 + $0x1cc] sm:$0x1]
      %v190 = vld [vmem:[%s135 + $0x1d6] sm:$0x1]
      %v191 = vld [vmem:[%s135 + $0x1e0] sm:$0x1]
      %v192 = vld [vmem:[%s135 + $0x1ea] sm:$0x1]
      %v193 = vld [vmem:[%s135 + $0x1f4] sm:$0x1]
      %v194 = vld [vmem:[%s135 + $0x1fe] sm:$0x1]
      %v195 = vld [vmem:[%s135 + $0x208] sm:$0x1]
      %v196 = vld [vmem:[%s135 + $0x212] sm:$0x1]
      %v197 = vld [vmem:[%s135 + $0x21c] sm:$0x1]
      %v198 = vld [vmem:[%s135 + $0x226] sm:$0x1]
      %v199 = vld [vmem:[%s135 + $0x230] sm:$0x1]
      %v200 = vld [vmem:[%s135 + $0x23a] sm:$0x1]
      %v201 = vld [vmem:[%s135 + $0x244] sm:$0x1]
      %v202 = vld [vmem:[%s135 + $0x24e] sm:$0x1]
      %v203 = vld [vmem:[%s135 + $0x258] sm:$0x1]
      %v204 = vld [vmem:[%s135 + $0x262] sm:$0x1]
      %v205 = vld [vmem:[%s135 + $0x26c] sm:$0x1]
      %v206 = vld [vmem:[%s135 + $0x276] sm:$0x1]
      %v207 = vld [vmem:[%s135 + $0x280] sm:$0x1]
      %v208 = vld [vmem:[%s135 + $0x28a] sm:$0x1]
      %v209 = vld [vmem:[%s135 + $0x294] sm:$0x1]
      %v210 = vld [vmem:[%s135 + $0x29e] sm:$0x1]
      %v211 = vld [vmem:[%s135 + $0x2a8] sm:$0x1]
      %v212 = vld [vmem:[%s135 + $0x2b2] sm:$0x1]
      %v213 = vld [vmem:[%s135 + $0x2bc] sm:$0x1]
      %v214 = vld [vmem:[%s135 + $0x2c6] sm:$0x1]
      %v215 = vld [vmem:[%s135 + $0x2d0] sm:$0x1]
      %v216 = vld [vmem:[%s135 + $0x2da] sm:$0x1]
      %v217 = vld [vmem:[%s135 + $0x2e4] sm:$0x1]
      %v218 = vld [vmem:[%s135 + $0x2ee] sm:$0x1]
      %v219 = vld [vmem:[%s135 + $0x2f8] sm:$0x1]
      %v220 = vld [vmem:[%s135 + $0x302] sm:$0x1]
      %v221 = vld [vmem:[%s135 + $0x30c] sm:$0x1]
      %v222 = vld [vmem:[%s135 + $0x316] sm:$0x1]
      %v223 = vld [vmem:[%s135 + $0x320] sm:$0x1]
      %v224 = vld [vmem:[%s135 + $0x32a] sm:$0x1]
      %v225 = vld [vmem:[%s135 + $0x334] sm:$0x1]
      %v226 = vld [vmem:[%s135 + $0x33e] sm:$0x1]
      %v227 = vld [vmem:[%s135 + $0x348] sm:$0x1]
      %v228 = vld [vmem:[%s135 + $0x352] sm:$0x1]
      %v229 = vld [vmem:[%s135 + $0x35c] sm:$0x1]
      %v230 = vld [vmem:[%s135 + $0x366] sm:$0x1]
      %v231 = vld [vmem:[%s135 + $0x370] sm:$0x1]
      %v232 = vld [vmem:[%s135 + $0x37a] sm:$0x1]
      %v233 = vld [vmem:[%s135 + $0x384] sm:$0x1]
      %v234 = vld [vmem:[%s135 + $0x38e] sm:$0x1]
      %v235 = vld [vmem:[%s135 + $0x398] sm:$0x1]
      %v236 = vld [vmem:[%s135 + $0x3a2] sm:$0x1]
      %v237 = vld [vmem:[%s135 + $0x3ac] sm:$0x1]
      %v238 = vld [vmem:[%s135 + $0x3b6] sm:$0x1]
      %v239 = vld [vmem:[%s135 + $0x3c0] sm:$0x1]
      %v240 = vld [vmem:[%s135 + $0x3ca] sm:$0x1]
      %v241 = vld [vmem:[%s135 + $0x3d4] sm:$0x1]
      %v242 = vld [vmem:[%s135 + $0x3de] sm:$0x1]
      %s243 = scalar_lea.vmem %s135, 1
      %v244 = vld [vmem:[%s243] sm:$0x1]
      %v245 = vld [vmem:[%s243 + $0xa] sm:$0x1]
      %v246 = vld [vmem:[%s243 + $0x14] sm:$0x1]
      %v247 = vld [vmem:[%s243 + $0x1e] sm:$0x1]
      %v248 = vld [vmem:[%s243 + $0x28] sm:$0x1]
      %v249 = vld [vmem:[%s243 + $0x32] sm:$0x1]
      %v250 = vld [vmem:[%s243 + $0x3c] sm:$0x1]
      %v251 = vld [vmem:[%s243 + $0x46] sm:$0x1]
      %v252 = vld [vmem:[%s243 + $0x50] sm:$0x1]
      %v253 = vld [vmem:[%s243 + $0x5a] sm:$0x1]
      %v254 = vld [vmem:[%s243 + $0x64] sm:$0x1]
      %v255 = vld [vmem:[%s243 + $0x6e] sm:$0x1]
      %v256 = vld [vmem:[%s243 + $0x78] sm:$0x1]
      %v257 = vld [vmem:[%s243 + $0x82] sm:$0x1]
      %v258 = vld [vmem:[%s243 + $0x8c] sm:$0x1]
      %v259 = vld [vmem:[%s243 + $0x96] sm:$0x1]
      %v260 = vld [vmem:[%s243 + $0xa0] sm:$0x1]
      %v261 = vld [vmem:[%s243 + $0xaa] sm:$0x1]
      %v262 = vld [vmem:[%s243 + $0xb4] sm:$0x1]
      %v263 = vld [vmem:[%s243 + $0xbe] sm:$0x1]
      %v264 = vld [vmem:[%s243 + $0xc8] sm:$0x1]
      %v265 = vld [vmem:[%s243 + $0xd2] sm:$0x1]
      %v266 = vld [vmem:[%s243 + $0xdc] sm:$0x1]
      %v267 = vld [vmem:[%s243 + $0xe6] sm:$0x1]
      %v268 = vld [vmem:[%s243 + $0xf0] sm:$0x1]
      %v269 = vld [vmem:[%s243 + $0xfa] sm:$0x1]
      %v270 = vld [vmem:[%s243 + $0x104] sm:$0x1]
      %v271 = vld [vmem:[%s243 + $0x10e] sm:$0x1]
      %v272 = vld [vmem:[%s243 + $0x118] sm:$0x1]
      %v273 = vld [vmem:[%s243 + $0x122] sm:$0x1]
      %v274 = vld [vmem:[%s243 + $0x12c] sm:$0x1]
      %v275 = vld [vmem:[%s243 + $0x136] sm:$0x1]
      %v276 = vld [vmem:[%s243 + $0x140] sm:$0x1]
      %v277 = vld [vmem:[%s243 + $0x14a] sm:$0x1]
      %v278 = vld [vmem:[%s243 + $0x154] sm:$0x1]
      %v279 = vld [vmem:[%s243 + $0x15e] sm:$0x1]
      %v280 = vld [vmem:[%s243 + $0x168] sm:$0x1]
      %v281 = vld [vmem:[%s243 + $0x172] sm:$0x1]
      %v282 = vld [vmem:[%s243 + $0x17c] sm:$0x1]
      %v283 = vld [vmem:[%s243 + $0x186] sm:$0x1]
      %v284 = vld [vmem:[%s243 + $0x190] sm:$0x1]
      %v285 = vld [vmem:[%s243 + $0x19a] sm:$0x1]
      %v286 = vld [vmem:[%s243 + $0x1a4] sm:$0x1]
      %v287 = vld [vmem:[%s243 + $0x1ae] sm:$0x1]
      %v288 = vld [vmem:[%s243 + $0x1b8] sm:$0x1]
      %v289 = vld [vmem:[%s243 + $0x1c2] sm:$0x1]
      %v290 = vld [vmem:[%s243 + $0x1cc] sm:$0x1]
      %v291 = vld [vmem:[%s243 + $0x1d6] sm:$0x1]
      %v292 = vld [vmem:[%s243 + $0x1e0] sm:$0x1]
      %v293 = vld [vmem:[%s243 + $0x1ea] sm:$0x1]
      %v294 = vld [vmem:[%s243 + $0x1f4] sm:$0x1]
      %v295 = vld [vmem:[%s243 + $0x1fe] sm:$0x1]
      %v296 = vld [vmem:[%s243 + $0x208] sm:$0x1]
      %v297 = vld [vmem:[%s243 + $0x212] sm:$0x1]
      %v298 = vld [vmem:[%s243 + $0x21c] sm:$0x1]
      %v299 = vld [vmem:[%s243 + $0x226] sm:$0x1]
      %v300 = vld [vmem:[%s243 + $0x230] sm:$0x1]
      %v301 = vld [vmem:[%s243 + $0x23a] sm:$0x1]
      %v302 = vld [vmem:[%s243 + $0x244] sm:$0x1]
      %v303 = vld [vmem:[%s243 + $0x24e] sm:$0x1]
      %v304 = vld [vmem:[%s243 + $0x258] sm:$0x1]
      %v305 = vld [vmem:[%s243 + $0x262] sm:$0x1]
      %v306 = vld [vmem:[%s243 + $0x26c] sm:$0x1]
      %v307 = vld [vmem:[%s243 + $0x276] sm:$0x1]
      %v308 = vld [vmem:[%s243 + $0x280] sm:$0x1]
      %v309 = vld [vmem:[%s243 + $0x28a] sm:$0x1]
      %v310 = vld [vmem:[%s243 + $0x294] sm:$0x1]
      %v311 = vld [vmem:[%s243 + $0x29e] sm:$0x1]
      %v312 = vld [vmem:[%s243 + $0x2a8] sm:$0x1]
      %v313 = vld [vmem:[%s243 + $0x2b2] sm:$0x1]
      %v314 = vld [vmem:[%s243 + $0x2bc] sm:$0x1]
      %v315 = vld [vmem:[%s243 + $0x2c6] sm:$0x1]
      %v316 = vld [vmem:[%s243 + $0x2d0] sm:$0x1]
      %v317 = vld [vmem:[%s243 + $0x2da] sm:$0x1]
      %v318 = vld [vmem:[%s243 + $0x2e4] sm:$0x1]
      %v319 = vld [vmem:[%s243 + $0x2ee] sm:$0x1]
      %v320 = vld [vmem:[%s243 + $0x2f8] sm:$0x1]
      %v321 = vld [vmem:[%s243 + $0x302] sm:$0x1]
      %v322 = vld [vmem:[%s243 + $0x30c] sm:$0x1]
      %v323 = vld [vmem:[%s243 + $0x316] sm:$0x1]
      %v324 = vld [vmem:[%s243 + $0x320] sm:$0x1]
      %v325 = vld [vmem:[%s243 + $0x32a] sm:$0x1]
      %v326 = vld [vmem:[%s243 + $0x334] sm:$0x1]
      %v327 = vld [vmem:[%s243 + $0x33e] sm:$0x1]
      %v328 = vld [vmem:[%s243 + $0x348] sm:$0x1]
      %v329 = vld [vmem:[%s243 + $0x352] sm:$0x1]
      %v330 = vld [vmem:[%s243 + $0x35c] sm:$0x1]
      %v331 = vld [vmem:[%s243 + $0x366] sm:$0x1]
      %v332 = vld [vmem:[%s243 + $0x370] sm:$0x1]
      %v333 = vld [vmem:[%s243 + $0x37a] sm:$0x1]
      %v334 = vld [vmem:[%s243 + $0x384] sm:$0x1]
      %v335 = vld [vmem:[%s243 + $0x38e] sm:$0x1]
      %v336 = vld [vmem:[%s243 + $0x398] sm:$0x1]
      %v337 = vld [vmem:[%s243 + $0x3a2] sm:$0x1]
      %v338 = vld [vmem:[%s243 + $0x3ac] sm:$0x1]
      %v339 = vld [vmem:[%s243 + $0x3b6] sm:$0x1]
      %v340 = vld [vmem:[%s243 + $0x3c0] sm:$0x1]
      %v341 = vld [vmem:[%s243 + $0x3ca] sm:$0x1]
      %v342 = vld [vmem:[%s243 + $0x3d4] sm:$0x1]
      %v343 = vld [vmem:[%s243 + $0x3de] sm:$0x1]
      %v344 = vmax.f32 %v143, %v244
      %v345 = vmax.f32 %v144, %v245
      %v346 = vmax.f32 %v145, %v246
      %v347 = vmax.f32 %v146, %v247
      %v348 = vmax.f32 %v147, %v248
      %v349 = vmax.f32 %v148, %v249
      %v350 = vmax.f32 %v149, %v250
      %v351 = vmax.f32 %v150, %v251
      %v352 = vmax.f32 %v151, %v252
      %v353 = vmax.f32 %v152, %v253
      %v354 = vmax.f32 %v153, %v254
      %v355 = vmax.f32 %v154, %v255
      %v356 = vmax.f32 %v155, %v256
      %v357 = vmax.f32 %v156, %v257
      %v358 = vmax.f32 %v157, %v258
      %v359 = vmax.f32 %v158, %v259
      %v360 = vmax.f32 %v159, %v260
      %v361 = vmax.f32 %v160, %v261
      %v362 = vmax.f32 %v161, %v262
      %v363 = vmax.f32 %v162, %v263
      %v364 = vmax.f32 %v163, %v264
      %v365 = vmax.f32 %v164, %v265
      %v366 = vmax.f32 %v165, %v266
      %v367 = vmax.f32 %v166, %v267
      %v368 = vmax.f32 %v167, %v268
      %v369 = vmax.f32 %v168, %v269
      %v370 = vmax.f32 %v169, %v270
      %v371 = vmax.f32 %v170, %v271
      %v372 = vmax.f32 %v171, %v272
      %v373 = vmax.f32 %v172, %v273
      %v374 = vmax.f32 %v173, %v274
      %v375 = vmax.f32 %v174, %v275
      %v376 = vmax.f32 %v175, %v276
      %v377 = vmax.f32 %v176, %v277
      %v378 = vmax.f32 %v177, %v278
      %v379 = vmax.f32 %v178, %v279
      %v380 = vmax.f32 %v179, %v280
      %v381 = vmax.f32 %v180, %v281
      %v382 = vmax.f32 %v181, %v282
      %v383 = vmax.f32 %v182, %v283
      %v384 = vmax.f32 %v183, %v284
      %v385 = vmax.f32 %v184, %v285
      %v386 = vmax.f32 %v185, %v286
      %v387 = vmax.f32 %v186, %v287
      %v388 = vmax.f32 %v187, %v288
      %v389 = vmax.f32 %v188, %v289
      %v390 = vmax.f32 %v189, %v290
      %v391 = vmax.f32 %v190, %v291
      %v392 = vmax.f32 %v191, %v292
      %v393 = vmax.f32 %v192, %v293
      %v394 = vmax.f32 %v193, %v294
      %v395 = vmax.f32 %v194, %v295
      %v396 = vmax.f32 %v195, %v296
      %v397 = vmax.f32 %v196, %v297
      %v398 = vmax.f32 %v197, %v298
      %v399 = vmax.f32 %v198, %v299
      %v400 = vmax.f32 %v199, %v300
      %v401 = vmax.f32 %v200, %v301
      %v402 = vmax.f32 %v201, %v302
      %v403 = vmax.f32 %v202, %v303
      %v404 = vmax.f32 %v203, %v304
      %v405 = vmax.f32 %v204, %v305
      %v406 = vmax.f32 %v205, %v306
      %v407 = vmax.f32 %v206, %v307
      %v408 = vmax.f32 %v207, %v308
      %v409 = vmax.f32 %v208, %v309
      %v410 = vmax.f32 %v209, %v310
      %v411 = vmax.f32 %v210, %v311
      %v412 = vmax.f32 %v211, %v312
      %v413 = vmax.f32 %v212, %v313
      %v414 = vmax.f32 %v213, %v314
      %v415 = vmax.f32 %v214, %v315
      %v416 = vmax.f32 %v215, %v316
      %v417 = vmax.f32 %v216, %v317
      %v418 = vmax.f32 %v217, %v318
      %v419 = vmax.f32 %v218, %v319
      %v420 = vmax.f32 %v219, %v320
      %v421 = vmax.f32 %v220, %v321
      %v422 = vmax.f32 %v221, %v322
      %v423 = vmax.f32 %v222, %v323
      %v424 = vmax.f32 %v223, %v324
      %v425 = vmax.f32 %v224, %v325
      %v426 = vmax.f32 %v225, %v326
      %v427 = vmax.f32 %v226, %v327
      %v428 = vmax.f32 %v227, %v328
      %v429 = vmax.f32 %v228, %v329
      %v430 = vmax.f32 %v229, %v330
      %v431 = vmax.f32 %v230, %v331
      %v432 = vmax.f32 %v231, %v332
      %v433 = vmax.f32 %v232, %v333
      %v434 = vmax.f32 %v233, %v334
      %v435 = vmax.f32 %v234, %v335
      %v436 = vmax.f32 %v235, %v336
      %v437 = vmax.f32 %v236, %v337
      %v438 = vmax.f32 %v237, %v338
      %v439 = vmax.f32 %v238, %v339
      %v440 = vmax.f32 %v239, %v340
      %v441 = vmax.f32 %v240, %v341
      %v442 = vmax.f32 %v241, %v342
      %v443 = vmax.f32 %v242, %v343
      %s444 = scalar_lea.vmem %s135, 2
      %v445 = vld [vmem:[%s444] sm:$0x1]
      %v446 = vld [vmem:[%s444 + $0xa] sm:$0x1]
      %v447 = vld [vmem:[%s444 + $0x14] sm:$0x1]
      %v448 = vld [vmem:[%s444 + $0x1e] sm:$0x1]
      %v449 = vld [vmem:[%s444 + $0x28] sm:$0x1]
      %v450 = vld [vmem:[%s444 + $0x32] sm:$0x1]
      %v451 = vld [vmem:[%s444 + $0x3c] sm:$0x1]
      %v452 = vld [vmem:[%s444 + $0x46] sm:$0x1]
      %v453 = vld [vmem:[%s444 + $0x50] sm:$0x1]
      %v454 = vld [vmem:[%s444 + $0x5a] sm:$0x1]
      %v455 = vld [vmem:[%s444 + $0x64] sm:$0x1]
      %v456 = vld [vmem:[%s444 + $0x6e] sm:$0x1]
      %v457 = vld [vmem:[%s444 + $0x78] sm:$0x1]
      %v458 = vld [vmem:[%s444 + $0x82] sm:$0x1]
      %v459 = vld [vmem:[%s444 + $0x8c] sm:$0x1]
      %v460 = vld [vmem:[%s444 + $0x96] sm:$0x1]
      %v461 = vld [vmem:[%s444 + $0xa0] sm:$0x1]
      %v462 = vld [vmem:[%s444 + $0xaa] sm:$0x1]
      %v463 = vld [vmem:[%s444 + $0xb4] sm:$0x1]
      %v464 = vld [vmem:[%s444 + $0xbe] sm:$0x1]
      %v465 = vld [vmem:[%s444 + $0xc8] sm:$0x1]
      %v466 = vld [vmem:[%s444 + $0xd2] sm:$0x1]
      %v467 = vld [vmem:[%s444 + $0xdc] sm:$0x1]
      %v468 = vld [vmem:[%s444 + $0xe6] sm:$0x1]
      %v469 = vld [vmem:[%s444 + $0xf0] sm:$0x1]
      %v470 = vld [vmem:[%s444 + $0xfa] sm:$0x1]
      %v471 = vld [vmem:[%s444 + $0x104] sm:$0x1]
      %v472 = vld [vmem:[%s444 + $0x10e] sm:$0x1]
      %v473 = vld [vmem:[%s444 + $0x118] sm:$0x1]
      %v474 = vld [vmem:[%s444 + $0x122] sm:$0x1]
      %v475 = vld [vmem:[%s444 + $0x12c] sm:$0x1]
      %v476 = vld [vmem:[%s444 + $0x136] sm:$0x1]
      %v477 = vld [vmem:[%s444 + $0x140] sm:$0x1]
      %v478 = vld [vmem:[%s444 + $0x14a] sm:$0x1]
      %v479 = vld [vmem:[%s444 + $0x154] sm:$0x1]
      %v480 = vld [vmem:[%s444 + $0x15e] sm:$0x1]
      %v481 = vld [vmem:[%s444 + $0x168] sm:$0x1]
      %v482 = vld [vmem:[%s444 + $0x172] sm:$0x1]
      %v483 = vld [vmem:[%s444 + $0x17c] sm:$0x1]
      %v484 = vld [vmem:[%s444 + $0x186] sm:$0x1]
      %v485 = vld [vmem:[%s444 + $0x190] sm:$0x1]
      %v486 = vld [vmem:[%s444 + $0x19a] sm:$0x1]
      %v487 = vld [vmem:[%s444 + $0x1a4] sm:$0x1]
      %v488 = vld [vmem:[%s444 + $0x1ae] sm:$0x1]
      %v489 = vld [vmem:[%s444 + $0x1b8] sm:$0x1]
      %v490 = vld [vmem:[%s444 + $0x1c2] sm:$0x1]
      %v491 = vld [vmem:[%s444 + $0x1cc] sm:$0x1]
      %v492 = vld [vmem:[%s444 + $0x1d6] sm:$0x1]
      %v493 = vld [vmem:[%s444 + $0x1e0] sm:$0x1]
      %v494 = vld [vmem:[%s444 + $0x1ea] sm:$0x1]
      %v495 = vld [vmem:[%s444 + $0x1f4] sm:$0x1]
      %v496 = vld [vmem:[%s444 + $0x1fe] sm:$0x1]
      %v497 = vld [vmem:[%s444 + $0x208] sm:$0x1]
      %v498 = vld [vmem:[%s444 + $0x212] sm:$0x1]
      %v499 = vld [vmem:[%s444 + $0x21c] sm:$0x1]
      %v500 = vld [vmem:[%s444 + $0x226] sm:$0x1]
      %v501 = vld [vmem:[%s444 + $0x230] sm:$0x1]
      %v502 = vld [vmem:[%s444 + $0x23a] sm:$0x1]
      %v503 = vld [vmem:[%s444 + $0x244] sm:$0x1]
      %v504 = vld [vmem:[%s444 + $0x24e] sm:$0x1]
      %v505 = vld [vmem:[%s444 + $0x258] sm:$0x1]
      %v506 = vld [vmem:[%s444 + $0x262] sm:$0x1]
      %v507 = vld [vmem:[%s444 + $0x26c] sm:$0x1]
      %v508 = vld [vmem:[%s444 + $0x276] sm:$0x1]
      %v509 = vld [vmem:[%s444 + $0x280] sm:$0x1]
      %v510 = vld [vmem:[%s444 + $0x28a] sm:$0x1]
      %v511 = vld [vmem:[%s444 + $0x294] sm:$0x1]
      %v512 = vld [vmem:[%s444 + $0x29e] sm:$0x1]
      %v513 = vld [vmem:[%s444 + $0x2a8] sm:$0x1]
      %v514 = vld [vmem:[%s444 + $0x2b2] sm:$0x1]
      %v515 = vld [vmem:[%s444 + $0x2bc] sm:$0x1]
      %v516 = vld [vmem:[%s444 + $0x2c6] sm:$0x1]
      %v517 = vld [vmem:[%s444 + $0x2d0] sm:$0x1]
      %v518 = vld [vmem:[%s444 + $0x2da] sm:$0x1]
      %v519 = vld [vmem:[%s444 + $0x2e4] sm:$0x1]
      %v520 = vld [vmem:[%s444 + $0x2ee] sm:$0x1]
      %v521 = vld [vmem:[%s444 + $0x2f8] sm:$0x1]
      %v522 = vld [vmem:[%s444 + $0x302] sm:$0x1]
      %v523 = vld [vmem:[%s444 + $0x30c] sm:$0x1]
      %v524 = vld [vmem:[%s444 + $0x316] sm:$0x1]
      %v525 = vld [vmem:[%s444 + $0x320] sm:$0x1]
      %v526 = vld [vmem:[%s444 + $0x32a] sm:$0x1]
      %v527 = vld [vmem:[%s444 + $0x334] sm:$0x1]
      %v528 = vld [vmem:[%s444 + $0x33e] sm:$0x1]
      %v529 = vld [vmem:[%s444 + $0x348] sm:$0x1]
      %v530 = vld [vmem:[%s444 + $0x352] sm:$0x1]
      %v531 = vld [vmem:[%s444 + $0x35c] sm:$0x1]
      %v532 = vld [vmem:[%s444 + $0x366] sm:$0x1]
      %v533 = vld [vmem:[%s444 + $0x370] sm:$0x1]
      %v534 = vld [vmem:[%s444 + $0x37a] sm:$0x1]
      %v535 = vld [vmem:[%s444 + $0x384] sm:$0x1]
      %v536 = vld [vmem:[%s444 + $0x38e] sm:$0x1]
      %v537 = vld [vmem:[%s444 + $0x398] sm:$0x1]
      %v538 = vld [vmem:[%s444 + $0x3a2] sm:$0x1]
      %v539 = vld [vmem:[%s444 + $0x3ac] sm:$0x1]
      %v540 = vld [vmem:[%s444 + $0x3b6] sm:$0x1]
      %v541 = vld [vmem:[%s444 + $0x3c0] sm:$0x1]
      %v542 = vld [vmem:[%s444 + $0x3ca] sm:$0x1]
      %v543 = vld [vmem:[%s444 + $0x3d4] sm:$0x1]
      %v544 = vld [vmem:[%s444 + $0x3de] sm:$0x1]
      %v545 = vmax.f32 %v344, %v445
      %v546 = vmax.f32 %v345, %v446
      %v547 = vmax.f32 %v346, %v447
      %v548 = vmax.f32 %v347, %v448
      %v549 = vmax.f32 %v348, %v449
      %v550 = vmax.f32 %v349, %v450
      %v551 = vmax.f32 %v350, %v451
      %v552 = vmax.f32 %v351, %v452
      %v553 = vmax.f32 %v352, %v453
      %v554 = vmax.f32 %v353, %v454
      %v555 = vmax.f32 %v354, %v455
      %v556 = vmax.f32 %v355, %v456
      %v557 = vmax.f32 %v356, %v457
      %v558 = vmax.f32 %v357, %v458
      %v559 = vmax.f32 %v358, %v459
      %v560 = vmax.f32 %v359, %v460
      %v561 = vmax.f32 %v360, %v461
      %v562 = vmax.f32 %v361, %v462
      %v563 = vmax.f32 %v362, %v463
      %v564 = vmax.f32 %v363, %v464
      %v565 = vmax.f32 %v364, %v465
      %v566 = vmax.f32 %v365, %v466
      %v567 = vmax.f32 %v366, %v467
      %v568 = vmax.f32 %v367, %v468
      %v569 = vmax.f32 %v368, %v469
      %v570 = vmax.f32 %v369, %v470
      %v571 = vmax.f32 %v370, %v471
      %v572 = vmax.f32 %v371, %v472
      %v573 = vmax.f32 %v372, %v473
      %v574 = vmax.f32 %v373, %v474
      %v575 = vmax.f32 %v374, %v475
      %v576 = vmax.f32 %v375, %v476
      %v577 = vmax.f32 %v376, %v477
      %v578 = vmax.f32 %v377, %v478
      %v579 = vmax.f32 %v378, %v479
      %v580 = vmax.f32 %v379, %v480
      %v581 = vmax.f32 %v380, %v481
      %v582 = vmax.f32 %v381, %v482
      %v583 = vmax.f32 %v382, %v483
      %v584 = vmax.f32 %v383, %v484
      %v585 = vmax.f32 %v384, %v485
      %v586 = vmax.f32 %v385, %v486
      %v587 = vmax.f32 %v386, %v487
      %v588 = vmax.f32 %v387, %v488
      %v589 = vmax.f32 %v388, %v489
      %v590 = vmax.f32 %v389, %v490
      %v591 = vmax.f32 %v390, %v491
      %v592 = vmax.f32 %v391, %v492
      %v593 = vmax.f32 %v392, %v493
      %v594 = vmax.f32 %v393, %v494
      %v595 = vmax.f32 %v394, %v495
      %v596 = vmax.f32 %v395, %v496
      %v597 = vmax.f32 %v396, %v497
      %v598 = vmax.f32 %v397, %v498
      %v599 = vmax.f32 %v398, %v499
      %v600 = vmax.f32 %v399, %v500
      %v601 = vmax.f32 %v400, %v501
      %v602 = vmax.f32 %v401, %v502
      %v603 = vmax.f32 %v402, %v503
      %v604 = vmax.f32 %v403, %v504
      %v605 = vmax.f32 %v404, %v505
      %v606 = vmax.f32 %v405, %v506
      %v607 = vmax.f32 %v406, %v507
      %v608 = vmax.f32 %v407, %v508
      %v609 = vmax.f32 %v408, %v509
      %v610 = vmax.f32 %v409, %v510
      %v611 = vmax.f32 %v410, %v511
      %v612 = vmax.f32 %v411, %v512
      %v613 = vmax.f32 %v412, %v513
      %v614 = vmax.f32 %v413, %v514
      %v615 = vmax.f32 %v414, %v515
      %v616 = vmax.f32 %v415, %v516
      %v617 = vmax.f32 %v416, %v517
      %v618 = vmax.f32 %v417, %v518
      %v619 = vmax.f32 %v418, %v519
      %v620 = vmax.f32 %v419, %v520
      %v621 = vmax.f32 %v420, %v521
      %v622 = vmax.f32 %v421, %v522
      %v623 = vmax.f32 %v422, %v523
      %v624 = vmax.f32 %v423, %v524
      %v625 = vmax.f32 %v424, %v525
      %v626 = vmax.f32 %v425, %v526
      %v627 = vmax.f32 %v426, %v527
      %v628 = vmax.f32 %v427, %v528
      %v629 = vmax.f32 %v428, %v529
      %v630 = vmax.f32 %v429, %v530
      %v631 = vmax.f32 %v430, %v531
      %v632 = vmax.f32 %v431, %v532
      %v633 = vmax.f32 %v432, %v533
      %v634 = vmax.f32 %v433, %v534
      %v635 = vmax.f32 %v434, %v535
      %v636 = vmax.f32 %v435, %v536
      %v637 = vmax.f32 %v436, %v537
      %v638 = vmax.f32 %v437, %v538
      %v639 = vmax.f32 %v438, %v539
      %v640 = vmax.f32 %v439, %v540
      %v641 = vmax.f32 %v440, %v541
      %v642 = vmax.f32 %v441, %v542
      %v643 = vmax.f32 %v442, %v543
      %v644 = vmax.f32 %v443, %v544
      %645 = vst [vmem:[#allocation2] sm:$0x1] %v545
      %646 = vst [vmem:[#allocation2 + $0x4] sm:$0x1] %v546
      %647 = vst [vmem:[#allocation2 + $0x8] sm:$0x1] %v547
      %648 = vst [vmem:[#allocation2 + $0xc] sm:$0x1] %v548
      %649 = vst [vmem:[#allocation2 + $0x10] sm:$0x1] %v549
      %650 = vst [vmem:[#allocation2 + $0x14] sm:$0x1] %v550
      %651 = vst [vmem:[#allocation2 + $0x18] sm:$0x1] %v551
      %652 = vst [vmem:[#allocation2 + $0x1c] sm:$0x1] %v552
      %653 = vst [vmem:[#allocation2 + $0x20] sm:$0x1] %v553
      %654 = vst [vmem:[#allocation2 + $0x24] sm:$0x1] %v554
      %655 = vst [vmem:[#allocation2 + $0x28] sm:$0x1] %v555
      %656 = vst [vmem:[#allocation2 + $0x2c] sm:$0x1] %v556
      %657 = vst [vmem:[#allocation2 + $0x30] sm:$0x1] %v557
      %658 = vst [vmem:[#allocation2 + $0x34] sm:$0x1] %v558
      %659 = vst [vmem:[#allocation2 + $0x38] sm:$0x1] %v559
      %660 = vst [vmem:[#allocation2 + $0x3c] sm:$0x1] %v560
      %661 = vst [vmem:[#allocation2 + $0x40] sm:$0x1] %v561
      %662 = vst [vmem:[#allocation2 + $0x44] sm:$0x1] %v562
      %663 = vst [vmem:[#allocation2 + $0x48] sm:$0x1] %v563
      %664 = vst [vmem:[#allocation2 + $0x4c] sm:$0x1] %v564
      %665 = vst [vmem:[#allocation2 + $0x50] sm:$0x1] %v565
      %666 = vst [vmem:[#allocation2 + $0x54] sm:$0x1] %v566
      %667 = vst [vmem:[#allocation2 + $0x58] sm:$0x1] %v567
      %668 = vst [vmem:[#allocation2 + $0x5c] sm:$0x1] %v568
      %669 = vst [vmem:[#allocation2 + $0x60] sm:$0x1] %v569
      %670 = vst [vmem:[#allocation2 + $0x64] sm:$0x1] %v570
      %671 = vst [vmem:[#allocation2 + $0x68] sm:$0x1] %v571
      %672 = vst [vmem:[#allocation2 + $0x6c] sm:$0x1] %v572
      %673 = vst [vmem:[#allocation2 + $0x70] sm:$0x1] %v573
      %674 = vst [vmem:[#allocation2 + $0x74] sm:$0x1] %v574
      %675 = vst [vmem:[#allocation2 + $0x78] sm:$0x1] %v575
      %676 = vst [vmem:[#allocation2 + $0x7c] sm:$0x1] %v576
      %677 = vst [vmem:[#allocation2 + $0x80] sm:$0x1] %v577
      %678 = vst [vmem:[#allocation2 + $0x84] sm:$0x1] %v578
      %679 = vst [vmem:[#allocation2 + $0x88] sm:$0x1] %v579
      %680 = vst [vmem:[#allocation2 + $0x8c] sm:$0x1] %v580
      %681 = vst [vmem:[#allocation2 + $0x90] sm:$0x1] %v581
      %682 = vst [vmem:[#allocation2 + $0x94] sm:$0x1] %v582
      %683 = vst [vmem:[#allocation2 + $0x98] sm:$0x1] %v583
      %684 = vst [vmem:[#allocation2 + $0x9c] sm:$0x1] %v584
      %685 = vst [vmem:[#allocation2 + $0xa0] sm:$0x1] %v585
      %686 = vst [vmem:[#allocation2 + $0xa4] sm:$0x1] %v586
      %687 = vst [vmem:[#allocation2 + $0xa8] sm:$0x1] %v587
      %688 = vst [vmem:[#allocation2 + $0xac] sm:$0x1] %v588
      %689 = vst [vmem:[#allocation2 + $0xb0] sm:$0x1] %v589
      %690 = vst [vmem:[#allocation2 + $0xb4] sm:$0x1] %v590
      %691 = vst [vmem:[#allocation2 + $0xb8] sm:$0x1] %v591
      %692 = vst [vmem:[#allocation2 + $0xbc] sm:$0x1] %v592
      %693 = vst [vmem:[#allocation2 + $0xc0] sm:$0x1] %v593
      %694 = vst [vmem:[#allocation2 + $0xc4] sm:$0x1] %v594
      %695 = vst [vmem:[#allocation2 + $0xc8] sm:$0x1] %v595
      %696 = vst [vmem:[#allocation2 + $0xcc] sm:$0x1] %v596
      %697 = vst [vmem:[#allocation2 + $0xd0] sm:$0x1] %v597
      %698 = vst [vmem:[#allocation2 + $0xd4] sm:$0x1] %v598
      %699 = vst [vmem:[#allocation2 + $0xd8] sm:$0x1] %v599
      %700 = vst [vmem:[#allocation2 + $0xdc] sm:$0x1] %v600
      %701 = vst [vmem:[#allocation2 + $0xe0] sm:$0x1] %v601
      %702 = vst [vmem:[#allocation2 + $0xe4] sm:$0x1] %v602
      %703 = vst [vmem:[#allocation2 + $0xe8] sm:$0x1] %v603
      %704 = vst [vmem:[#allocation2 + $0xec] sm:$0x1] %v604
      %705 = vst [vmem:[#allocation2 + $0xf0] sm:$0x1] %v605
      %706 = vst [vmem:[#allocation2 + $0xf4] sm:$0x1] %v606
      %707 = vst [vmem:[#allocation2 + $0xf8] sm:$0x1] %v607
      %708 = vst [vmem:[#allocation2 + $0xfc] sm:$0x1] %v608
      %709 = vst [vmem:[#allocation2 + $0x100] sm:$0x1] %v609
      %710 = vst [vmem:[#allocation2 + $0x104] sm:$0x1] %v610
      %711 = vst [vmem:[#allocation2 + $0x108] sm:$0x1] %v611
      %712 = vst [vmem:[#allocation2 + $0x10c] sm:$0x1] %v612
      %713 = vst [vmem:[#allocation2 + $0x110] sm:$0x1] %v613
      %714 = vst [vmem:[#allocation2 + $0x114] sm:$0x1] %v614
      %715 = vst [vmem:[#allocation2 + $0x118] sm:$0x1] %v615
      %716 = vst [vmem:[#allocation2 + $0x11c] sm:$0x1] %v616
      %717 = vst [vmem:[#allocation2 + $0x120] sm:$0x1] %v617
      %718 = vst [vmem:[#allocation2 + $0x124] sm:$0x1] %v618
      %719 = vst [vmem:[#allocation2 + $0x128] sm:$0x1] %v619
      %720 = vst [vmem:[#allocation2 + $0x12c] sm:$0x1] %v620
      %721 = vst [vmem:[#allocation2 + $0x130] sm:$0x1] %v621
      %722 = vst [vmem:[#allocation2 + $0x134] sm:$0x1] %v622
      %723 = vst [vmem:[#allocation2 + $0x138] sm:$0x1] %v623
      %724 = vst [vmem:[#allocation2 + $0x13c] sm:$0x1] %v624
      %725 = vst [vmem:[#allocation2 + $0x140] sm:$0x1] %v625
      %726 = vst [vmem:[#allocation2 + $0x144] sm:$0x1] %v626
      %727 = vst [vmem:[#allocation2 + $0x148] sm:$0x1] %v627
      %728 = vst [vmem:[#allocation2 + $0x14c] sm:$0x1] %v628
      %729 = vst [vmem:[#allocation2 + $0x150] sm:$0x1] %v629
      %730 = vst [vmem:[#allocation2 + $0x154] sm:$0x1] %v630
      %731 = vst [vmem:[#allocation2 + $0x158] sm:$0x1] %v631
      %732 = vst [vmem:[#allocation2 + $0x15c] sm:$0x1] %v632
      %733 = vst [vmem:[#allocation2 + $0x160] sm:$0x1] %v633
      %734 = vst [vmem:[#allocation2 + $0x164] sm:$0x1] %v634
      %735 = vst [vmem:[#allocation2 + $0x168] sm:$0x1] %v635
      %736 = vst [vmem:[#allocation2 + $0x16c] sm:$0x1] %v636
      %737 = vst [vmem:[#allocation2 + $0x170] sm:$0x1] %v637
      %738 = vst [vmem:[#allocation2 + $0x174] sm:$0x1] %v638
      %739 = vst [vmem:[#allocation2 + $0x178] sm:$0x1] %v639
      %740 = vst [vmem:[#allocation2 + $0x17c] sm:$0x1] %v640
      %741 = vst [vmem:[#allocation2 + $0x180] sm:$0x1] %v641
      %742 = vst [vmem:[#allocation2 + $0x184] sm:$0x1] %v642
      %743 = vst [vmem:[#allocation2 + $0x188] sm:$0x1] %v643
      %744 = vst [vmem:[#allocation2 + $0x18c] sm:$0x1] %v644
      %v745 = vld [vmem:[%s444] sm:$0x1]
      %v746 = vld [vmem:[%s444 + $0xa] sm:$0x1]
      %v747 = vld [vmem:[%s444 + $0x14] sm:$0x1]
      %v748 = vld [vmem:[%s444 + $0x1e] sm:$0x1]
      %v749 = vld [vmem:[%s444 + $0x28] sm:$0x1]
      %v750 = vld [vmem:[%s444 + $0x32] sm:$0x1]
      %v751 = vld [vmem:[%s444 + $0x3c] sm:$0x1]
      %v752 = vld [vmem:[%s444 + $0x46] sm:$0x1]
      %v753 = vld [vmem:[%s444 + $0x50] sm:$0x1]
      %v754 = vld [vmem:[%s444 + $0x5a] sm:$0x1]
      %v755 = vld [vmem:[%s444 + $0x64] sm:$0x1]
      %v756 = vld [vmem:[%s444 + $0x6e] sm:$0x1]
      %v757 = vld [vmem:[%s444 + $0x78] sm:$0x1]
      %v758 = vld [vmem:[%s444 + $0x82] sm:$0x1]
      %v759 = vld [vmem:[%s444 + $0x8c] sm:$0x1]
      %v760 = vld [vmem:[%s444 + $0x96] sm:$0x1]
      %v761 = vld [vmem:[%s444 + $0xa0] sm:$0x1]
      %v762 = vld [vmem:[%s444 + $0xaa] sm:$0x1]
      %v763 = vld [vmem:[%s444 + $0xb4] sm:$0x1]
      %v764 = vld [vmem:[%s444 + $0xbe] sm:$0x1]
      %v765 = vld [vmem:[%s444 + $0xc8] sm:$0x1]
      %v766 = vld [vmem:[%s444 + $0xd2] sm:$0x1]
      %v767 = vld [vmem:[%s444 + $0xdc] sm:$0x1]
      %v768 = vld [vmem:[%s444 + $0xe6] sm:$0x1]
      %v769 = vld [vmem:[%s444 + $0xf0] sm:$0x1]
      %v770 = vld [vmem:[%s444 + $0xfa] sm:$0x1]
      %v771 = vld [vmem:[%s444 + $0x104] sm:$0x1]
      %v772 = vld [vmem:[%s444 + $0x10e] sm:$0x1]
      %v773 = vld [vmem:[%s444 + $0x118] sm:$0x1]
      %v774 = vld [vmem:[%s444 + $0x122] sm:$0x1]
      %v775 = vld [vmem:[%s444 + $0x12c] sm:$0x1]
      %v776 = vld [vmem:[%s444 + $0x136] sm:$0x1]
      %v777 = vld [vmem:[%s444 + $0x140] sm:$0x1]
      %v778 = vld [vmem:[%s444 + $0x14a] sm:$0x1]
      %v779 = vld [vmem:[%s444 + $0x154] sm:$0x1]
      %v780 = vld [vmem:[%s444 + $0x15e] sm:$0x1]
      %v781 = vld [vmem:[%s444 + $0x168] sm:$0x1]
      %v782 = vld [vmem:[%s444 + $0x172] sm:$0x1]
      %v783 = vld [vmem:[%s444 + $0x17c] sm:$0x1]
      %v784 = vld [vmem:[%s444 + $0x186] sm:$0x1]
      %v785 = vld [vmem:[%s444 + $0x190] sm:$0x1]
      %v786 = vld [vmem:[%s444 + $0x19a] sm:$0x1]
      %v787 = vld [vmem:[%s444 + $0x1a4] sm:$0x1]
      %v788 = vld [vmem:[%s444 + $0x1ae] sm:$0x1]
      %v789 = vld [vmem:[%s444 + $0x1b8] sm:$0x1]
      %v790 = vld [vmem:[%s444 + $0x1c2] sm:$0x1]
      %v791 = vld [vmem:[%s444 + $0x1cc] sm:$0x1]
      %v792 = vld [vmem:[%s444 + $0x1d6] sm:$0x1]
      %v793 = vld [vmem:[%s444 + $0x1e0] sm:$0x1]
      %v794 = vld [vmem:[%s444 + $0x1ea] sm:$0x1]
      %v795 = vld [vmem:[%s444 + $0x1f4] sm:$0x1]
      %v796 = vld [vmem:[%s444 + $0x1fe] sm:$0x1]
      %v797 = vld [vmem:[%s444 + $0x208] sm:$0x1]
      %v798 = vld [vmem:[%s444 + $0x212] sm:$0x1]
      %v799 = vld [vmem:[%s444 + $0x21c] sm:$0x1]
      %v800 = vld [vmem:[%s444 + $0x226] sm:$0x1]
      %v801 = vld [vmem:[%s444 + $0x230] sm:$0x1]
      %v802 = vld [vmem:[%s444 + $0x23a] sm:$0x1]
      %v803 = vld [vmem:[%s444 + $0x244] sm:$0x1]
      %v804 = vld [vmem:[%s444 + $0x24e] sm:$0x1]
      %v805 = vld [vmem:[%s444 + $0x258] sm:$0x1]
      %v806 = vld [vmem:[%s444 + $0x262] sm:$0x1]
      %v807 = vld [vmem:[%s444 + $0x26c] sm:$0x1]
      %v808 = vld [vmem:[%s444 + $0x276] sm:$0x1]
      %v809 = vld [vmem:[%s444 + $0x280] sm:$0x1]
      %v810 = vld [vmem:[%s444 + $0x28a] sm:$0x1]
      %v811 = vld [vmem:[%s444 + $0x294] sm:$0x1]
      %v812 = vld [vmem:[%s444 + $0x29e] sm:$0x1]
      %v813 = vld [vmem:[%s444 + $0x2a8] sm:$0x1]
      %v814 = vld [vmem:[%s444 + $0x2b2] sm:$0x1]
      %v815 = vld [vmem:[%s444 + $0x2bc] sm:$0x1]
      %v816 = vld [vmem:[%s444 + $0x2c6] sm:$0x1]
      %v817 = vld [vmem:[%s444 + $0x2d0] sm:$0x1]
      %v818 = vld [vmem:[%s444 + $0x2da] sm:$0x1]
      %v819 = vld [vmem:[%s444 + $0x2e4] sm:$0x1]
      %v820 = vld [vmem:[%s444 + $0x2ee] sm:$0x1]
      %v821 = vld [vmem:[%s444 + $0x2f8] sm:$0x1]
      %v822 = vld [vmem:[%s444 + $0x302] sm:$0x1]
      %v823 = vld [vmem:[%s444 + $0x30c] sm:$0x1]
      %v824 = vld [vmem:[%s444 + $0x316] sm:$0x1]
      %v825 = vld [vmem:[%s444 + $0x320] sm:$0x1]
      %v826 = vld [vmem:[%s444 + $0x32a] sm:$0x1]
      %v827 = vld [vmem:[%s444 + $0x334] sm:$0x1]
      %v828 = vld [vmem:[%s444 + $0x33e] sm:$0x1]
      %v829 = vld [vmem:[%s444 + $0x348] sm:$0x1]
      %v830 = vld [vmem:[%s444 + $0x352] sm:$0x1]
      %v831 = vld [vmem:[%s444 + $0x35c] sm:$0x1]
      %v832 = vld [vmem:[%s444 + $0x366] sm:$0x1]
      %v833 = vld [vmem:[%s444 + $0x370] sm:$0x1]
      %v834 = vld [vmem:[%s444 + $0x37a] sm:$0x1]
      %v835 = vld [vmem:[%s444 + $0x384] sm:$0x1]
      %v836 = vld [vmem:[%s444 + $0x38e] sm:$0x1]
      %v837 = vld [vmem:[%s444 + $0x398] sm:$0x1]
      %v838 = vld [vmem:[%s444 + $0x3a2] sm:$0x1]
      %v839 = vld [vmem:[%s444 + $0x3ac] sm:$0x1]
      %v840 = vld [vmem:[%s444 + $0x3b6] sm:$0x1]
      %v841 = vld [vmem:[%s444 + $0x3c0] sm:$0x1]
      %v842 = vld [vmem:[%s444 + $0x3ca] sm:$0x1]
      %v843 = vld [vmem:[%s444 + $0x3d4] sm:$0x1]
      %v844 = vld [vmem:[%s444 + $0x3de] sm:$0x1]
      %s845 = scalar_lea.vmem %s135, 3
      %v846 = vld [vmem:[%s845] sm:$0x1]
      %v847 = vld [vmem:[%s845 + $0xa] sm:$0x1]
      %v848 = vld [vmem:[%s845 + $0x14] sm:$0x1]
      %v849 = vld [vmem:[%s845 + $0x1e] sm:$0x1]
      %v850 = vld [vmem:[%s845 + $0x28] sm:$0x1]
      %v851 = vld [vmem:[%s845 + $0x32] sm:$0x1]
      %v852 = vld [vmem:[%s845 + $0x3c] sm:$0x1]
      %v853 = vld [vmem:[%s845 + $0x46] sm:$0x1]
      %v854 = vld [vmem:[%s845 + $0x50] sm:$0x1]
      %v855 = vld [vmem:[%s845 + $0x5a] sm:$0x1]
      %v856 = vld [vmem:[%s845 + $0x64] sm:$0x1]
      %v857 = vld [vmem:[%s845 + $0x6e] sm:$0x1]
      %v858 = vld [vmem:[%s845 + $0x78] sm:$0x1]
      %v859 = vld [vmem:[%s845 + $0x82] sm:$0x1]
      %v860 = vld [vmem:[%s845 + $0x8c] sm:$0x1]
      %v861 = vld [vmem:[%s845 + $0x96] sm:$0x1]
      %v862 = vld [vmem:[%s845 + $0xa0] sm:$0x1]
      %v863 = vld [vmem:[%s845 + $0xaa] sm:$0x1]
      %v864 = vld [vmem:[%s845 + $0xb4] sm:$0x1]
      %v865 = vld [vmem:[%s845 + $0xbe] sm:$0x1]
      %v866 = vld [vmem:[%s845 + $0xc8] sm:$0x1]
      %v867 = vld [vmem:[%s845 + $0xd2] sm:$0x1]
      %v868 = vld [vmem:[%s845 + $0xdc] sm:$0x1]
      %v869 = vld [vmem:[%s845 + $0xe6] sm:$0x1]
      %v870 = vld [vmem:[%s845 + $0xf0] sm:$0x1]
      %v871 = vld [vmem:[%s845 + $0xfa] sm:$0x1]
      %v872 = vld [vmem:[%s845 + $0x104] sm:$0x1]
      %v873 = vld [vmem:[%s845 + $0x10e] sm:$0x1]
      %v874 = vld [vmem:[%s845 + $0x118] sm:$0x1]
      %v875 = vld [vmem:[%s845 + $0x122] sm:$0x1]
      %v876 = vld [vmem:[%s845 + $0x12c] sm:$0x1]
      %v877 = vld [vmem:[%s845 + $0x136] sm:$0x1]
      %v878 = vld [vmem:[%s845 + $0x140] sm:$0x1]
      %v879 = vld [vmem:[%s845 + $0x14a] sm:$0x1]
      %v880 = vld [vmem:[%s845 + $0x154] sm:$0x1]
      %v881 = vld [vmem:[%s845 + $0x15e] sm:$0x1]
      %v882 = vld [vmem:[%s845 + $0x168] sm:$0x1]
      %v883 = vld [vmem:[%s845 + $0x172] sm:$0x1]
      %v884 = vld [vmem:[%s845 + $0x17c] sm:$0x1]
      %v885 = vld [vmem:[%s845 + $0x186] sm:$0x1]
      %v886 = vld [vmem:[%s845 + $0x190] sm:$0x1]
      %v887 = vld [vmem:[%s845 + $0x19a] sm:$0x1]
      %v888 = vld [vmem:[%s845 + $0x1a4] sm:$0x1]
      %v889 = vld [vmem:[%s845 + $0x1ae] sm:$0x1]
      %v890 = vld [vmem:[%s845 + $0x1b8] sm:$0x1]
      %v891 = vld [vmem:[%s845 + $0x1c2] sm:$0x1]
      %v892 = vld [vmem:[%s845 + $0x1cc] sm:$0x1]
      %v893 = vld [vmem:[%s845 + $0x1d6] sm:$0x1]
      %v894 = vld [vmem:[%s845 + $0x1e0] sm:$0x1]
      %v895 = vld [vmem:[%s845 + $0x1ea] sm:$0x1]
      %v896 = vld [vmem:[%s845 + $0x1f4] sm:$0x1]
      %v897 = vld [vmem:[%s845 + $0x1fe] sm:$0x1]
      %v898 = vld [vmem:[%s845 + $0x208] sm:$0x1]
      %v899 = vld [vmem:[%s845 + $0x212] sm:$0x1]
      %v900 = vld [vmem:[%s845 + $0x21c] sm:$0x1]
      %v901 = vld [vmem:[%s845 + $0x226] sm:$0x1]
      %v902 = vld [vmem:[%s845 + $0x230] sm:$0x1]
      %v903 = vld [vmem:[%s845 + $0x23a] sm:$0x1]
      %v904 = vld [vmem:[%s845 + $0x244] sm:$0x1]
      %v905 = vld [vmem:[%s845 + $0x24e] sm:$0x1]
      %v906 = vld [vmem:[%s845 + $0x258] sm:$0x1]
      %v907 = vld [vmem:[%s845 + $0x262] sm:$0x1]
      %v908 = vld [vmem:[%s845 + $0x26c] sm:$0x1]
      %v909 = vld [vmem:[%s845 + $0x276] sm:$0x1]
      %v910 = vld [vmem:[%s845 + $0x280] sm:$0x1]
      %v911 = vld [vmem:[%s845 + $0x28a] sm:$0x1]
      %v912 = vld [vmem:[%s845 + $0x294] sm:$0x1]
      %v913 = vld [vmem:[%s845 + $0x29e] sm:$0x1]
      %v914 = vld [vmem:[%s845 + $0x2a8] sm:$0x1]
      %v915 = vld [vmem:[%s845 + $0x2b2] sm:$0x1]
      %v916 = vld [vmem:[%s845 + $0x2bc] sm:$0x1]
      %v917 = vld [vmem:[%s845 + $0x2c6] sm:$0x1]
      %v918 = vld [vmem:[%s845 + $0x2d0] sm:$0x1]
      %v919 = vld [vmem:[%s845 + $0x2da] sm:$0x1]
      %v920 = vld [vmem:[%s845 + $0x2e4] sm:$0x1]
      %v921 = vld [vmem:[%s845 + $0x2ee] sm:$0x1]
      %v922 = vld [vmem:[%s845 + $0x2f8] sm:$0x1]
      %v923 = vld [vmem:[%s845 + $0x302] sm:$0x1]
      %v924 = vld [vmem:[%s845 + $0x30c] sm:$0x1]
      %v925 = vld [vmem:[%s845 + $0x316] sm:$0x1]
      %v926 = vld [vmem:[%s845 + $0x320] sm:$0x1]
      %v927 = vld [vmem:[%s845 + $0x32a] sm:$0x1]
      %v928 = vld [vmem:[%s845 + $0x334] sm:$0x1]
      %v929 = vld [vmem:[%s845 + $0x33e] sm:$0x1]
      %v930 = vld [vmem:[%s845 + $0x348] sm:$0x1]
      %v931 = vld [vmem:[%s845 + $0x352] sm:$0x1]
      %v932 = vld [vmem:[%s845 + $0x35c] sm:$0x1]
      %v933 = vld [vmem:[%s845 + $0x366] sm:$0x1]
      %v934 = vld [vmem:[%s845 + $0x370] sm:$0x1]
      %v935 = vld [vmem:[%s845 + $0x37a] sm:$0x1]
      %v936 = vld [vmem:[%s845 + $0x384] sm:$0x1]
      %v937 = vld [vmem:[%s845 + $0x38e] sm:$0x1]
      %v938 = vld [vmem:[%s845 + $0x398] sm:$0x1]
      %v939 = vld [vmem:[%s845 + $0x3a2] sm:$0x1]
      %v940 = vld [vmem:[%s845 + $0x3ac] sm:$0x1]
      %v941 = vld [vmem:[%s845 + $0x3b6] sm:$0x1]
      %v942 = vld [vmem:[%s845 + $0x3c0] sm:$0x1]
      %v943 = vld [vmem:[%s845 + $0x3ca] sm:$0x1]
      %v944 = vld [vmem:[%s845 + $0x3d4] sm:$0x1]
      %v945 = vld [vmem:[%s845 + $0x3de] sm:$0x1]
      %v946 = vmax.f32 %v745, %v846
      %v947 = vmax.f32 %v746, %v847
      %v948 = vmax.f32 %v747, %v848
      %v949 = vmax.f32 %v748, %v849
      %v950 = vmax.f32 %v749, %v850
      %v951 = vmax.f32 %v750, %v851
      %v952 = vmax.f32 %v751, %v852
      %v953 = vmax.f32 %v752, %v853
      %v954 = vmax.f32 %v753, %v854
      %v955 = vmax.f32 %v754, %v855
      %v956 = vmax.f32 %v755, %v856
      %v957 = vmax.f32 %v756, %v857
      %v958 = vmax.f32 %v757, %v858
      %v959 = vmax.f32 %v758, %v859
      %v960 = vmax.f32 %v759, %v860
      %v961 = vmax.f32 %v760, %v861
      %v962 = vmax.f32 %v761, %v862
      %v963 = vmax.f32 %v762, %v863
      %v964 = vmax.f32 %v763, %v864
      %v965 = vmax.f32 %v764, %v865
      %v966 = vmax.f32 %v765, %v866
      %v967 = vmax.f32 %v766, %v867
      %v968 = vmax.f32 %v767, %v868
      %v969 = vmax.f32 %v768, %v869
      %v970 = vmax.f32 %v769, %v870
      %v971 = vmax.f32 %v770, %v871
      %v972 = vmax.f32 %v771, %v872
      %v973 = vmax.f32 %v772, %v873
      %v974 = vmax.f32 %v773, %v874
      %v975 = vmax.f32 %v774, %v875
      %v976 = vmax.f32 %v775, %v876
      %v977 = vmax.f32 %v776, %v877
      %v978 = vmax.f32 %v777, %v878
      %v979 = vmax.f32 %v778, %v879
      %v980 = vmax.f32 %v779, %v880
      %v981 = vmax.f32 %v780, %v881
      %v982 = vmax.f32 %v781, %v882
      %v983 = vmax.f32 %v782, %v883
      %v984 = vmax.f32 %v783, %v884
      %v985 = vmax.f32 %v784, %v885
      %v986 = vmax.f32 %v785, %v886
      %v987 = vmax.f32 %v786, %v887
      %v988 = vmax.f32 %v787, %v888
      %v989 = vmax.f32 %v788, %v889
      %v990 = vmax.f32 %v789, %v890
      %v991 = vmax.f32 %v790, %v891
      %v992 = vmax.f32 %v791, %v892
      %v993 = vmax.f32 %v792, %v893
      %v994 = vmax.f32 %v793, %v894
      %v995 = vmax.f32 %v794, %v895
      %v996 = vmax.f32 %v795, %v896
      %v997 = vmax.f32 %v796, %v897
      %v998 = vmax.f32 %v797, %v898
      %v999 = vmax.f32 %v798, %v899
      %v1000 = vmax.f32 %v799, %v900
      %v1001 = vmax.f32 %v800, %v901
      %v1002 = vmax.f32 %v801, %v902
      %v1003 = vmax.f32 %v802, %v903
      %v1004 = vmax.f32 %v803, %v904
      %v1005 = vmax.f32 %v804, %v905
      %v1006 = vmax.f32 %v805, %v906
      %v1007 = vmax.f32 %v806, %v907
      %v1008 = vmax.f32 %v807, %v908
      %v1009 = vmax.f32 %v808, %v909
      %v1010 = vmax.f32 %v809, %v910
      %v1011 = vmax.f32 %v810, %v911
      %v1012 = vmax.f32 %v811, %v912
      %v1013 = vmax.f32 %v812, %v913
      %v1014 = vmax.f32 %v813, %v914
      %v1015 = vmax.f32 %v814, %v915
      %v1016 = vmax.f32 %v815, %v916
      %v1017 = vmax.f32 %v816, %v917
      %v1018 = vmax.f32 %v817, %v918
      %v1019 = vmax.f32 %v818, %v919
      %v1020 = vmax.f32 %v819, %v920
      %v1021 = vmax.f32 %v820, %v921
      %v1022 = vmax.f32 %v821, %v922
      %v1023 = vmax.f32 %v822, %v923
      %v1024 = vmax.f32 %v823, %v924
      %v1025 = vmax.f32 %v824, %v925
      %v1026 = vmax.f32 %v825, %v926
      %v1027 = vmax.f32 %v826, %v927
      %v1028 = vmax.f32 %v827, %v928
      %v1029 = vmax.f32 %v828, %v929
      %v1030 = vmax.f32 %v829, %v930
      %v1031 = vmax.f32 %v830, %v931
      %v1032 = vmax.f32 %v831, %v932
      %v1033 = vmax.f32 %v832, %v933
      %v1034 = vmax.f32 %v833, %v934
      %v1035 = vmax.f32 %v834, %v935
      %v1036 = vmax.f32 %v835, %v936
      %v1037 = vmax.f32 %v836, %v937
      %v1038 = vmax.f32 %v837, %v938
      %v1039 = vmax.f32 %v838, %v939
      %v1040 = vmax.f32 %v839, %v940
      %v1041 = vmax.f32 %v840, %v941
      %v1042 = vmax.f32 %v841, %v942
      %v1043 = vmax.f32 %v842, %v943
      %v1044 = vmax.f32 %v843, %v944
      %v1045 = vmax.f32 %v844, %v945
      %s1046 = scalar_lea.vmem %s135, 4
      %v1047 = vld [vmem:[%s1046] sm:$0x1]
      %v1048 = vld [vmem:[%s1046 + $0xa] sm:$0x1]
      %v1049 = vld [vmem:[%s1046 + $0x14] sm:$0x1]
      %v1050 = vld [vmem:[%s1046 + $0x1e] sm:$0x1]
      %v1051 = vld [vmem:[%s1046 + $0x28] sm:$0x1]
      %v1052 = vld [vmem:[%s1046 + $0x32] sm:$0x1]
      %v1053 = vld [vmem:[%s1046 + $0x3c] sm:$0x1]
      %v1054 = vld [vmem:[%s1046 + $0x46] sm:$0x1]
      %v1055 = vld [vmem:[%s1046 + $0x50] sm:$0x1]
      %v1056 = vld [vmem:[%s1046 + $0x5a] sm:$0x1]
      %v1057 = vld [vmem:[%s1046 + $0x64] sm:$0x1]
      %v1058 = vld [vmem:[%s1046 + $0x6e] sm:$0x1]
      %v1059 = vld [vmem:[%s1046 + $0x78] sm:$0x1]
      %v1060 = vld [vmem:[%s1046 + $0x82] sm:$0x1]
      %v1061 = vld [vmem:[%s1046 + $0x8c] sm:$0x1]
      %v1062 = vld [vmem:[%s1046 + $0x96] sm:$0x1]
      %v1063 = vld [vmem:[%s1046 + $0xa0] sm:$0x1]
      %v1064 = vld [vmem:[%s1046 + $0xaa] sm:$0x1]
      %v1065 = vld [vmem:[%s1046 + $0xb4] sm:$0x1]
      %v1066 = vld [vmem:[%s1046 + $0xbe] sm:$0x1]
      %v1067 = vld [vmem:[%s1046 + $0xc8] sm:$0x1]
      %v1068 = vld [vmem:[%s1046 + $0xd2] sm:$0x1]
      %v1069 = vld [vmem:[%s1046 + $0xdc] sm:$0x1]
      %v1070 = vld [vmem:[%s1046 + $0xe6] sm:$0x1]
      %v1071 = vld [vmem:[%s1046 + $0xf0] sm:$0x1]
      %v1072 = vld [vmem:[%s1046 + $0xfa] sm:$0x1]
      %v1073 = vld [vmem:[%s1046 + $0x104] sm:$0x1]
      %v1074 = vld [vmem:[%s1046 + $0x10e] sm:$0x1]
      %v1075 = vld [vmem:[%s1046 + $0x118] sm:$0x1]
      %v1076 = vld [vmem:[%s1046 + $0x122] sm:$0x1]
      %v1077 = vld [vmem:[%s1046 + $0x12c] sm:$0x1]
      %v1078 = vld [vmem:[%s1046 + $0x136] sm:$0x1]
      %v1079 = vld [vmem:[%s1046 + $0x140] sm:$0x1]
      %v1080 = vld [vmem:[%s1046 + $0x14a] sm:$0x1]
      %v1081 = vld [vmem:[%s1046 + $0x154] sm:$0x1]
      %v1082 = vld [vmem:[%s1046 + $0x15e] sm:$0x1]
      %v1083 = vld [vmem:[%s1046 + $0x168] sm:$0x1]
      %v1084 = vld [vmem:[%s1046 + $0x172] sm:$0x1]
      %v1085 = vld [vmem:[%s1046 + $0x17c] sm:$0x1]
      %v1086 = vld [vmem:[%s1046 + $0x186] sm:$0x1]
      %v1087 = vld [vmem:[%s1046 + $0x190] sm:$0x1]
      %v1088 = vld [vmem:[%s1046 + $0x19a] sm:$0x1]
      %v1089 = vld [vmem:[%s1046 + $0x1a4] sm:$0x1]
      %v1090 = vld [vmem:[%s1046 + $0x1ae] sm:$0x1]
      %v1091 = vld [vmem:[%s1046 + $0x1b8] sm:$0x1]
      %v1092 = vld [vmem:[%s1046 + $0x1c2] sm:$0x1]
      %v1093 = vld [vmem:[%s1046 + $0x1cc] sm:$0x1]
      %v1094 = vld [vmem:[%s1046 + $0x1d6] sm:$0x1]
      %v1095 = vld [vmem:[%s1046 + $0x1e0] sm:$0x1]
      %v1096 = vld [vmem:[%s1046 + $0x1ea] sm:$0x1]
      %v1097 = vld [vmem:[%s1046 + $0x1f4] sm:$0x1]
      %v1098 = vld [vmem:[%s1046 + $0x1fe] sm:$0x1]
      %v1099 = vld [vmem:[%s1046 + $0x208] sm:$0x1]
      %v1100 = vld [vmem:[%s1046 + $0x212] sm:$0x1]
      %v1101 = vld [vmem:[%s1046 + $0x21c] sm:$0x1]
      %v1102 = vld [vmem:[%s1046 + $0x226] sm:$0x1]
      %v1103 = vld [vmem:[%s1046 + $0x230] sm:$0x1]
      %v1104 = vld [vmem:[%s1046 + $0x23a] sm:$0x1]
      %v1105 = vld [vmem:[%s1046 + $0x244] sm:$0x1]
      %v1106 = vld [vmem:[%s1046 + $0x24e] sm:$0x1]
      %v1107 = vld [vmem:[%s1046 + $0x258] sm:$0x1]
      %v1108 = vld [vmem:[%s1046 + $0x262] sm:$0x1]
      %v1109 = vld [vmem:[%s1046 + $0x26c] sm:$0x1]
      %v1110 = vld [vmem:[%s1046 + $0x276] sm:$0x1]
      %v1111 = vld [vmem:[%s1046 + $0x280] sm:$0x1]
      %v1112 = vld [vmem:[%s1046 + $0x28a] sm:$0x1]
      %v1113 = vld [vmem:[%s1046 + $0x294] sm:$0x1]
      %v1114 = vld [vmem:[%s1046 + $0x29e] sm:$0x1]
      %v1115 = vld [vmem:[%s1046 + $0x2a8] sm:$0x1]
      %v1116 = vld [vmem:[%s1046 + $0x2b2] sm:$0x1]
      %v1117 = vld [vmem:[%s1046 + $0x2bc] sm:$0x1]
      %v1118 = vld [vmem:[%s1046 + $0x2c6] sm:$0x1]
      %v1119 = vld [vmem:[%s1046 + $0x2d0] sm:$0x1]
      %v1120 = vld [vmem:[%s1046 + $0x2da] sm:$0x1]
      %v1121 = vld [vmem:[%s1046 + $0x2e4] sm:$0x1]
      %v1122 = vld [vmem:[%s1046 + $0x2ee] sm:$0x1]
      %v1123 = vld [vmem:[%s1046 + $0x2f8] sm:$0x1]
      %v1124 = vld [vmem:[%s1046 + $0x302] sm:$0x1]
      %v1125 = vld [vmem:[%s1046 + $0x30c] sm:$0x1]
      %v1126 = vld [vmem:[%s1046 + $0x316] sm:$0x1]
      %v1127 = vld [vmem:[%s1046 + $0x320] sm:$0x1]
      %v1128 = vld [vmem:[%s1046 + $0x32a] sm:$0x1]
      %v1129 = vld [vmem:[%s1046 + $0x334] sm:$0x1]
      %v1130 = vld [vmem:[%s1046 + $0x33e] sm:$0x1]
      %v1131 = vld [vmem:[%s1046 + $0x348] sm:$0x1]
      %v1132 = vld [vmem:[%s1046 + $0x352] sm:$0x1]
      %v1133 = vld [vmem:[%s1046 + $0x35c] sm:$0x1]
      %v1134 = vld [vmem:[%s1046 + $0x366] sm:$0x1]
      %v1135 = vld [vmem:[%s1046 + $0x370] sm:$0x1]
      %v1136 = vld [vmem:[%s1046 + $0x37a] sm:$0x1]
      %v1137 = vld [vmem:[%s1046 + $0x384] sm:$0x1]
      %v1138 = vld [vmem:[%s1046 + $0x38e] sm:$0x1]
      %v1139 = vld [vmem:[%s1046 + $0x398] sm:$0x1]
      %v1140 = vld [vmem:[%s1046 + $0x3a2] sm:$0x1]
      %v1141 = vld [vmem:[%s1046 + $0x3ac] sm:$0x1]
      %v1142 = vld [vmem:[%s1046 + $0x3b6] sm:$0x1]
      %v1143 = vld [vmem:[%s1046 + $0x3c0] sm:$0x1]
      %v1144 = vld [vmem:[%s1046 + $0x3ca] sm:$0x1]
      %v1145 = vld [vmem:[%s1046 + $0x3d4] sm:$0x1]
      %v1146 = vld [vmem:[%s1046 + $0x3de] sm:$0x1]
      %v1147 = vmax.f32 %v946, %v1047
      %v1148 = vmax.f32 %v947, %v1048
      %v1149 = vmax.f32 %v948, %v1049
      %v1150 = vmax.f32 %v949, %v1050
      %v1151 = vmax.f32 %v950, %v1051
      %v1152 = vmax.f32 %v951, %v1052
      %v1153 = vmax.f32 %v952, %v1053
      %v1154 = vmax.f32 %v953, %v1054
      %v1155 = vmax.f32 %v954, %v1055
      %v1156 = vmax.f32 %v955, %v1056
      %v1157 = vmax.f32 %v956, %v1057
      %v1158 = vmax.f32 %v957, %v1058
      %v1159 = vmax.f32 %v958, %v1059
      %v1160 = vmax.f32 %v959, %v1060
      %v1161 = vmax.f32 %v960, %v1061
      %v1162 = vmax.f32 %v961, %v1062
      %v1163 = vmax.f32 %v962, %v1063
      %v1164 = vmax.f32 %v963, %v1064
      %v1165 = vmax.f32 %v964, %v1065
      %v1166 = vmax.f32 %v965, %v1066
      %v1167 = vmax.f32 %v966, %v1067
      %v1168 = vmax.f32 %v967, %v1068
      %v1169 = vmax.f32 %v968, %v1069
      %v1170 = vmax.f32 %v969, %v1070
      %v1171 = vmax.f32 %v970, %v1071
      %v1172 = vmax.f32 %v971, %v1072
      %v1173 = vmax.f32 %v972, %v1073
      %v1174 = vmax.f32 %v973, %v1074
      %v1175 = vmax.f32 %v974, %v1075
      %v1176 = vmax.f32 %v975, %v1076
      %v1177 = vmax.f32 %v976, %v1077
      %v1178 = vmax.f32 %v977, %v1078
      %v1179 = vmax.f32 %v978, %v1079
      %v1180 = vmax.f32 %v979, %v1080
      %v1181 = vmax.f32 %v980, %v1081
      %v1182 = vmax.f32 %v981, %v1082
      %v1183 = vmax.f32 %v982, %v1083
      %v1184 = vmax.f32 %v983, %v1084
      %v1185 = vmax.f32 %v984, %v1085
      %v1186 = vmax.f32 %v985, %v1086
      %v1187 = vmax.f32 %v986, %v1087
      %v1188 = vmax.f32 %v987, %v1088
      %v1189 = vmax.f32 %v988, %v1089
      %v1190 = vmax.f32 %v989, %v1090
      %v1191 = vmax.f32 %v990, %v1091
      %v1192 = vmax.f32 %v991, %v1092
      %v1193 = vmax.f32 %v992, %v1093
      %v1194 = vmax.f32 %v993, %v1094
      %v1195 = vmax.f32 %v994, %v1095
      %v1196 = vmax.f32 %v995, %v1096
      %v1197 = vmax.f32 %v996, %v1097
      %v1198 = vmax.f32 %v997, %v1098
      %v1199 = vmax.f32 %v998, %v1099
      %v1200 = vmax.f32 %v999, %v1100
      %v1201 = vmax.f32 %v1000, %v1101
      %v1202 = vmax.f32 %v1001, %v1102
      %v1203 = vmax.f32 %v1002, %v1103
      %v1204 = vmax.f32 %v1003, %v1104
      %v1205 = vmax.f32 %v1004, %v1105
      %v1206 = vmax.f32 %v1005, %v1106
      %v1207 = vmax.f32 %v1006, %v1107
      %v1208 = vmax.f32 %v1007, %v1108
      %v1209 = vmax.f32 %v1008, %v1109
      %v1210 = vmax.f32 %v1009, %v1110
      %v1211 = vmax.f32 %v1010, %v1111
      %v1212 = vmax.f32 %v1011, %v1112
      %v1213 = vmax.f32 %v1012, %v1113
      %v1214 = vmax.f32 %v1013, %v1114
      %v1215 = vmax.f32 %v1014, %v1115
      %v1216 = vmax.f32 %v1015, %v1116
      %v1217 = vmax.f32 %v1016, %v1117
      %v1218 = vmax.f32 %v1017, %v1118
      %v1219 = vmax.f32 %v1018, %v1119
      %v1220 = vmax.f32 %v1019, %v1120
      %v1221 = vmax.f32 %v1020, %v1121
      %v1222 = vmax.f32 %v1021, %v1122
      %v1223 = vmax.f32 %v1022, %v1123
      %v1224 = vmax.f32 %v1023, %v1124
      %v1225 = vmax.f32 %v1024, %v1125
      %v1226 = vmax.f32 %v1025, %v1126
      %v1227 = vmax.f32 %v1026, %v1127
      %v1228 = vmax.f32 %v1027, %v1128
      %v1229 = vmax.f32 %v1028, %v1129
      %v1230 = vmax.f32 %v1029, %v1130
      %v1231 = vmax.f32 %v1030, %v1131
      %v1232 = vmax.f32 %v1031, %v1132
      %v1233 = vmax.f32 %v1032, %v1133
      %v1234 = vmax.f32 %v1033, %v1134
      %v1235 = vmax.f32 %v1034, %v1135
      %v1236 = vmax.f32 %v1035, %v1136
      %v1237 = vmax.f32 %v1036, %v1137
      %v1238 = vmax.f32 %v1037, %v1138
      %v1239 = vmax.f32 %v1038, %v1139
      %v1240 = vmax.f32 %v1039, %v1140
      %v1241 = vmax.f32 %v1040, %v1141
      %v1242 = vmax.f32 %v1041, %v1142
      %v1243 = vmax.f32 %v1042, %v1143
      %v1244 = vmax.f32 %v1043, %v1144
      %v1245 = vmax.f32 %v1044, %v1145
      %v1246 = vmax.f32 %v1045, %v1146
      %s1247 = scalar_lea.vmem [#allocation2], 1
      %1248 = vst [vmem:[%s1247] sm:$0x1] %v1147
      %1249 = vst [vmem:[%s1247 + $0x4] sm:$0x1] %v1148
      %1250 = vst [vmem:[%s1247 + $0x8] sm:$0x1] %v1149
      %1251 = vst [vmem:[%s1247 + $0xc] sm:$0x1] %v1150
      %1252 = vst [vmem:[%s1247 + $0x10] sm:$0x1] %v1151
      %1253 = vst [vmem:[%s1247 + $0x14] sm:$0x1] %v1152
      %1254 = vst [vmem:[%s1247 + $0x18] sm:$0x1] %v1153
      %1255 = vst [vmem:[%s1247 + $0x1c] sm:$0x1] %v1154
      %1256 = vst [vmem:[%s1247 + $0x20] sm:$0x1] %v1155
      %1257 = vst [vmem:[%s1247 + $0x24] sm:$0x1] %v1156
      %1258 = vst [vmem:[%s1247 + $0x28] sm:$0x1] %v1157
      %1259 = vst [vmem:[%s1247 + $0x2c] sm:$0x1] %v1158
      %1260 = vst [vmem:[%s1247 + $0x30] sm:$0x1] %v1159
      %1261 = vst [vmem:[%s1247 + $0x34] sm:$0x1] %v1160
      %1262 = vst [vmem:[%s1247 + $0x38] sm:$0x1] %v1161
      %1263 = vst [vmem:[%s1247 + $0x3c] sm:$0x1] %v1162
      %1264 = vst [vmem:[%s1247 + $0x40] sm:$0x1] %v1163
      %1265 = vst [vmem:[%s1247 + $0x44] sm:$0x1] %v1164
      %1266 = vst [vmem:[%s1247 + $0x48] sm:$0x1] %v1165
      %1267 = vst [vmem:[%s1247 + $0x4c] sm:$0x1] %v1166
      %1268 = vst [vmem:[%s1247 + $0x50] sm:$0x1] %v1167
      %1269 = vst [vmem:[%s1247 + $0x54] sm:$0x1] %v1168
      %1270 = vst [vmem:[%s1247 + $0x58] sm:$0x1] %v1169
      %1271 = vst [vmem:[%s1247 + $0x5c] sm:$0x1] %v1170
      %1272 = vst [vmem:[%s1247 + $0x60] sm:$0x1] %v1171
      %1273 = vst [vmem:[%s1247 + $0x64] sm:$0x1] %v1172
      %1274 = vst [vmem:[%s1247 + $0x68] sm:$0x1] %v1173
      %1275 = vst [vmem:[%s1247 + $0x6c] sm:$0x1] %v1174
      %1276 = vst [vmem:[%s1247 + $0x70] sm:$0x1] %v1175
      %1277 = vst [vmem:[%s1247 + $0x74] sm:$0x1] %v1176
      %1278 = vst [vmem:[%s1247 + $0x78] sm:$0x1] %v1177
      %1279 = vst [vmem:[%s1247 + $0x7c] sm:$0x1] %v1178
      %1280 = vst [vmem:[%s1247 + $0x80] sm:$0x1] %v1179
      %1281 = vst [vmem:[%s1247 + $0x84] sm:$0x1] %v1180
      %1282 = vst [vmem:[%s1247 + $0x88] sm:$0x1] %v1181
      %1283 = vst [vmem:[%s1247 + $0x8c] sm:$0x1] %v1182
      %1284 = vst [vmem:[%s1247 + $0x90] sm:$0x1] %v1183
      %1285 = vst [vmem:[%s1247 + $0x94] sm:$0x1] %v1184
      %1286 = vst [vmem:[%s1247 + $0x98] sm:$0x1] %v1185
      %1287 = vst [vmem:[%s1247 + $0x9c] sm:$0x1] %v1186
      %1288 = vst [vmem:[%s1247 + $0xa0] sm:$0x1] %v1187
      %1289 = vst [vmem:[%s1247 + $0xa4] sm:$0x1] %v1188
      %1290 = vst [vmem:[%s1247 + $0xa8] sm:$0x1] %v1189
      %1291 = vst [vmem:[%s1247 + $0xac] sm:$0x1] %v1190
      %1292 = vst [vmem:[%s1247 + $0xb0] sm:$0x1] %v1191
      %1293 = vst [vmem:[%s1247 + $0xb4] sm:$0x1] %v1192
      %1294 = vst [vmem:[%s1247 + $0xb8] sm:$0x1] %v1193
      %1295 = vst [vmem:[%s1247 + $0xbc] sm:$0x1] %v1194
      %1296 = vst [vmem:[%s1247 + $0xc0] sm:$0x1] %v1195
      %1297 = vst [vmem:[%s1247 + $0xc4] sm:$0x1] %v1196
      %1298 = vst [vmem:[%s1247 + $0xc8] sm:$0x1] %v1197
      %1299 = vst [vmem:[%s1247 + $0xcc] sm:$0x1] %v1198
      %1300 = vst [vmem:[%s1247 + $0xd0] sm:$0x1] %v1199
      %1301 = vst [vmem:[%s1247 + $0xd4] sm:$0x1] %v1200
      %1302 = vst [vmem:[%s1247 + $0xd8] sm:$0x1] %v1201
      %1303 = vst [vmem:[%s1247 + $0xdc] sm:$0x1] %v1202
      %1304 = vst [vmem:[%s1247 + $0xe0] sm:$0x1] %v1203
      %1305 = vst [vmem:[%s1247 + $0xe4] sm:$0x1] %v1204
      %1306 = vst [vmem:[%s1247 + $0xe8] sm:$0x1] %v1205
      %1307 = vst [vmem:[%s1247 + $0xec] sm:$0x1] %v1206
      %1308 = vst [vmem:[%s1247 + $0xf0] sm:$0x1] %v1207
      %1309 = vst [vmem:[%s1247 + $0xf4] sm:$0x1] %v1208
      %1310 = vst [vmem:[%s1247 + $0xf8] sm:$0x1] %v1209
      %1311 = vst [vmem:[%s1247 + $0xfc] sm:$0x1] %v1210
      %1312 = vst [vmem:[%s1247 + $0x100] sm:$0x1] %v1211
      %1313 = vst [vmem:[%s1247 + $0x104] sm:$0x1] %v1212
      %1314 = vst [vmem:[%s1247 + $0x108] sm:$0x1] %v1213
      %1315 = vst [vmem:[%s1247 + $0x10c] sm:$0x1] %v1214
      %1316 = vst [vmem:[%s1247 + $0x110] sm:$0x1] %v1215
      %1317 = vst [vmem:[%s1247 + $0x114] sm:$0x1] %v1216
      %1318 = vst [vmem:[%s1247 + $0x118] sm:$0x1] %v1217
      %1319 = vst [vmem:[%s1247 + $0x11c] sm:$0x1] %v1218
      %1320 = vst [vmem:[%s1247 + $0x120] sm:$0x1] %v1219
      %1321 = vst [vmem:[%s1247 + $0x124] sm:$0x1] %v1220
      %1322 = vst [vmem:[%s1247 + $0x128] sm:$0x1] %v1221
      %1323 = vst [vmem:[%s1247 + $0x12c] sm:$0x1] %v1222
      %1324 = vst [vmem:[%s1247 + $0x130] sm:$0x1] %v1223
      %1325 = vst [vmem:[%s1247 + $0x134] sm:$0x1] %v1224
      %1326 = vst [vmem:[%s1247 + $0x138] sm:$0x1] %v1225
      %1327 = vst [vmem:[%s1247 + $0x13c] sm:$0x1] %v1226
      %1328 = vst [vmem:[%s1247 + $0x140] sm:$0x1] %v1227
      %1329 = vst [vmem:[%s1247 + $0x144] sm:$0x1] %v1228
      %1330 = vst [vmem:[%s1247 + $0x148] sm:$0x1] %v1229
      %1331 = vst [vmem:[%s1247 + $0x14c] sm:$0x1] %v1230
      %1332 = vst [vmem:[%s1247 + $0x150] sm:$0x1] %v1231
      %1333 = vst [vmem:[%s1247 + $0x154] sm:$0x1] %v1232
      %1334 = vst [vmem:[%s1247 + $0x158] sm:$0x1] %v1233
      %1335 = vst [vmem:[%s1247 + $0x15c] sm:$0x1] %v1234
      %1336 = vst [vmem:[%s1247 + $0x160] sm:$0x1] %v1235
      %1337 = vst [vmem:[%s1247 + $0x164] sm:$0x1] %v1236
      %1338 = vst [vmem:[%s1247 + $0x168] sm:$0x1] %v1237
      %1339 = vst [vmem:[%s1247 + $0x16c] sm:$0x1] %v1238
      %1340 = vst [vmem:[%s1247 + $0x170] sm:$0x1] %v1239
      %1341 = vst [vmem:[%s1247 + $0x174] sm:$0x1] %v1240
      %1342 = vst [vmem:[%s1247 + $0x178] sm:$0x1] %v1241
      %1343 = vst [vmem:[%s1247 + $0x17c] sm:$0x1] %v1242
      %1344 = vst [vmem:[%s1247 + $0x180] sm:$0x1] %v1243
      %1345 = vst [vmem:[%s1247 + $0x184] sm:$0x1] %v1244
      %1346 = vst [vmem:[%s1247 + $0x188] sm:$0x1] %v1245
      %1347 = vst [vmem:[%s1247 + $0x18c] sm:$0x1] %v1246
      %v1348 = vld [vmem:[%s1046] sm:$0x1]
      %v1349 = vld [vmem:[%s1046 + $0xa] sm:$0x1]
      %v1350 = vld [vmem:[%s1046 + $0x14] sm:$0x1]
      %v1351 = vld [vmem:[%s1046 + $0x1e] sm:$0x1]
      %v1352 = vld [vmem:[%s1046 + $0x28] sm:$0x1]
      %v1353 = vld [vmem:[%s1046 + $0x32] sm:$0x1]
      %v1354 = vld [vmem:[%s1046 + $0x3c] sm:$0x1]
      %v1355 = vld [vmem:[%s1046 + $0x46] sm:$0x1]
      %v1356 = vld [vmem:[%s1046 + $0x50] sm:$0x1]
      %v1357 = vld [vmem:[%s1046 + $0x5a] sm:$0x1]
      %v1358 = vld [vmem:[%s1046 + $0x64] sm:$0x1]
      %v1359 = vld [vmem:[%s1046 + $0x6e] sm:$0x1]
      %v1360 = vld [vmem:[%s1046 + $0x78] sm:$0x1]
      %v1361 = vld [vmem:[%s1046 + $0x82] sm:$0x1]
      %v1362 = vld [vmem:[%s1046 + $0x8c] sm:$0x1]
      %v1363 = vld [vmem:[%s1046 + $0x96] sm:$0x1]
      %v1364 = vld [vmem:[%s1046 + $0xa0] sm:$0x1]
      %v1365 = vld [vmem:[%s1046 + $0xaa] sm:$0x1]
      %v1366 = vld [vmem:[%s1046 + $0xb4] sm:$0x1]
      %v1367 = vld [vmem:[%s1046 + $0xbe] sm:$0x1]
      %v1368 = vld [vmem:[%s1046 + $0xc8] sm:$0x1]
      %v1369 = vld [vmem:[%s1046 + $0xd2] sm:$0x1]
      %v1370 = vld [vmem:[%s1046 + $0xdc] sm:$0x1]
      %v1371 = vld [vmem:[%s1046 + $0xe6] sm:$0x1]
      %v1372 = vld [vmem:[%s1046 + $0xf0] sm:$0x1]
      %v1373 = vld [vmem:[%s1046 + $0xfa] sm:$0x1]
      %v1374 = vld [vmem:[%s1046 + $0x104] sm:$0x1]
      %v1375 = vld [vmem:[%s1046 + $0x10e] sm:$0x1]
      %v1376 = vld [vmem:[%s1046 + $0x118] sm:$0x1]
      %v1377 = vld [vmem:[%s1046 + $0x122] sm:$0x1]
      %v1378 = vld [vmem:[%s1046 + $0x12c] sm:$0x1]
      %v1379 = vld [vmem:[%s1046 + $0x136] sm:$0x1]
      %v1380 = vld [vmem:[%s1046 + $0x140] sm:$0x1]
      %v1381 = vld [vmem:[%s1046 + $0x14a] sm:$0x1]
      %v1382 = vld [vmem:[%s1046 + $0x154] sm:$0x1]
      %v1383 = vld [vmem:[%s1046 + $0x15e] sm:$0x1]
      %v1384 = vld [vmem:[%s1046 + $0x168] sm:$0x1]
      %v1385 = vld [vmem:[%s1046 + $0x172] sm:$0x1]
      %v1386 = vld [vmem:[%s1046 + $0x17c] sm:$0x1]
      %v1387 = vld [vmem:[%s1046 + $0x186] sm:$0x1]
      %v1388 = vld [vmem:[%s1046 + $0x190] sm:$0x1]
      %v1389 = vld [vmem:[%s1046 + $0x19a] sm:$0x1]
      %v1390 = vld [vmem:[%s1046 + $0x1a4] sm:$0x1]
      %v1391 = vld [vmem:[%s1046 + $0x1ae] sm:$0x1]
      %v1392 = vld [vmem:[%s1046 + $0x1b8] sm:$0x1]
      %v1393 = vld [vmem:[%s1046 + $0x1c2] sm:$0x1]
      %v1394 = vld [vmem:[%s1046 + $0x1cc] sm:$0x1]
      %v1395 = vld [vmem:[%s1046 + $0x1d6] sm:$0x1]
      %v1396 = vld [vmem:[%s1046 + $0x1e0] sm:$0x1]
      %v1397 = vld [vmem:[%s1046 + $0x1ea] sm:$0x1]
      %v1398 = vld [vmem:[%s1046 + $0x1f4] sm:$0x1]
      %v1399 = vld [vmem:[%s1046 + $0x1fe] sm:$0x1]
      %v1400 = vld [vmem:[%s1046 + $0x208] sm:$0x1]
      %v1401 = vld [vmem:[%s1046 + $0x212] sm:$0x1]
      %v1402 = vld [vmem:[%s1046 + $0x21c] sm:$0x1]
      %v1403 = vld [vmem:[%s1046 + $0x226] sm:$0x1]
      %v1404 = vld [vmem:[%s1046 + $0x230] sm:$0x1]
      %v1405 = vld [vmem:[%s1046 + $0x23a] sm:$0x1]
      %v1406 = vld [vmem:[%s1046 + $0x244] sm:$0x1]
      %v1407 = vld [vmem:[%s1046 + $0x24e] sm:$0x1]
      %v1408 = vld [vmem:[%s1046 + $0x258] sm:$0x1]
      %v1409 = vld [vmem:[%s1046 + $0x262] sm:$0x1]
      %v1410 = vld [vmem:[%s1046 + $0x26c] sm:$0x1]
      %v1411 = vld [vmem:[%s1046 + $0x276] sm:$0x1]
      %v1412 = vld [vmem:[%s1046 + $0x280] sm:$0x1]
      %v1413 = vld [vmem:[%s1046 + $0x28a] sm:$0x1]
      %v1414 = vld [vmem:[%s1046 + $0x294] sm:$0x1]
      %v1415 = vld [vmem:[%s1046 + $0x29e] sm:$0x1]
      %v1416 = vld [vmem:[%s1046 + $0x2a8] sm:$0x1]
      %v1417 = vld [vmem:[%s1046 + $0x2b2] sm:$0x1]
      %v1418 = vld [vmem:[%s1046 + $0x2bc] sm:$0x1]
      %v1419 = vld [vmem:[%s1046 + $0x2c6] sm:$0x1]
      %v1420 = vld [vmem:[%s1046 + $0x2d0] sm:$0x1]
      %v1421 = vld [vmem:[%s1046 + $0x2da] sm:$0x1]
      %v1422 = vld [vmem:[%s1046 + $0x2e4] sm:$0x1]
      %v1423 = vld [vmem:[%s1046 + $0x2ee] sm:$0x1]
      %v1424 = vld [vmem:[%s1046 + $0x2f8] sm:$0x1]
      %v1425 = vld [vmem:[%s1046 + $0x302] sm:$0x1]
      %v1426 = vld [vmem:[%s1046 + $0x30c] sm:$0x1]
      %v1427 = vld [vmem:[%s1046 + $0x316] sm:$0x1]
      %v1428 = vld [vmem:[%s1046 + $0x320] sm:$0x1]
      %v1429 = vld [vmem:[%s1046 + $0x32a] sm:$0x1]
      %v1430 = vld [vmem:[%s1046 + $0x334] sm:$0x1]
      %v1431 = vld [vmem:[%s1046 + $0x33e] sm:$0x1]
      %v1432 = vld [vmem:[%s1046 + $0x348] sm:$0x1]
      %v1433 = vld [vmem:[%s1046 + $0x352] sm:$0x1]
      %v1434 = vld [vmem:[%s1046 + $0x35c] sm:$0x1]
      %v1435 = vld [vmem:[%s1046 + $0x366] sm:$0x1]
      %v1436 = vld [vmem:[%s1046 + $0x370] sm:$0x1]
      %v1437 = vld [vmem:[%s1046 + $0x37a] sm:$0x1]
      %v1438 = vld [vmem:[%s1046 + $0x384] sm:$0x1]
      %v1439 = vld [vmem:[%s1046 + $0x38e] sm:$0x1]
      %v1440 = vld [vmem:[%s1046 + $0x398] sm:$0x1]
      %v1441 = vld [vmem:[%s1046 + $0x3a2] sm:$0x1]
      %v1442 = vld [vmem:[%s1046 + $0x3ac] sm:$0x1]
      %v1443 = vld [vmem:[%s1046 + $0x3b6] sm:$0x1]
      %v1444 = vld [vmem:[%s1046 + $0x3c0] sm:$0x1]
      %v1445 = vld [vmem:[%s1046 + $0x3ca] sm:$0x1]
      %v1446 = vld [vmem:[%s1046 + $0x3d4] sm:$0x1]
      %v1447 = vld [vmem:[%s1046 + $0x3de] sm:$0x1]
      %s1448 = scalar_lea.vmem %s135, 5
      %v1449 = vld [vmem:[%s1448] sm:$0x1]
      %v1450 = vld [vmem:[%s1448 + $0xa] sm:$0x1]
      %v1451 = vld [vmem:[%s1448 + $0x14] sm:$0x1]
      %v1452 = vld [vmem:[%s1448 + $0x1e] sm:$0x1]
      %v1453 = vld [vmem:[%s1448 + $0x28] sm:$0x1]
      %v1454 = vld [vmem:[%s1448 + $0x32] sm:$0x1]
      %v1455 = vld [vmem:[%s1448 + $0x3c] sm:$0x1]
      %v1456 = vld [vmem:[%s1448 + $0x46] sm:$0x1]
      %v1457 = vld [vmem:[%s1448 + $0x50] sm:$0x1]
      %v1458 = vld [vmem:[%s1448 + $0x5a] sm:$0x1]
      %v1459 = vld [vmem:[%s1448 + $0x64] sm:$0x1]
      %v1460 = vld [vmem:[%s1448 + $0x6e] sm:$0x1]
      %v1461 = vld [vmem:[%s1448 + $0x78] sm:$0x1]
      %v1462 = vld [vmem:[%s1448 + $0x82] sm:$0x1]
      %v1463 = vld [vmem:[%s1448 + $0x8c] sm:$0x1]
      %v1464 = vld [vmem:[%s1448 + $0x96] sm:$0x1]
      %v1465 = vld [vmem:[%s1448 + $0xa0] sm:$0x1]
      %v1466 = vld [vmem:[%s1448 + $0xaa] sm:$0x1]
      %v1467 = vld [vmem:[%s1448 + $0xb4] sm:$0x1]
      %v1468 = vld [vmem:[%s1448 + $0xbe] sm:$0x1]
      %v1469 = vld [vmem:[%s1448 + $0xc8] sm:$0x1]
      %v1470 = vld [vmem:[%s1448 + $0xd2] sm:$0x1]
      %v1471 = vld [vmem:[%s1448 + $0xdc] sm:$0x1]
      %v1472 = vld [vmem:[%s1448 + $0xe6] sm:$0x1]
      %v1473 = vld [vmem:[%s1448 + $0xf0] sm:$0x1]
      %v1474 = vld [vmem:[%s1448 + $0xfa] sm:$0x1]
      %v1475 = vld [vmem:[%s1448 + $0x104] sm:$0x1]
      %v1476 = vld [vmem:[%s1448 + $0x10e] sm:$0x1]
      %v1477 = vld [vmem:[%s1448 + $0x118] sm:$0x1]
      %v1478 = vld [vmem:[%s1448 + $0x122] sm:$0x1]
      %v1479 = vld [vmem:[%s1448 + $0x12c] sm:$0x1]
      %v1480 = vld [vmem:[%s1448 + $0x136] sm:$0x1]
      %v1481 = vld [vmem:[%s1448 + $0x140] sm:$0x1]
      %v1482 = vld [vmem:[%s1448 + $0x14a] sm:$0x1]
      %v1483 = vld [vmem:[%s1448 + $0x154] sm:$0x1]
      %v1484 = vld [vmem:[%s1448 + $0x15e] sm:$0x1]
      %v1485 = vld [vmem:[%s1448 + $0x168] sm:$0x1]
      %v1486 = vld [vmem:[%s1448 + $0x172] sm:$0x1]
      %v1487 = vld [vmem:[%s1448 + $0x17c] sm:$0x1]
      %v1488 = vld [vmem:[%s1448 + $0x186] sm:$0x1]
      %v1489 = vld [vmem:[%s1448 + $0x190] sm:$0x1]
      %v1490 = vld [vmem:[%s1448 + $0x19a] sm:$0x1]
      %v1491 = vld [vmem:[%s1448 + $0x1a4] sm:$0x1]
      %v1492 = vld [vmem:[%s1448 + $0x1ae] sm:$0x1]
      %v1493 = vld [vmem:[%s1448 + $0x1b8] sm:$0x1]
      %v1494 = vld [vmem:[%s1448 + $0x1c2] sm:$0x1]
      %v1495 = vld [vmem:[%s1448 + $0x1cc] sm:$0x1]
      %v1496 = vld [vmem:[%s1448 + $0x1d6] sm:$0x1]
      %v1497 = vld [vmem:[%s1448 + $0x1e0] sm:$0x1]
      %v1498 = vld [vmem:[%s1448 + $0x1ea] sm:$0x1]
      %v1499 = vld [vmem:[%s1448 + $0x1f4] sm:$0x1]
      %v1500 = vld [vmem:[%s1448 + $0x1fe] sm:$0x1]
      %v1501 = vld [vmem:[%s1448 + $0x208] sm:$0x1]
      %v1502 = vld [vmem:[%s1448 + $0x212] sm:$0x1]
      %v1503 = vld [vmem:[%s1448 + $0x21c] sm:$0x1]
      %v1504 = vld [vmem:[%s1448 + $0x226] sm:$0x1]
      %v1505 = vld [vmem:[%s1448 + $0x230] sm:$0x1]
      %v1506 = vld [vmem:[%s1448 + $0x23a] sm:$0x1]
      %v1507 = vld [vmem:[%s1448 + $0x244] sm:$0x1]
      %v1508 = vld [vmem:[%s1448 + $0x24e] sm:$0x1]
      %v1509 = vld [vmem:[%s1448 + $0x258] sm:$0x1]
      %v1510 = vld [vmem:[%s1448 + $0x262] sm:$0x1]
      %v1511 = vld [vmem:[%s1448 + $0x26c] sm:$0x1]
      %v1512 = vld [vmem:[%s1448 + $0x276] sm:$0x1]
      %v1513 = vld [vmem:[%s1448 + $0x280] sm:$0x1]
      %v1514 = vld [vmem:[%s1448 + $0x28a] sm:$0x1]
      %v1515 = vld [vmem:[%s1448 + $0x294] sm:$0x1]
      %v1516 = vld [vmem:[%s1448 + $0x29e] sm:$0x1]
      %v1517 = vld [vmem:[%s1448 + $0x2a8] sm:$0x1]
      %v1518 = vld [vmem:[%s1448 + $0x2b2] sm:$0x1]
      %v1519 = vld [vmem:[%s1448 + $0x2bc] sm:$0x1]
      %v1520 = vld [vmem:[%s1448 + $0x2c6] sm:$0x1]
      %v1521 = vld [vmem:[%s1448 + $0x2d0] sm:$0x1]
      %v1522 = vld [vmem:[%s1448 + $0x2da] sm:$0x1]
      %v1523 = vld [vmem:[%s1448 + $0x2e4] sm:$0x1]
      %v1524 = vld [vmem:[%s1448 + $0x2ee] sm:$0x1]
      %v1525 = vld [vmem:[%s1448 + $0x2f8] sm:$0x1]
      %v1526 = vld [vmem:[%s1448 + $0x302] sm:$0x1]
      %v1527 = vld [vmem:[%s1448 + $0x30c] sm:$0x1]
      %v1528 = vld [vmem:[%s1448 + $0x316] sm:$0x1]
      %v1529 = vld [vmem:[%s1448 + $0x320] sm:$0x1]
      %v1530 = vld [vmem:[%s1448 + $0x32a] sm:$0x1]
      %v1531 = vld [vmem:[%s1448 + $0x334] sm:$0x1]
      %v1532 = vld [vmem:[%s1448 + $0x33e] sm:$0x1]
      %v1533 = vld [vmem:[%s1448 + $0x348] sm:$0x1]
      %v1534 = vld [vmem:[%s1448 + $0x352] sm:$0x1]
      %v1535 = vld [vmem:[%s1448 + $0x35c] sm:$0x1]
      %v1536 = vld [vmem:[%s1448 + $0x366] sm:$0x1]
      %v1537 = vld [vmem:[%s1448 + $0x370] sm:$0x1]
      %v1538 = vld [vmem:[%s1448 + $0x37a] sm:$0x1]
      %v1539 = vld [vmem:[%s1448 + $0x384] sm:$0x1]
      %v1540 = vld [vmem:[%s1448 + $0x38e] sm:$0x1]
      %v1541 = vld [vmem:[%s1448 + $0x398] sm:$0x1]
      %v1542 = vld [vmem:[%s1448 + $0x3a2] sm:$0x1]
      %v1543 = vld [vmem:[%s1448 + $0x3ac] sm:$0x1]
      %v1544 = vld [vmem:[%s1448 + $0x3b6] sm:$0x1]
      %v1545 = vld [vmem:[%s1448 + $0x3c0] sm:$0x1]
      %v1546 = vld [vmem:[%s1448 + $0x3ca] sm:$0x1]
      %v1547 = vld [vmem:[%s1448 + $0x3d4] sm:$0x1]
      %v1548 = vld [vmem:[%s1448 + $0x3de] sm:$0x1]
      %v1549 = vmax.f32 %v1348, %v1449
      %v1550 = vmax.f32 %v1349, %v1450
      %v1551 = vmax.f32 %v1350, %v1451
      %v1552 = vmax.f32 %v1351, %v1452
      %v1553 = vmax.f32 %v1352, %v1453
      %v1554 = vmax.f32 %v1353, %v1454
      %v1555 = vmax.f32 %v1354, %v1455
      %v1556 = vmax.f32 %v1355, %v1456
      %v1557 = vmax.f32 %v1356, %v1457
      %v1558 = vmax.f32 %v1357, %v1458
      %v1559 = vmax.f32 %v1358, %v1459
      %v1560 = vmax.f32 %v1359, %v1460
      %v1561 = vmax.f32 %v1360, %v1461
      %v1562 = vmax.f32 %v1361, %v1462
      %v1563 = vmax.f32 %v1362, %v1463
      %v1564 = vmax.f32 %v1363, %v1464
      %v1565 = vmax.f32 %v1364, %v1465
      %v1566 = vmax.f32 %v1365, %v1466
      %v1567 = vmax.f32 %v1366, %v1467
      %v1568 = vmax.f32 %v1367, %v1468
      %v1569 = vmax.f32 %v1368, %v1469
      %v1570 = vmax.f32 %v1369, %v1470
      %v1571 = vmax.f32 %v1370, %v1471
      %v1572 = vmax.f32 %v1371, %v1472
      %v1573 = vmax.f32 %v1372, %v1473
      %v1574 = vmax.f32 %v1373, %v1474
      %v1575 = vmax.f32 %v1374, %v1475
      %v1576 = vmax.f32 %v1375, %v1476
      %v1577 = vmax.f32 %v1376, %v1477
      %v1578 = vmax.f32 %v1377, %v1478
      %v1579 = vmax.f32 %v1378, %v1479
      %v1580 = vmax.f32 %v1379, %v1480
      %v1581 = vmax.f32 %v1380, %v1481
      %v1582 = vmax.f32 %v1381, %v1482
      %v1583 = vmax.f32 %v1382, %v1483
      %v1584 = vmax.f32 %v1383, %v1484
      %v1585 = vmax.f32 %v1384, %v1485
      %v1586 = vmax.f32 %v1385, %v1486
      %v1587 = vmax.f32 %v1386, %v1487
      %v1588 = vmax.f32 %v1387, %v1488
      %v1589 = vmax.f32 %v1388, %v1489
      %v1590 = vmax.f32 %v1389, %v1490
      %v1591 = vmax.f32 %v1390, %v1491
      %v1592 = vmax.f32 %v1391, %v1492
      %v1593 = vmax.f32 %v1392, %v1493
      %v1594 = vmax.f32 %v1393, %v1494
      %v1595 = vmax.f32 %v1394, %v1495
      %v1596 = vmax.f32 %v1395, %v1496
      %v1597 = vmax.f32 %v1396, %v1497
      %v1598 = vmax.f32 %v1397, %v1498
      %v1599 = vmax.f32 %v1398, %v1499
      %v1600 = vmax.f32 %v1399, %v1500
      %v1601 = vmax.f32 %v1400, %v1501
      %v1602 = vmax.f32 %v1401, %v1502
      %v1603 = vmax.f32 %v1402, %v1503
      %v1604 = vmax.f32 %v1403, %v1504
      %v1605 = vmax.f32 %v1404, %v1505
      %v1606 = vmax.f32 %v1405, %v1506
      %v1607 = vmax.f32 %v1406, %v1507
      %v1608 = vmax.f32 %v1407, %v1508
      %v1609 = vmax.f32 %v1408, %v1509
      %v1610 = vmax.f32 %v1409, %v1510
      %v1611 = vmax.f32 %v1410, %v1511
      %v1612 = vmax.f32 %v1411, %v1512
      %v1613 = vmax.f32 %v1412, %v1513
      %v1614 = vmax.f32 %v1413, %v1514
      %v1615 = vmax.f32 %v1414, %v1515
      %v1616 = vmax.f32 %v1415, %v1516
      %v1617 = vmax.f32 %v1416, %v1517
      %v1618 = vmax.f32 %v1417, %v1518
      %v1619 = vmax.f32 %v1418, %v1519
      %v1620 = vmax.f32 %v1419, %v1520
      %v1621 = vmax.f32 %v1420, %v1521
      %v1622 = vmax.f32 %v1421, %v1522
      %v1623 = vmax.f32 %v1422, %v1523
      %v1624 = vmax.f32 %v1423, %v1524
      %v1625 = vmax.f32 %v1424, %v1525
      %v1626 = vmax.f32 %v1425, %v1526
      %v1627 = vmax.f32 %v1426, %v1527
      %v1628 = vmax.f32 %v1427, %v1528
      %v1629 = vmax.f32 %v1428, %v1529
      %v1630 = vmax.f32 %v1429, %v1530
      %v1631 = vmax.f32 %v1430, %v1531
      %v1632 = vmax.f32 %v1431, %v1532
      %v1633 = vmax.f32 %v1432, %v1533
      %v1634 = vmax.f32 %v1433, %v1534
      %v1635 = vmax.f32 %v1434, %v1535
      %v1636 = vmax.f32 %v1435, %v1536
      %v1637 = vmax.f32 %v1436, %v1537
      %v1638 = vmax.f32 %v1437, %v1538
      %v1639 = vmax.f32 %v1438, %v1539
      %v1640 = vmax.f32 %v1439, %v1540
      %v1641 = vmax.f32 %v1440, %v1541
      %v1642 = vmax.f32 %v1441, %v1542
      %v1643 = vmax.f32 %v1442, %v1543
      %v1644 = vmax.f32 %v1443, %v1544
      %v1645 = vmax.f32 %v1444, %v1545
      %v1646 = vmax.f32 %v1445, %v1546
      %v1647 = vmax.f32 %v1446, %v1547
      %v1648 = vmax.f32 %v1447, %v1548
      %s1649 = scalar_lea.vmem %s135, 6
      %v1650 = vld [vmem:[%s1649] sm:$0x1]
      %v1651 = vld [vmem:[%s1649 + $0xa] sm:$0x1]
      %v1652 = vld [vmem:[%s1649 + $0x14] sm:$0x1]
      %v1653 = vld [vmem:[%s1649 + $0x1e] sm:$0x1]
      %v1654 = vld [vmem:[%s1649 + $0x28] sm:$0x1]
      %v1655 = vld [vmem:[%s1649 + $0x32] sm:$0x1]
      %v1656 = vld [vmem:[%s1649 + $0x3c] sm:$0x1]
      %v1657 = vld [vmem:[%s1649 + $0x46] sm:$0x1]
      %v1658 = vld [vmem:[%s1649 + $0x50] sm:$0x1]
      %v1659 = vld [vmem:[%s1649 + $0x5a] sm:$0x1]
      %v1660 = vld [vmem:[%s1649 + $0x64] sm:$0x1]
      %v1661 = vld [vmem:[%s1649 + $0x6e] sm:$0x1]
      %v1662 = vld [vmem:[%s1649 + $0x78] sm:$0x1]
      %v1663 = vld [vmem:[%s1649 + $0x82] sm:$0x1]
      %v1664 = vld [vmem:[%s1649 + $0x8c] sm:$0x1]
      %v1665 = vld [vmem:[%s1649 + $0x96] sm:$0x1]
      %v1666 = vld [vmem:[%s1649 + $0xa0] sm:$0x1]
      %v1667 = vld [vmem:[%s1649 + $0xaa] sm:$0x1]
      %v1668 = vld [vmem:[%s1649 + $0xb4] sm:$0x1]
      %v1669 = vld [vmem:[%s1649 + $0xbe] sm:$0x1]
      %v1670 = vld [vmem:[%s1649 + $0xc8] sm:$0x1]
      %v1671 = vld [vmem:[%s1649 + $0xd2] sm:$0x1]
      %v1672 = vld [vmem:[%s1649 + $0xdc] sm:$0x1]
      %v1673 = vld [vmem:[%s1649 + $0xe6] sm:$0x1]
      %v1674 = vld [vmem:[%s1649 + $0xf0] sm:$0x1]
      %v1675 = vld [vmem:[%s1649 + $0xfa] sm:$0x1]
      %v1676 = vld [vmem:[%s1649 + $0x104] sm:$0x1]
      %v1677 = vld [vmem:[%s1649 + $0x10e] sm:$0x1]
      %v1678 = vld [vmem:[%s1649 + $0x118] sm:$0x1]
      %v1679 = vld [vmem:[%s1649 + $0x122] sm:$0x1]
      %v1680 = vld [vmem:[%s1649 + $0x12c] sm:$0x1]
      %v1681 = vld [vmem:[%s1649 + $0x136] sm:$0x1]
      %v1682 = vld [vmem:[%s1649 + $0x140] sm:$0x1]
      %v1683 = vld [vmem:[%s1649 + $0x14a] sm:$0x1]
      %v1684 = vld [vmem:[%s1649 + $0x154] sm:$0x1]
      %v1685 = vld [vmem:[%s1649 + $0x15e] sm:$0x1]
      %v1686 = vld [vmem:[%s1649 + $0x168] sm:$0x1]
      %v1687 = vld [vmem:[%s1649 + $0x172] sm:$0x1]
      %v1688 = vld [vmem:[%s1649 + $0x17c] sm:$0x1]
      %v1689 = vld [vmem:[%s1649 + $0x186] sm:$0x1]
      %v1690 = vld [vmem:[%s1649 + $0x190] sm:$0x1]
      %v1691 = vld [vmem:[%s1649 + $0x19a] sm:$0x1]
      %v1692 = vld [vmem:[%s1649 + $0x1a4] sm:$0x1]
      %v1693 = vld [vmem:[%s1649 + $0x1ae] sm:$0x1]
      %v1694 = vld [vmem:[%s1649 + $0x1b8] sm:$0x1]
      %v1695 = vld [vmem:[%s1649 + $0x1c2] sm:$0x1]
      %v1696 = vld [vmem:[%s1649 + $0x1cc] sm:$0x1]
      %v1697 = vld [vmem:[%s1649 + $0x1d6] sm:$0x1]
      %v1698 = vld [vmem:[%s1649 + $0x1e0] sm:$0x1]
      %v1699 = vld [vmem:[%s1649 + $0x1ea] sm:$0x1]
      %v1700 = vld [vmem:[%s1649 + $0x1f4] sm:$0x1]
      %v1701 = vld [vmem:[%s1649 + $0x1fe] sm:$0x1]
      %v1702 = vld [vmem:[%s1649 + $0x208] sm:$0x1]
      %v1703 = vld [vmem:[%s1649 + $0x212] sm:$0x1]
      %v1704 = vld [vmem:[%s1649 + $0x21c] sm:$0x1]
      %v1705 = vld [vmem:[%s1649 + $0x226] sm:$0x1]
      %v1706 = vld [vmem:[%s1649 + $0x230] sm:$0x1]
      %v1707 = vld [vmem:[%s1649 + $0x23a] sm:$0x1]
      %v1708 = vld [vmem:[%s1649 + $0x244] sm:$0x1]
      %v1709 = vld [vmem:[%s1649 + $0x24e] sm:$0x1]
      %v1710 = vld [vmem:[%s1649 + $0x258] sm:$0x1]
      %v1711 = vld [vmem:[%s1649 + $0x262] sm:$0x1]
      %v1712 = vld [vmem:[%s1649 + $0x26c] sm:$0x1]
      %v1713 = vld [vmem:[%s1649 + $0x276] sm:$0x1]
      %v1714 = vld [vmem:[%s1649 + $0x280] sm:$0x1]
      %v1715 = vld [vmem:[%s1649 + $0x28a] sm:$0x1]
      %v1716 = vld [vmem:[%s1649 + $0x294] sm:$0x1]
      %v1717 = vld [vmem:[%s1649 + $0x29e] sm:$0x1]
      %v1718 = vld [vmem:[%s1649 + $0x2a8] sm:$0x1]
      %v1719 = vld [vmem:[%s1649 + $0x2b2] sm:$0x1]
      %v1720 = vld [vmem:[%s1649 + $0x2bc] sm:$0x1]
      %v1721 = vld [vmem:[%s1649 + $0x2c6] sm:$0x1]
      %v1722 = vld [vmem:[%s1649 + $0x2d0] sm:$0x1]
      %v1723 = vld [vmem:[%s1649 + $0x2da] sm:$0x1]
      %v1724 = vld [vmem:[%s1649 + $0x2e4] sm:$0x1]
      %v1725 = vld [vmem:[%s1649 + $0x2ee] sm:$0x1]
      %v1726 = vld [vmem:[%s1649 + $0x2f8] sm:$0x1]
      %v1727 = vld [vmem:[%s1649 + $0x302] sm:$0x1]
      %v1728 = vld [vmem:[%s1649 + $0x30c] sm:$0x1]
      %v1729 = vld [vmem:[%s1649 + $0x316] sm:$0x1]
      %v1730 = vld [vmem:[%s1649 + $0x320] sm:$0x1]
      %v1731 = vld [vmem:[%s1649 + $0x32a] sm:$0x1]
      %v1732 = vld [vmem:[%s1649 + $0x334] sm:$0x1]
      %v1733 = vld [vmem:[%s1649 + $0x33e] sm:$0x1]
      %v1734 = vld [vmem:[%s1649 + $0x348] sm:$0x1]
      %v1735 = vld [vmem:[%s1649 + $0x352] sm:$0x1]
      %v1736 = vld [vmem:[%s1649 + $0x35c] sm:$0x1]
      %v1737 = vld [vmem:[%s1649 + $0x366] sm:$0x1]
      %v1738 = vld [vmem:[%s1649 + $0x370] sm:$0x1]
      %v1739 = vld [vmem:[%s1649 + $0x37a] sm:$0x1]
      %v1740 = vld [vmem:[%s1649 + $0x384] sm:$0x1]
      %v1741 = vld [vmem:[%s1649 + $0x38e] sm:$0x1]
      %v1742 = vld [vmem:[%s1649 + $0x398] sm:$0x1]
      %v1743 = vld [vmem:[%s1649 + $0x3a2] sm:$0x1]
      %v1744 = vld [vmem:[%s1649 + $0x3ac] sm:$0x1]
      %v1745 = vld [vmem:[%s1649 + $0x3b6] sm:$0x1]
      %v1746 = vld [vmem:[%s1649 + $0x3c0] sm:$0x1]
      %v1747 = vld [vmem:[%s1649 + $0x3ca] sm:$0x1]
      %v1748 = vld [vmem:[%s1649 + $0x3d4] sm:$0x1]
      %v1749 = vld [vmem:[%s1649 + $0x3de] sm:$0x1]
      %v1750 = vmax.f32 %v1549, %v1650
      %v1751 = vmax.f32 %v1550, %v1651
      %v1752 = vmax.f32 %v1551, %v1652
      %v1753 = vmax.f32 %v1552, %v1653
      %v1754 = vmax.f32 %v1553, %v1654
      %v1755 = vmax.f32 %v1554, %v1655
      %v1756 = vmax.f32 %v1555, %v1656
      %v1757 = vmax.f32 %v1556, %v1657
      %v1758 = vmax.f32 %v1557, %v1658
      %v1759 = vmax.f32 %v1558, %v1659
      %v1760 = vmax.f32 %v1559, %v1660
      %v1761 = vmax.f32 %v1560, %v1661
      %v1762 = vmax.f32 %v1561, %v1662
      %v1763 = vmax.f32 %v1562, %v1663
      %v1764 = vmax.f32 %v1563, %v1664
      %v1765 = vmax.f32 %v1564, %v1665
      %v1766 = vmax.f32 %v1565, %v1666
      %v1767 = vmax.f32 %v1566, %v1667
      %v1768 = vmax.f32 %v1567, %v1668
      %v1769 = vmax.f32 %v1568, %v1669
      %v1770 = vmax.f32 %v1569, %v1670
      %v1771 = vmax.f32 %v1570, %v1671
      %v1772 = vmax.f32 %v1571, %v1672
      %v1773 = vmax.f32 %v1572, %v1673
      %v1774 = vmax.f32 %v1573, %v1674
      %v1775 = vmax.f32 %v1574, %v1675
      %v1776 = vmax.f32 %v1575, %v1676
      %v1777 = vmax.f32 %v1576, %v1677
      %v1778 = vmax.f32 %v1577, %v1678
      %v1779 = vmax.f32 %v1578, %v1679
      %v1780 = vmax.f32 %v1579, %v1680
      %v1781 = vmax.f32 %v1580, %v1681
      %v1782 = vmax.f32 %v1581, %v1682
      %v1783 = vmax.f32 %v1582, %v1683
      %v1784 = vmax.f32 %v1583, %v1684
      %v1785 = vmax.f32 %v1584, %v1685
      %v1786 = vmax.f32 %v1585, %v1686
      %v1787 = vmax.f32 %v1586, %v1687
      %v1788 = vmax.f32 %v1587, %v1688
      %v1789 = vmax.f32 %v1588, %v1689
      %v1790 = vmax.f32 %v1589, %v1690
      %v1791 = vmax.f32 %v1590, %v1691
      %v1792 = vmax.f32 %v1591, %v1692
      %v1793 = vmax.f32 %v1592, %v1693
      %v1794 = vmax.f32 %v1593, %v1694
      %v1795 = vmax.f32 %v1594, %v1695
      %v1796 = vmax.f32 %v1595, %v1696
      %v1797 = vmax.f32 %v1596, %v1697
      %v1798 = vmax.f32 %v1597, %v1698
      %v1799 = vmax.f32 %v1598, %v1699
      %v1800 = vmax.f32 %v1599, %v1700
      %v1801 = vmax.f32 %v1600, %v1701
      %v1802 = vmax.f32 %v1601, %v1702
      %v1803 = vmax.f32 %v1602, %v1703
      %v1804 = vmax.f32 %v1603, %v1704
      %v1805 = vmax.f32 %v1604, %v1705
      %v1806 = vmax.f32 %v1605, %v1706
      %v1807 = vmax.f32 %v1606, %v1707
      %v1808 = vmax.f32 %v1607, %v1708
      %v1809 = vmax.f32 %v1608, %v1709
      %v1810 = vmax.f32 %v1609, %v1710
      %v1811 = vmax.f32 %v1610, %v1711
      %v1812 = vmax.f32 %v1611, %v1712
      %v1813 = vmax.f32 %v1612, %v1713
      %v1814 = vmax.f32 %v1613, %v1714
      %v1815 = vmax.f32 %v1614, %v1715
      %v1816 = vmax.f32 %v1615, %v1716
      %v1817 = vmax.f32 %v1616, %v1717
      %v1818 = vmax.f32 %v1617, %v1718
      %v1819 = vmax.f32 %v1618, %v1719
      %v1820 = vmax.f32 %v1619, %v1720
      %v1821 = vmax.f32 %v1620, %v1721
      %v1822 = vmax.f32 %v1621, %v1722
      %v1823 = vmax.f32 %v1622, %v1723
      %v1824 = vmax.f32 %v1623, %v1724
      %v1825 = vmax.f32 %v1624, %v1725
      %v1826 = vmax.f32 %v1625, %v1726
      %v1827 = vmax.f32 %v1626, %v1727
      %v1828 = vmax.f32 %v1627, %v1728
      %v1829 = vmax.f32 %v1628, %v1729
      %v1830 = vmax.f32 %v1629, %v1730
      %v1831 = vmax.f32 %v1630, %v1731
      %v1832 = vmax.f32 %v1631, %v1732
      %v1833 = vmax.f32 %v1632, %v1733
      %v1834 = vmax.f32 %v1633, %v1734
      %v1835 = vmax.f32 %v1634, %v1735
      %v1836 = vmax.f32 %v1635, %v1736
      %v1837 = vmax.f32 %v1636, %v1737
      %v1838 = vmax.f32 %v1637, %v1738
      %v1839 = vmax.f32 %v1638, %v1739
      %v1840 = vmax.f32 %v1639, %v1740
      %v1841 = vmax.f32 %v1640, %v1741
      %v1842 = vmax.f32 %v1641, %v1742
      %v1843 = vmax.f32 %v1642, %v1743
      %v1844 = vmax.f32 %v1643, %v1744
      %v1845 = vmax.f32 %v1644, %v1745
      %v1846 = vmax.f32 %v1645, %v1746
      %v1847 = vmax.f32 %v1646, %v1747
      %v1848 = vmax.f32 %v1647, %v1748
      %v1849 = vmax.f32 %v1648, %v1749
      %s1850 = scalar_lea.vmem [#allocation2], 2
      %1851 = vst [vmem:[%s1850] sm:$0x1] %v1750
      %1852 = vst [vmem:[%s1850 + $0x4] sm:$0x1] %v1751
      %1853 = vst [vmem:[%s1850 + $0x8] sm:$0x1] %v1752
      %1854 = vst [vmem:[%s1850 + $0xc] sm:$0x1] %v1753
      %1855 = vst [vmem:[%s1850 + $0x10] sm:$0x1] %v1754
      %1856 = vst [vmem:[%s1850 + $0x14] sm:$0x1] %v1755
      %1857 = vst [vmem:[%s1850 + $0x18] sm:$0x1] %v1756
      %1858 = vst [vmem:[%s1850 + $0x1c] sm:$0x1] %v1757
      %1859 = vst [vmem:[%s1850 + $0x20] sm:$0x1] %v1758
      %1860 = vst [vmem:[%s1850 + $0x24] sm:$0x1] %v1759
      %1861 = vst [vmem:[%s1850 + $0x28] sm:$0x1] %v1760
      %1862 = vst [vmem:[%s1850 + $0x2c] sm:$0x1] %v1761
      %1863 = vst [vmem:[%s1850 + $0x30] sm:$0x1] %v1762
      %1864 = vst [vmem:[%s1850 + $0x34] sm:$0x1] %v1763
      %1865 = vst [vmem:[%s1850 + $0x38] sm:$0x1] %v1764
      %1866 = vst [vmem:[%s1850 + $0x3c] sm:$0x1] %v1765
      %1867 = vst [vmem:[%s1850 + $0x40] sm:$0x1] %v1766
      %1868 = vst [vmem:[%s1850 + $0x44] sm:$0x1] %v1767
      %1869 = vst [vmem:[%s1850 + $0x48] sm:$0x1] %v1768
      %1870 = vst [vmem:[%s1850 + $0x4c] sm:$0x1] %v1769
      %1871 = vst [vmem:[%s1850 + $0x50] sm:$0x1] %v1770
      %1872 = vst [vmem:[%s1850 + $0x54] sm:$0x1] %v1771
      %1873 = vst [vmem:[%s1850 + $0x58] sm:$0x1] %v1772
      %1874 = vst [vmem:[%s1850 + $0x5c] sm:$0x1] %v1773
      %1875 = vst [vmem:[%s1850 + $0x60] sm:$0x1] %v1774
      %1876 = vst [vmem:[%s1850 + $0x64] sm:$0x1] %v1775
      %1877 = vst [vmem:[%s1850 + $0x68] sm:$0x1] %v1776
      %1878 = vst [vmem:[%s1850 + $0x6c] sm:$0x1] %v1777
      %1879 = vst [vmem:[%s1850 + $0x70] sm:$0x1] %v1778
      %1880 = vst [vmem:[%s1850 + $0x74] sm:$0x1] %v1779
      %1881 = vst [vmem:[%s1850 + $0x78] sm:$0x1] %v1780
      %1882 = vst [vmem:[%s1850 + $0x7c] sm:$0x1] %v1781
      %1883 = vst [vmem:[%s1850 + $0x80] sm:$0x1] %v1782
      %1884 = vst [vmem:[%s1850 + $0x84] sm:$0x1] %v1783
      %1885 = vst [vmem:[%s1850 + $0x88] sm:$0x1] %v1784
      %1886 = vst [vmem:[%s1850 + $0x8c] sm:$0x1] %v1785
      %1887 = vst [vmem:[%s1850 + $0x90] sm:$0x1] %v1786
      %1888 = vst [vmem:[%s1850 + $0x94] sm:$0x1] %v1787
      %1889 = vst [vmem:[%s1850 + $0x98] sm:$0x1] %v1788
      %1890 = vst [vmem:[%s1850 + $0x9c] sm:$0x1] %v1789
      %1891 = vst [vmem:[%s1850 + $0xa0] sm:$0x1] %v1790
      %1892 = vst [vmem:[%s1850 + $0xa4] sm:$0x1] %v1791
      %1893 = vst [vmem:[%s1850 + $0xa8] sm:$0x1] %v1792
      %1894 = vst [vmem:[%s1850 + $0xac] sm:$0x1] %v1793
      %1895 = vst [vmem:[%s1850 + $0xb0] sm:$0x1] %v1794
      %1896 = vst [vmem:[%s1850 + $0xb4] sm:$0x1] %v1795
      %1897 = vst [vmem:[%s1850 + $0xb8] sm:$0x1] %v1796
      %1898 = vst [vmem:[%s1850 + $0xbc] sm:$0x1] %v1797
      %1899 = vst [vmem:[%s1850 + $0xc0] sm:$0x1] %v1798
      %1900 = vst [vmem:[%s1850 + $0xc4] sm:$0x1] %v1799
      %1901 = vst [vmem:[%s1850 + $0xc8] sm:$0x1] %v1800
      %1902 = vst [vmem:[%s1850 + $0xcc] sm:$0x1] %v1801
      %1903 = vst [vmem:[%s1850 + $0xd0] sm:$0x1] %v1802
      %1904 = vst [vmem:[%s1850 + $0xd4] sm:$0x1] %v1803
      %1905 = vst [vmem:[%s1850 + $0xd8] sm:$0x1] %v1804
      %1906 = vst [vmem:[%s1850 + $0xdc] sm:$0x1] %v1805
      %1907 = vst [vmem:[%s1850 + $0xe0] sm:$0x1] %v1806
      %1908 = vst [vmem:[%s1850 + $0xe4] sm:$0x1] %v1807
      %1909 = vst [vmem:[%s1850 + $0xe8] sm:$0x1] %v1808
      %1910 = vst [vmem:[%s1850 + $0xec] sm:$0x1] %v1809
      %1911 = vst [vmem:[%s1850 + $0xf0] sm:$0x1] %v1810
      %1912 = vst [vmem:[%s1850 + $0xf4] sm:$0x1] %v1811
      %1913 = vst [vmem:[%s1850 + $0xf8] sm:$0x1] %v1812
      %1914 = vst [vmem:[%s1850 + $0xfc] sm:$0x1] %v1813
      %1915 = vst [vmem:[%s1850 + $0x100] sm:$0x1] %v1814
      %1916 = vst [vmem:[%s1850 + $0x104] sm:$0x1] %v1815
      %1917 = vst [vmem:[%s1850 + $0x108] sm:$0x1] %v1816
      %1918 = vst [vmem:[%s1850 + $0x10c] sm:$0x1] %v1817
      %1919 = vst [vmem:[%s1850 + $0x110] sm:$0x1] %v1818
      %1920 = vst [vmem:[%s1850 + $0x114] sm:$0x1] %v1819
      %1921 = vst [vmem:[%s1850 + $0x118] sm:$0x1] %v1820
      %1922 = vst [vmem:[%s1850 + $0x11c] sm:$0x1] %v1821
      %1923 = vst [vmem:[%s1850 + $0x120] sm:$0x1] %v1822
      %1924 = vst [vmem:[%s1850 + $0x124] sm:$0x1] %v1823
      %1925 = vst [vmem:[%s1850 + $0x128] sm:$0x1] %v1824
      %1926 = vst [vmem:[%s1850 + $0x12c] sm:$0x1] %v1825
      %1927 = vst [vmem:[%s1850 + $0x130] sm:$0x1] %v1826
      %1928 = vst [vmem:[%s1850 + $0x134] sm:$0x1] %v1827
      %1929 = vst [vmem:[%s1850 + $0x138] sm:$0x1] %v1828
      %1930 = vst [vmem:[%s1850 + $0x13c] sm:$0x1] %v1829
      %1931 = vst [vmem:[%s1850 + $0x140] sm:$0x1] %v1830
      %1932 = vst [vmem:[%s1850 + $0x144] sm:$0x1] %v1831
      %1933 = vst [vmem:[%s1850 + $0x148] sm:$0x1] %v1832
      %1934 = vst [vmem:[%s1850 + $0x14c] sm:$0x1] %v1833
      %1935 = vst [vmem:[%s1850 + $0x150] sm:$0x1] %v1834
      %1936 = vst [vmem:[%s1850 + $0x154] sm:$0x1] %v1835
      %1937 = vst [vmem:[%s1850 + $0x158] sm:$0x1] %v1836
      %1938 = vst [vmem:[%s1850 + $0x15c] sm:$0x1] %v1837
      %1939 = vst [vmem:[%s1850 + $0x160] sm:$0x1] %v1838
      %1940 = vst [vmem:[%s1850 + $0x164] sm:$0x1] %v1839
      %1941 = vst [vmem:[%s1850 + $0x168] sm:$0x1] %v1840
      %1942 = vst [vmem:[%s1850 + $0x16c] sm:$0x1] %v1841
      %1943 = vst [vmem:[%s1850 + $0x170] sm:$0x1] %v1842
      %1944 = vst [vmem:[%s1850 + $0x174] sm:$0x1] %v1843
      %1945 = vst [vmem:[%s1850 + $0x178] sm:$0x1] %v1844
      %1946 = vst [vmem:[%s1850 + $0x17c] sm:$0x1] %v1845
      %1947 = vst [vmem:[%s1850 + $0x180] sm:$0x1] %v1846
      %1948 = vst [vmem:[%s1850 + $0x184] sm:$0x1] %v1847
      %1949 = vst [vmem:[%s1850 + $0x188] sm:$0x1] %v1848
      %1950 = vst [vmem:[%s1850 + $0x18c] sm:$0x1] %v1849
      %v1951 = vld [vmem:[%s1649] sm:$0x1]
      %v1952 = vld [vmem:[%s1649 + $0xa] sm:$0x1]
      %v1953 = vld [vmem:[%s1649 + $0x14] sm:$0x1]
      %v1954 = vld [vmem:[%s1649 + $0x1e] sm:$0x1]
      %v1955 = vld [vmem:[%s1649 + $0x28] sm:$0x1]
      %v1956 = vld [vmem:[%s1649 + $0x32] sm:$0x1]
      %v1957 = vld [vmem:[%s1649 + $0x3c] sm:$0x1]
      %v1958 = vld [vmem:[%s1649 + $0x46] sm:$0x1]
      %v1959 = vld [vmem:[%s1649 + $0x50] sm:$0x1]
      %v1960 = vld [vmem:[%s1649 + $0x5a] sm:$0x1]
      %v1961 = vld [vmem:[%s1649 + $0x64] sm:$0x1]
      %v1962 = vld [vmem:[%s1649 + $0x6e] sm:$0x1]
      %v1963 = vld [vmem:[%s1649 + $0x78] sm:$0x1]
      %v1964 = vld [vmem:[%s1649 + $0x82] sm:$0x1]
      %v1965 = vld [vmem:[%s1649 + $0x8c] sm:$0x1]
      %v1966 = vld [vmem:[%s1649 + $0x96] sm:$0x1]
      %v1967 = vld [vmem:[%s1649 + $0xa0] sm:$0x1]
      %v1968 = vld [vmem:[%s1649 + $0xaa] sm:$0x1]
      %v1969 = vld [vmem:[%s1649 + $0xb4] sm:$0x1]
      %v1970 = vld [vmem:[%s1649 + $0xbe] sm:$0x1]
      %v1971 = vld [vmem:[%s1649 + $0xc8] sm:$0x1]
      %v1972 = vld [vmem:[%s1649 + $0xd2] sm:$0x1]
      %v1973 = vld [vmem:[%s1649 + $0xdc] sm:$0x1]
      %v1974 = vld [vmem:[%s1649 + $0xe6] sm:$0x1]
      %v1975 = vld [vmem:[%s1649 + $0xf0] sm:$0x1]
      %v1976 = vld [vmem:[%s1649 + $0xfa] sm:$0x1]
      %v1977 = vld [vmem:[%s1649 + $0x104] sm:$0x1]
      %v1978 = vld [vmem:[%s1649 + $0x10e] sm:$0x1]
      %v1979 = vld [vmem:[%s1649 + $0x118] sm:$0x1]
      %v1980 = vld [vmem:[%s1649 + $0x122] sm:$0x1]
      %v1981 = vld [vmem:[%s1649 + $0x12c] sm:$0x1]
      %v1982 = vld [vmem:[%s1649 + $0x136] sm:$0x1]
      %v1983 = vld [vmem:[%s1649 + $0x140] sm:$0x1]
      %v1984 = vld [vmem:[%s1649 + $0x14a] sm:$0x1]
      %v1985 = vld [vmem:[%s1649 + $0x154] sm:$0x1]
      %v1986 = vld [vmem:[%s1649 + $0x15e] sm:$0x1]
      %v1987 = vld [vmem:[%s1649 + $0x168] sm:$0x1]
      %v1988 = vld [vmem:[%s1649 + $0x172] sm:$0x1]
      %v1989 = vld [vmem:[%s1649 + $0x17c] sm:$0x1]
      %v1990 = vld [vmem:[%s1649 + $0x186] sm:$0x1]
      %v1991 = vld [vmem:[%s1649 + $0x190] sm:$0x1]
      %v1992 = vld [vmem:[%s1649 + $0x19a] sm:$0x1]
      %v1993 = vld [vmem:[%s1649 + $0x1a4] sm:$0x1]
      %v1994 = vld [vmem:[%s1649 + $0x1ae] sm:$0x1]
      %v1995 = vld [vmem:[%s1649 + $0x1b8] sm:$0x1]
      %v1996 = vld [vmem:[%s1649 + $0x1c2] sm:$0x1]
      %v1997 = vld [vmem:[%s1649 + $0x1cc] sm:$0x1]
      %v1998 = vld [vmem:[%s1649 + $0x1d6] sm:$0x1]
      %v1999 = vld [vmem:[%s1649 + $0x1e0] sm:$0x1]
      %v2000 = vld [vmem:[%s1649 + $0x1ea] sm:$0x1]
      %v2001 = vld [vmem:[%s1649 + $0x1f4] sm:$0x1]
      %v2002 = vld [vmem:[%s1649 + $0x1fe] sm:$0x1]
      %v2003 = vld [vmem:[%s1649 + $0x208] sm:$0x1]
      %v2004 = vld [vmem:[%s1649 + $0x212] sm:$0x1]
      %v2005 = vld [vmem:[%s1649 + $0x21c] sm:$0x1]
      %v2006 = vld [vmem:[%s1649 + $0x226] sm:$0x1]
      %v2007 = vld [vmem:[%s1649 + $0x230] sm:$0x1]
      %v2008 = vld [vmem:[%s1649 + $0x23a] sm:$0x1]
      %v2009 = vld [vmem:[%s1649 + $0x244] sm:$0x1]
      %v2010 = vld [vmem:[%s1649 + $0x24e] sm:$0x1]
      %v2011 = vld [vmem:[%s1649 + $0x258] sm:$0x1]
      %v2012 = vld [vmem:[%s1649 + $0x262] sm:$0x1]
      %v2013 = vld [vmem:[%s1649 + $0x26c] sm:$0x1]
      %v2014 = vld [vmem:[%s1649 + $0x276] sm:$0x1]
      %v2015 = vld [vmem:[%s1649 + $0x280] sm:$0x1]
      %v2016 = vld [vmem:[%s1649 + $0x28a] sm:$0x1]
      %v2017 = vld [vmem:[%s1649 + $0x294] sm:$0x1]
      %v2018 = vld [vmem:[%s1649 + $0x29e] sm:$0x1]
      %v2019 = vld [vmem:[%s1649 + $0x2a8] sm:$0x1]
      %v2020 = vld [vmem:[%s1649 + $0x2b2] sm:$0x1]
      %v2021 = vld [vmem:[%s1649 + $0x2bc] sm:$0x1]
      %v2022 = vld [vmem:[%s1649 + $0x2c6] sm:$0x1]
      %v2023 = vld [vmem:[%s1649 + $0x2d0] sm:$0x1]
      %v2024 = vld [vmem:[%s1649 + $0x2da] sm:$0x1]
      %v2025 = vld [vmem:[%s1649 + $0x2e4] sm:$0x1]
      %v2026 = vld [vmem:[%s1649 + $0x2ee] sm:$0x1]
      %v2027 = vld [vmem:[%s1649 + $0x2f8] sm:$0x1]
      %v2028 = vld [vmem:[%s1649 + $0x302] sm:$0x1]
      %v2029 = vld [vmem:[%s1649 + $0x30c] sm:$0x1]
      %v2030 = vld [vmem:[%s1649 + $0x316] sm:$0x1]
      %v2031 = vld [vmem:[%s1649 + $0x320] sm:$0x1]
      %v2032 = vld [vmem:[%s1649 + $0x32a] sm:$0x1]
      %v2033 = vld [vmem:[%s1649 + $0x334] sm:$0x1]
      %v2034 = vld [vmem:[%s1649 + $0x33e] sm:$0x1]
      %v2035 = vld [vmem:[%s1649 + $0x348] sm:$0x1]
      %v2036 = vld [vmem:[%s1649 + $0x352] sm:$0x1]
      %v2037 = vld [vmem:[%s1649 + $0x35c] sm:$0x1]
      %v2038 = vld [vmem:[%s1649 + $0x366] sm:$0x1]
      %v2039 = vld [vmem:[%s1649 + $0x370] sm:$0x1]
      %v2040 = vld [vmem:[%s1649 + $0x37a] sm:$0x1]
      %v2041 = vld [vmem:[%s1649 + $0x384] sm:$0x1]
      %v2042 = vld [vmem:[%s1649 + $0x38e] sm:$0x1]
      %v2043 = vld [vmem:[%s1649 + $0x398] sm:$0x1]
      %v2044 = vld [vmem:[%s1649 + $0x3a2] sm:$0x1]
      %v2045 = vld [vmem:[%s1649 + $0x3ac] sm:$0x1]
      %v2046 = vld [vmem:[%s1649 + $0x3b6] sm:$0x1]
      %v2047 = vld [vmem:[%s1649 + $0x3c0] sm:$0x1]
      %v2048 = vld [vmem:[%s1649 + $0x3ca] sm:$0x1]
      %v2049 = vld [vmem:[%s1649 + $0x3d4] sm:$0x1]
      %v2050 = vld [vmem:[%s1649 + $0x3de] sm:$0x1]
      %s2051 = scalar_lea.vmem %s135, 7
      %v2052 = vld [vmem:[%s2051] sm:$0x1]
      %v2053 = vld [vmem:[%s2051 + $0xa] sm:$0x1]
      %v2054 = vld [vmem:[%s2051 + $0x14] sm:$0x1]
      %v2055 = vld [vmem:[%s2051 + $0x1e] sm:$0x1]
      %v2056 = vld [vmem:[%s2051 + $0x28] sm:$0x1]
      %v2057 = vld [vmem:[%s2051 + $0x32] sm:$0x1]
      %v2058 = vld [vmem:[%s2051 + $0x3c] sm:$0x1]
      %v2059 = vld [vmem:[%s2051 + $0x46] sm:$0x1]
      %v2060 = vld [vmem:[%s2051 + $0x50] sm:$0x1]
      %v2061 = vld [vmem:[%s2051 + $0x5a] sm:$0x1]
      %v2062 = vld [vmem:[%s2051 + $0x64] sm:$0x1]
      %v2063 = vld [vmem:[%s2051 + $0x6e] sm:$0x1]
      %v2064 = vld [vmem:[%s2051 + $0x78] sm:$0x1]
      %v2065 = vld [vmem:[%s2051 + $0x82] sm:$0x1]
      %v2066 = vld [vmem:[%s2051 + $0x8c] sm:$0x1]
      %v2067 = vld [vmem:[%s2051 + $0x96] sm:$0x1]
      %v2068 = vld [vmem:[%s2051 + $0xa0] sm:$0x1]
      %v2069 = vld [vmem:[%s2051 + $0xaa] sm:$0x1]
      %v2070 = vld [vmem:[%s2051 + $0xb4] sm:$0x1]
      %v2071 = vld [vmem:[%s2051 + $0xbe] sm:$0x1]
      %v2072 = vld [vmem:[%s2051 + $0xc8] sm:$0x1]
      %v2073 = vld [vmem:[%s2051 + $0xd2] sm:$0x1]
      %v2074 = vld [vmem:[%s2051 + $0xdc] sm:$0x1]
      %v2075 = vld [vmem:[%s2051 + $0xe6] sm:$0x1]
      %v2076 = vld [vmem:[%s2051 + $0xf0] sm:$0x1]
      %v2077 = vld [vmem:[%s2051 + $0xfa] sm:$0x1]
      %v2078 = vld [vmem:[%s2051 + $0x104] sm:$0x1]
      %v2079 = vld [vmem:[%s2051 + $0x10e] sm:$0x1]
      %v2080 = vld [vmem:[%s2051 + $0x118] sm:$0x1]
      %v2081 = vld [vmem:[%s2051 + $0x122] sm:$0x1]
      %v2082 = vld [vmem:[%s2051 + $0x12c] sm:$0x1]
      %v2083 = vld [vmem:[%s2051 + $0x136] sm:$0x1]
      %v2084 = vld [vmem:[%s2051 + $0x140] sm:$0x1]
      %v2085 = vld [vmem:[%s2051 + $0x14a] sm:$0x1]
      %v2086 = vld [vmem:[%s2051 + $0x154] sm:$0x1]
      %v2087 = vld [vmem:[%s2051 + $0x15e] sm:$0x1]
      %v2088 = vld [vmem:[%s2051 + $0x168] sm:$0x1]
      %v2089 = vld [vmem:[%s2051 + $0x172] sm:$0x1]
      %v2090 = vld [vmem:[%s2051 + $0x17c] sm:$0x1]
      %v2091 = vld [vmem:[%s2051 + $0x186] sm:$0x1]
      %v2092 = vld [vmem:[%s2051 + $0x190] sm:$0x1]
      %v2093 = vld [vmem:[%s2051 + $0x19a] sm:$0x1]
      %v2094 = vld [vmem:[%s2051 + $0x1a4] sm:$0x1]
      %v2095 = vld [vmem:[%s2051 + $0x1ae] sm:$0x1]
      %v2096 = vld [vmem:[%s2051 + $0x1b8] sm:$0x1]
      %v2097 = vld [vmem:[%s2051 + $0x1c2] sm:$0x1]
      %v2098 = vld [vmem:[%s2051 + $0x1cc] sm:$0x1]
      %v2099 = vld [vmem:[%s2051 + $0x1d6] sm:$0x1]
      %v2100 = vld [vmem:[%s2051 + $0x1e0] sm:$0x1]
      %v2101 = vld [vmem:[%s2051 + $0x1ea] sm:$0x1]
      %v2102 = vld [vmem:[%s2051 + $0x1f4] sm:$0x1]
      %v2103 = vld [vmem:[%s2051 + $0x1fe] sm:$0x1]
      %v2104 = vld [vmem:[%s2051 + $0x208] sm:$0x1]
      %v2105 = vld [vmem:[%s2051 + $0x212] sm:$0x1]
      %v2106 = vld [vmem:[%s2051 + $0x21c] sm:$0x1]
      %v2107 = vld [vmem:[%s2051 + $0x226] sm:$0x1]
      %v2108 = vld [vmem:[%s2051 + $0x230] sm:$0x1]
      %v2109 = vld [vmem:[%s2051 + $0x23a] sm:$0x1]
      %v2110 = vld [vmem:[%s2051 + $0x244] sm:$0x1]
      %v2111 = vld [vmem:[%s2051 + $0x24e] sm:$0x1]
      %v2112 = vld [vmem:[%s2051 + $0x258] sm:$0x1]
      %v2113 = vld [vmem:[%s2051 + $0x262] sm:$0x1]
      %v2114 = vld [vmem:[%s2051 + $0x26c] sm:$0x1]
      %v2115 = vld [vmem:[%s2051 + $0x276] sm:$0x1]
      %v2116 = vld [vmem:[%s2051 + $0x280] sm:$0x1]
      %v2117 = vld [vmem:[%s2051 + $0x28a] sm:$0x1]
      %v2118 = vld [vmem:[%s2051 + $0x294] sm:$0x1]
      %v2119 = vld [vmem:[%s2051 + $0x29e] sm:$0x1]
      %v2120 = vld [vmem:[%s2051 + $0x2a8] sm:$0x1]
      %v2121 = vld [vmem:[%s2051 + $0x2b2] sm:$0x1]
      %v2122 = vld [vmem:[%s2051 + $0x2bc] sm:$0x1]
      %v2123 = vld [vmem:[%s2051 + $0x2c6] sm:$0x1]
      %v2124 = vld [vmem:[%s2051 + $0x2d0] sm:$0x1]
      %v2125 = vld [vmem:[%s2051 + $0x2da] sm:$0x1]
      %v2126 = vld [vmem:[%s2051 + $0x2e4] sm:$0x1]
      %v2127 = vld [vmem:[%s2051 + $0x2ee] sm:$0x1]
      %v2128 = vld [vmem:[%s2051 + $0x2f8] sm:$0x1]
      %v2129 = vld [vmem:[%s2051 + $0x302] sm:$0x1]
      %v2130 = vld [vmem:[%s2051 + $0x30c] sm:$0x1]
      %v2131 = vld [vmem:[%s2051 + $0x316] sm:$0x1]
      %v2132 = vld [vmem:[%s2051 + $0x320] sm:$0x1]
      %v2133 = vld [vmem:[%s2051 + $0x32a] sm:$0x1]
      %v2134 = vld [vmem:[%s2051 + $0x334] sm:$0x1]
      %v2135 = vld [vmem:[%s2051 + $0x33e] sm:$0x1]
      %v2136 = vld [vmem:[%s2051 + $0x348] sm:$0x1]
      %v2137 = vld [vmem:[%s2051 + $0x352] sm:$0x1]
      %v2138 = vld [vmem:[%s2051 + $0x35c] sm:$0x1]
      %v2139 = vld [vmem:[%s2051 + $0x366] sm:$0x1]
      %v2140 = vld [vmem:[%s2051 + $0x370] sm:$0x1]
      %v2141 = vld [vmem:[%s2051 + $0x37a] sm:$0x1]
      %v2142 = vld [vmem:[%s2051 + $0x384] sm:$0x1]
      %v2143 = vld [vmem:[%s2051 + $0x38e] sm:$0x1]
      %v2144 = vld [vmem:[%s2051 + $0x398] sm:$0x1]
      %v2145 = vld [vmem:[%s2051 + $0x3a2] sm:$0x1]
      %v2146 = vld [vmem:[%s2051 + $0x3ac] sm:$0x1]
      %v2147 = vld [vmem:[%s2051 + $0x3b6] sm:$0x1]
      %v2148 = vld [vmem:[%s2051 + $0x3c0] sm:$0x1]
      %v2149 = vld [vmem:[%s2051 + $0x3ca] sm:$0x1]
      %v2150 = vld [vmem:[%s2051 + $0x3d4] sm:$0x1]
      %v2151 = vld [vmem:[%s2051 + $0x3de] sm:$0x1]
      %v2152 = vmax.f32 %v1951, %v2052
      %v2153 = vmax.f32 %v1952, %v2053
      %v2154 = vmax.f32 %v1953, %v2054
      %v2155 = vmax.f32 %v1954, %v2055
      %v2156 = vmax.f32 %v1955, %v2056
      %v2157 = vmax.f32 %v1956, %v2057
      %v2158 = vmax.f32 %v1957, %v2058
      %v2159 = vmax.f32 %v1958, %v2059
      %v2160 = vmax.f32 %v1959, %v2060
      %v2161 = vmax.f32 %v1960, %v2061
      %v2162 = vmax.f32 %v1961, %v2062
      %v2163 = vmax.f32 %v1962, %v2063
      %v2164 = vmax.f32 %v1963, %v2064
      %v2165 = vmax.f32 %v1964, %v2065
      %v2166 = vmax.f32 %v1965, %v2066
      %v2167 = vmax.f32 %v1966, %v2067
      %v2168 = vmax.f32 %v1967, %v2068
      %v2169 = vmax.f32 %v1968, %v2069
      %v2170 = vmax.f32 %v1969, %v2070
      %v2171 = vmax.f32 %v1970, %v2071
      %v2172 = vmax.f32 %v1971, %v2072
      %v2173 = vmax.f32 %v1972, %v2073
      %v2174 = vmax.f32 %v1973, %v2074
      %v2175 = vmax.f32 %v1974, %v2075
      %v2176 = vmax.f32 %v1975, %v2076
      %v2177 = vmax.f32 %v1976, %v2077
      %v2178 = vmax.f32 %v1977, %v2078
      %v2179 = vmax.f32 %v1978, %v2079
      %v2180 = vmax.f32 %v1979, %v2080
      %v2181 = vmax.f32 %v1980, %v2081
      %v2182 = vmax.f32 %v1981, %v2082
      %v2183 = vmax.f32 %v1982, %v2083
      %v2184 = vmax.f32 %v1983, %v2084
      %v2185 = vmax.f32 %v1984, %v2085
      %v2186 = vmax.f32 %v1985, %v2086
      %v2187 = vmax.f32 %v1986, %v2087
      %v2188 = vmax.f32 %v1987, %v2088
      %v2189 = vmax.f32 %v1988, %v2089
      %v2190 = vmax.f32 %v1989, %v2090
      %v2191 = vmax.f32 %v1990, %v2091
      %v2192 = vmax.f32 %v1991, %v2092
      %v2193 = vmax.f32 %v1992, %v2093
      %v2194 = vmax.f32 %v1993, %v2094
      %v2195 = vmax.f32 %v1994, %v2095
      %v2196 = vmax.f32 %v1995, %v2096
      %v2197 = vmax.f32 %v1996, %v2097
      %v2198 = vmax.f32 %v1997, %v2098
      %v2199 = vmax.f32 %v1998, %v2099
      %v2200 = vmax.f32 %v1999, %v2100
      %v2201 = vmax.f32 %v2000, %v2101
      %v2202 = vmax.f32 %v2001, %v2102
      %v2203 = vmax.f32 %v2002, %v2103
      %v2204 = vmax.f32 %v2003, %v2104
      %v2205 = vmax.f32 %v2004, %v2105
      %v2206 = vmax.f32 %v2005, %v2106
      %v2207 = vmax.f32 %v2006, %v2107
      %v2208 = vmax.f32 %v2007, %v2108
      %v2209 = vmax.f32 %v2008, %v2109
      %v2210 = vmax.f32 %v2009, %v2110
      %v2211 = vmax.f32 %v2010, %v2111
      %v2212 = vmax.f32 %v2011, %v2112
      %v2213 = vmax.f32 %v2012, %v2113
      %v2214 = vmax.f32 %v2013, %v2114
      %v2215 = vmax.f32 %v2014, %v2115
      %v2216 = vmax.f32 %v2015, %v2116
      %v2217 = vmax.f32 %v2016, %v2117
      %v2218 = vmax.f32 %v2017, %v2118
      %v2219 = vmax.f32 %v2018, %v2119
      %v2220 = vmax.f32 %v2019, %v2120
      %v2221 = vmax.f32 %v2020, %v2121
      %v2222 = vmax.f32 %v2021, %v2122
      %v2223 = vmax.f32 %v2022, %v2123
      %v2224 = vmax.f32 %v2023, %v2124
      %v2225 = vmax.f32 %v2024, %v2125
      %v2226 = vmax.f32 %v2025, %v2126
      %v2227 = vmax.f32 %v2026, %v2127
      %v2228 = vmax.f32 %v2027, %v2128
      %v2229 = vmax.f32 %v2028, %v2129
      %v2230 = vmax.f32 %v2029, %v2130
      %v2231 = vmax.f32 %v2030, %v2131
      %v2232 = vmax.f32 %v2031, %v2132
      %v2233 = vmax.f32 %v2032, %v2133
      %v2234 = vmax.f32 %v2033, %v2134
      %v2235 = vmax.f32 %v2034, %v2135
      %v2236 = vmax.f32 %v2035, %v2136
      %v2237 = vmax.f32 %v2036, %v2137
      %v2238 = vmax.f32 %v2037, %v2138
      %v2239 = vmax.f32 %v2038, %v2139
      %v2240 = vmax.f32 %v2039, %v2140
      %v2241 = vmax.f32 %v2040, %v2141
      %v2242 = vmax.f32 %v2041, %v2142
      %v2243 = vmax.f32 %v2042, %v2143
      %v2244 = vmax.f32 %v2043, %v2144
      %v2245 = vmax.f32 %v2044, %v2145
      %v2246 = vmax.f32 %v2045, %v2146
      %v2247 = vmax.f32 %v2046, %v2147
      %v2248 = vmax.f32 %v2047, %v2148
      %v2249 = vmax.f32 %v2048, %v2149
      %v2250 = vmax.f32 %v2049, %v2150
      %v2251 = vmax.f32 %v2050, %v2151
      %s2252 = scalar_lea.vmem %s135, 8
      %v2253 = vld [vmem:[%s2252] sm:$0x1]
      %v2254 = vld [vmem:[%s2252 + $0xa] sm:$0x1]
      %v2255 = vld [vmem:[%s2252 + $0x14] sm:$0x1]
      %v2256 = vld [vmem:[%s2252 + $0x1e] sm:$0x1]
      %v2257 = vld [vmem:[%s2252 + $0x28] sm:$0x1]
      %v2258 = vld [vmem:[%s2252 + $0x32] sm:$0x1]
      %v2259 = vld [vmem:[%s2252 + $0x3c] sm:$0x1]
      %v2260 = vld [vmem:[%s2252 + $0x46] sm:$0x1]
      %v2261 = vld [vmem:[%s2252 + $0x50] sm:$0x1]
      %v2262 = vld [vmem:[%s2252 + $0x5a] sm:$0x1]
      %v2263 = vld [vmem:[%s2252 + $0x64] sm:$0x1]
      %v2264 = vld [vmem:[%s2252 + $0x6e] sm:$0x1]
      %v2265 = vld [vmem:[%s2252 + $0x78] sm:$0x1]
      %v2266 = vld [vmem:[%s2252 + $0x82] sm:$0x1]
      %v2267 = vld [vmem:[%s2252 + $0x8c] sm:$0x1]
      %v2268 = vld [vmem:[%s2252 + $0x96] sm:$0x1]
      %v2269 = vld [vmem:[%s2252 + $0xa0] sm:$0x1]
      %v2270 = vld [vmem:[%s2252 + $0xaa] sm:$0x1]
      %v2271 = vld [vmem:[%s2252 + $0xb4] sm:$0x1]
      %v2272 = vld [vmem:[%s2252 + $0xbe] sm:$0x1]
      %v2273 = vld [vmem:[%s2252 + $0xc8] sm:$0x1]
      %v2274 = vld [vmem:[%s2252 + $0xd2] sm:$0x1]
      %v2275 = vld [vmem:[%s2252 + $0xdc] sm:$0x1]
      %v2276 = vld [vmem:[%s2252 + $0xe6] sm:$0x1]
      %v2277 = vld [vmem:[%s2252 + $0xf0] sm:$0x1]
      %v2278 = vld [vmem:[%s2252 + $0xfa] sm:$0x1]
      %v2279 = vld [vmem:[%s2252 + $0x104] sm:$0x1]
      %v2280 = vld [vmem:[%s2252 + $0x10e] sm:$0x1]
      %v2281 = vld [vmem:[%s2252 + $0x118] sm:$0x1]
      %v2282 = vld [vmem:[%s2252 + $0x122] sm:$0x1]
      %v2283 = vld [vmem:[%s2252 + $0x12c] sm:$0x1]
      %v2284 = vld [vmem:[%s2252 + $0x136] sm:$0x1]
      %v2285 = vld [vmem:[%s2252 + $0x140] sm:$0x1]
      %v2286 = vld [vmem:[%s2252 + $0x14a] sm:$0x1]
      %v2287 = vld [vmem:[%s2252 + $0x154] sm:$0x1]
      %v2288 = vld [vmem:[%s2252 + $0x15e] sm:$0x1]
      %v2289 = vld [vmem:[%s2252 + $0x168] sm:$0x1]
      %v2290 = vld [vmem:[%s2252 + $0x172] sm:$0x1]
      %v2291 = vld [vmem:[%s2252 + $0x17c] sm:$0x1]
      %v2292 = vld [vmem:[%s2252 + $0x186] sm:$0x1]
      %v2293 = vld [vmem:[%s2252 + $0x190] sm:$0x1]
      %v2294 = vld [vmem:[%s2252 + $0x19a] sm:$0x1]
      %v2295 = vld [vmem:[%s2252 + $0x1a4] sm:$0x1]
      %v2296 = vld [vmem:[%s2252 + $0x1ae] sm:$0x1]
      %v2297 = vld [vmem:[%s2252 + $0x1b8] sm:$0x1]
      %v2298 = vld [vmem:[%s2252 + $0x1c2] sm:$0x1]
      %v2299 = vld [vmem:[%s2252 + $0x1cc] sm:$0x1]
      %v2300 = vld [vmem:[%s2252 + $0x1d6] sm:$0x1]
      %v2301 = vld [vmem:[%s2252 + $0x1e0] sm:$0x1]
      %v2302 = vld [vmem:[%s2252 + $0x1ea] sm:$0x1]
      %v2303 = vld [vmem:[%s2252 + $0x1f4] sm:$0x1]
      %v2304 = vld [vmem:[%s2252 + $0x1fe] sm:$0x1]
      %v2305 = vld [vmem:[%s2252 + $0x208] sm:$0x1]
      %v2306 = vld [vmem:[%s2252 + $0x212] sm:$0x1]
      %v2307 = vld [vmem:[%s2252 + $0x21c] sm:$0x1]
      %v2308 = vld [vmem:[%s2252 + $0x226] sm:$0x1]
      %v2309 = vld [vmem:[%s2252 + $0x230] sm:$0x1]
      %v2310 = vld [vmem:[%s2252 + $0x23a] sm:$0x1]
      %v2311 = vld [vmem:[%s2252 + $0x244] sm:$0x1]
      %v2312 = vld [vmem:[%s2252 + $0x24e] sm:$0x1]
      %v2313 = vld [vmem:[%s2252 + $0x258] sm:$0x1]
      %v2314 = vld [vmem:[%s2252 + $0x262] sm:$0x1]
      %v2315 = vld [vmem:[%s2252 + $0x26c] sm:$0x1]
      %v2316 = vld [vmem:[%s2252 + $0x276] sm:$0x1]
      %v2317 = vld [vmem:[%s2252 + $0x280] sm:$0x1]
      %v2318 = vld [vmem:[%s2252 + $0x28a] sm:$0x1]
      %v2319 = vld [vmem:[%s2252 + $0x294] sm:$0x1]
      %v2320 = vld [vmem:[%s2252 + $0x29e] sm:$0x1]
      %v2321 = vld [vmem:[%s2252 + $0x2a8] sm:$0x1]
      %v2322 = vld [vmem:[%s2252 + $0x2b2] sm:$0x1]
      %v2323 = vld [vmem:[%s2252 + $0x2bc] sm:$0x1]
      %v2324 = vld [vmem:[%s2252 + $0x2c6] sm:$0x1]
      %v2325 = vld [vmem:[%s2252 + $0x2d0] sm:$0x1]
      %v2326 = vld [vmem:[%s2252 + $0x2da] sm:$0x1]
      %v2327 = vld [vmem:[%s2252 + $0x2e4] sm:$0x1]
      %v2328 = vld [vmem:[%s2252 + $0x2ee] sm:$0x1]
      %v2329 = vld [vmem:[%s2252 + $0x2f8] sm:$0x1]
      %v2330 = vld [vmem:[%s2252 + $0x302] sm:$0x1]
      %v2331 = vld [vmem:[%s2252 + $0x30c] sm:$0x1]
      %v2332 = vld [vmem:[%s2252 + $0x316] sm:$0x1]
      %v2333 = vld [vmem:[%s2252 + $0x320] sm:$0x1]
      %v2334 = vld [vmem:[%s2252 + $0x32a] sm:$0x1]
      %v2335 = vld [vmem:[%s2252 + $0x334] sm:$0x1]
      %v2336 = vld [vmem:[%s2252 + $0x33e] sm:$0x1]
      %v2337 = vld [vmem:[%s2252 + $0x348] sm:$0x1]
      %v2338 = vld [vmem:[%s2252 + $0x352] sm:$0x1]
      %v2339 = vld [vmem:[%s2252 + $0x35c] sm:$0x1]
      %v2340 = vld [vmem:[%s2252 + $0x366] sm:$0x1]
      %v2341 = vld [vmem:[%s2252 + $0x370] sm:$0x1]
      %v2342 = vld [vmem:[%s2252 + $0x37a] sm:$0x1]
      %v2343 = vld [vmem:[%s2252 + $0x384] sm:$0x1]
      %v2344 = vld [vmem:[%s2252 + $0x38e] sm:$0x1]
      %v2345 = vld [vmem:[%s2252 + $0x398] sm:$0x1]
      %v2346 = vld [vmem:[%s2252 + $0x3a2] sm:$0x1]
      %v2347 = vld [vmem:[%s2252 + $0x3ac] sm:$0x1]
      %v2348 = vld [vmem:[%s2252 + $0x3b6] sm:$0x1]
      %v2349 = vld [vmem:[%s2252 + $0x3c0] sm:$0x1]
      %v2350 = vld [vmem:[%s2252 + $0x3ca] sm:$0x1]
      %v2351 = vld [vmem:[%s2252 + $0x3d4] sm:$0x1]
      %v2352 = vld [vmem:[%s2252 + $0x3de] sm:$0x1]
      %v2353 = vmax.f32 %v2152, %v2253
      %v2354 = vmax.f32 %v2153, %v2254
      %v2355 = vmax.f32 %v2154, %v2255
      %v2356 = vmax.f32 %v2155, %v2256
      %v2357 = vmax.f32 %v2156, %v2257
      %v2358 = vmax.f32 %v2157, %v2258
      %v2359 = vmax.f32 %v2158, %v2259
      %v2360 = vmax.f32 %v2159, %v2260
      %v2361 = vmax.f32 %v2160, %v2261
      %v2362 = vmax.f32 %v2161, %v2262
      %v2363 = vmax.f32 %v2162, %v2263
      %v2364 = vmax.f32 %v2163, %v2264
      %v2365 = vmax.f32 %v2164, %v2265
      %v2366 = vmax.f32 %v2165, %v2266
      %v2367 = vmax.f32 %v2166, %v2267
      %v2368 = vmax.f32 %v2167, %v2268
      %v2369 = vmax.f32 %v2168, %v2269
      %v2370 = vmax.f32 %v2169, %v2270
      %v2371 = vmax.f32 %v2170, %v2271
      %v2372 = vmax.f32 %v2171, %v2272
      %v2373 = vmax.f32 %v2172, %v2273
      %v2374 = vmax.f32 %v2173, %v2274
      %v2375 = vmax.f32 %v2174, %v2275
      %v2376 = vmax.f32 %v2175, %v2276
      %v2377 = vmax.f32 %v2176, %v2277
      %v2378 = vmax.f32 %v2177, %v2278
      %v2379 = vmax.f32 %v2178, %v2279
      %v2380 = vmax.f32 %v2179, %v2280
      %v2381 = vmax.f32 %v2180, %v2281
      %v2382 = vmax.f32 %v2181, %v2282
      %v2383 = vmax.f32 %v2182, %v2283
      %v2384 = vmax.f32 %v2183, %v2284
      %v2385 = vmax.f32 %v2184, %v2285
      %v2386 = vmax.f32 %v2185, %v2286
      %v2387 = vmax.f32 %v2186, %v2287
      %v2388 = vmax.f32 %v2187, %v2288
      %v2389 = vmax.f32 %v2188, %v2289
      %v2390 = vmax.f32 %v2189, %v2290
      %v2391 = vmax.f32 %v2190, %v2291
      %v2392 = vmax.f32 %v2191, %v2292
      %v2393 = vmax.f32 %v2192, %v2293
      %v2394 = vmax.f32 %v2193, %v2294
      %v2395 = vmax.f32 %v2194, %v2295
      %v2396 = vmax.f32 %v2195, %v2296
      %v2397 = vmax.f32 %v2196, %v2297
      %v2398 = vmax.f32 %v2197, %v2298
      %v2399 = vmax.f32 %v2198, %v2299
      %v2400 = vmax.f32 %v2199, %v2300
      %v2401 = vmax.f32 %v2200, %v2301
      %v2402 = vmax.f32 %v2201, %v2302
      %v2403 = vmax.f32 %v2202, %v2303
      %v2404 = vmax.f32 %v2203, %v2304
      %v2405 = vmax.f32 %v2204, %v2305
      %v2406 = vmax.f32 %v2205, %v2306
      %v2407 = vmax.f32 %v2206, %v2307
      %v2408 = vmax.f32 %v2207, %v2308
      %v2409 = vmax.f32 %v2208, %v2309
      %v2410 = vmax.f32 %v2209, %v2310
      %v2411 = vmax.f32 %v2210, %v2311
      %v2412 = vmax.f32 %v2211, %v2312
      %v2413 = vmax.f32 %v2212, %v2313
      %v2414 = vmax.f32 %v2213, %v2314
      %v2415 = vmax.f32 %v2214, %v2315
      %v2416 = vmax.f32 %v2215, %v2316
      %v2417 = vmax.f32 %v2216, %v2317
      %v2418 = vmax.f32 %v2217, %v2318
      %v2419 = vmax.f32 %v2218, %v2319
      %v2420 = vmax.f32 %v2219, %v2320
      %v2421 = vmax.f32 %v2220, %v2321
      %v2422 = vmax.f32 %v2221, %v2322
      %v2423 = vmax.f32 %v2222, %v2323
      %v2424 = vmax.f32 %v2223, %v2324
      %v2425 = vmax.f32 %v2224, %v2325
      %v2426 = vmax.f32 %v2225, %v2326
      %v2427 = vmax.f32 %v2226, %v2327
      %v2428 = vmax.f32 %v2227, %v2328
      %v2429 = vmax.f32 %v2228, %v2329
      %v2430 = vmax.f32 %v2229, %v2330
      %v2431 = vmax.f32 %v2230, %v2331
      %v2432 = vmax.f32 %v2231, %v2332
      %v2433 = vmax.f32 %v2232, %v2333
      %v2434 = vmax.f32 %v2233, %v2334
      %v2435 = vmax.f32 %v2234, %v2335
      %v2436 = vmax.f32 %v2235, %v2336
      %v2437 = vmax.f32 %v2236, %v2337
      %v2438 = vmax.f32 %v2237, %v2338
      %v2439 = vmax.f32 %v2238, %v2339
      %v2440 = vmax.f32 %v2239, %v2340
      %v2441 = vmax.f32 %v2240, %v2341
      %v2442 = vmax.f32 %v2241, %v2342
      %v2443 = vmax.f32 %v2242, %v2343
      %v2444 = vmax.f32 %v2243, %v2344
      %v2445 = vmax.f32 %v2244, %v2345
      %v2446 = vmax.f32 %v2245, %v2346
      %v2447 = vmax.f32 %v2246, %v2347
      %v2448 = vmax.f32 %v2247, %v2348
      %v2449 = vmax.f32 %v2248, %v2349
      %v2450 = vmax.f32 %v2249, %v2350
      %v2451 = vmax.f32 %v2250, %v2351
      %v2452 = vmax.f32 %v2251, %v2352
      %s2453 = scalar_lea.vmem [#allocation2], 3
      %2454 = vst [vmem:[%s2453] sm:$0x1] %v2353
      %2455 = vst [vmem:[%s2453 + $0x4] sm:$0x1] %v2354
      %2456 = vst [vmem:[%s2453 + $0x8] sm:$0x1] %v2355
      %2457 = vst [vmem:[%s2453 + $0xc] sm:$0x1] %v2356
      %2458 = vst [vmem:[%s2453 + $0x10] sm:$0x1] %v2357
      %2459 = vst [vmem:[%s2453 + $0x14] sm:$0x1] %v2358
      %2460 = vst [vmem:[%s2453 + $0x18] sm:$0x1] %v2359
      %2461 = vst [vmem:[%s2453 + $0x1c] sm:$0x1] %v2360
      %2462 = vst [vmem:[%s2453 + $0x20] sm:$0x1] %v2361
      %2463 = vst [vmem:[%s2453 + $0x24] sm:$0x1] %v2362
      %2464 = vst [vmem:[%s2453 + $0x28] sm:$0x1] %v2363
      %2465 = vst [vmem:[%s2453 + $0x2c] sm:$0x1] %v2364
      %2466 = vst [vmem:[%s2453 + $0x30] sm:$0x1] %v2365
      %2467 = vst [vmem:[%s2453 + $0x34] sm:$0x1] %v2366
      %2468 = vst [vmem:[%s2453 + $0x38] sm:$0x1] %v2367
      %2469 = vst [vmem:[%s2453 + $0x3c] sm:$0x1] %v2368
      %2470 = vst [vmem:[%s2453 + $0x40] sm:$0x1] %v2369
      %2471 = vst [vmem:[%s2453 + $0x44] sm:$0x1] %v2370
      %2472 = vst [vmem:[%s2453 + $0x48] sm:$0x1] %v2371
      %2473 = vst [vmem:[%s2453 + $0x4c] sm:$0x1] %v2372
      %2474 = vst [vmem:[%s2453 + $0x50] sm:$0x1] %v2373
      %2475 = vst [vmem:[%s2453 + $0x54] sm:$0x1] %v2374
      %2476 = vst [vmem:[%s2453 + $0x58] sm:$0x1] %v2375
      %2477 = vst [vmem:[%s2453 + $0x5c] sm:$0x1] %v2376
      %2478 = vst [vmem:[%s2453 + $0x60] sm:$0x1] %v2377
      %2479 = vst [vmem:[%s2453 + $0x64] sm:$0x1] %v2378
      %2480 = vst [vmem:[%s2453 + $0x68] sm:$0x1] %v2379
      %2481 = vst [vmem:[%s2453 + $0x6c] sm:$0x1] %v2380
      %2482 = vst [vmem:[%s2453 + $0x70] sm:$0x1] %v2381
      %2483 = vst [vmem:[%s2453 + $0x74] sm:$0x1] %v2382
      %2484 = vst [vmem:[%s2453 + $0x78] sm:$0x1] %v2383
      %2485 = vst [vmem:[%s2453 + $0x7c] sm:$0x1] %v2384
      %2486 = vst [vmem:[%s2453 + $0x80] sm:$0x1] %v2385
      %2487 = vst [vmem:[%s2453 + $0x84] sm:$0x1] %v2386
      %2488 = vst [vmem:[%s2453 + $0x88] sm:$0x1] %v2387
      %2489 = vst [vmem:[%s2453 + $0x8c] sm:$0x1] %v2388
      %2490 = vst [vmem:[%s2453 + $0x90] sm:$0x1] %v2389
      %2491 = vst [vmem:[%s2453 + $0x94] sm:$0x1] %v2390
      %2492 = vst [vmem:[%s2453 + $0x98] sm:$0x1] %v2391
      %2493 = vst [vmem:[%s2453 + $0x9c] sm:$0x1] %v2392
      %2494 = vst [vmem:[%s2453 + $0xa0] sm:$0x1] %v2393
      %2495 = vst [vmem:[%s2453 + $0xa4] sm:$0x1] %v2394
      %2496 = vst [vmem:[%s2453 + $0xa8] sm:$0x1] %v2395
      %2497 = vst [vmem:[%s2453 + $0xac] sm:$0x1] %v2396
      %2498 = vst [vmem:[%s2453 + $0xb0] sm:$0x1] %v2397
      %2499 = vst [vmem:[%s2453 + $0xb4] sm:$0x1] %v2398
      %2500 = vst [vmem:[%s2453 + $0xb8] sm:$0x1] %v2399
      %2501 = vst [vmem:[%s2453 + $0xbc] sm:$0x1] %v2400
      %2502 = vst [vmem:[%s2453 + $0xc0] sm:$0x1] %v2401
      %2503 = vst [vmem:[%s2453 + $0xc4] sm:$0x1] %v2402
      %2504 = vst [vmem:[%s2453 + $0xc8] sm:$0x1] %v2403
      %2505 = vst [vmem:[%s2453 + $0xcc] sm:$0x1] %v2404
      %2506 = vst [vmem:[%s2453 + $0xd0] sm:$0x1] %v2405
      %2507 = vst [vmem:[%s2453 + $0xd4] sm:$0x1] %v2406
      %2508 = vst [vmem:[%s2453 + $0xd8] sm:$0x1] %v2407
      %2509 = vst [vmem:[%s2453 + $0xdc] sm:$0x1] %v2408
      %2510 = vst [vmem:[%s2453 + $0xe0] sm:$0x1] %v2409
      %2511 = vst [vmem:[%s2453 + $0xe4] sm:$0x1] %v2410
      %2512 = vst [vmem:[%s2453 + $0xe8] sm:$0x1] %v2411
      %2513 = vst [vmem:[%s2453 + $0xec] sm:$0x1] %v2412
      %2514 = vst [vmem:[%s2453 + $0xf0] sm:$0x1] %v2413
      %2515 = vst [vmem:[%s2453 + $0xf4] sm:$0x1] %v2414
      %2516 = vst [vmem:[%s2453 + $0xf8] sm:$0x1] %v2415
      %2517 = vst [vmem:[%s2453 + $0xfc] sm:$0x1] %v2416
      %2518 = vst [vmem:[%s2453 + $0x100] sm:$0x1] %v2417
      %2519 = vst [vmem:[%s2453 + $0x104] sm:$0x1] %v2418
      %2520 = vst [vmem:[%s2453 + $0x108] sm:$0x1] %v2419
      %2521 = vst [vmem:[%s2453 + $0x10c] sm:$0x1] %v2420
      %2522 = vst [vmem:[%s2453 + $0x110] sm:$0x1] %v2421
      %2523 = vst [vmem:[%s2453 + $0x114] sm:$0x1] %v2422
      %2524 = vst [vmem:[%s2453 + $0x118] sm:$0x1] %v2423
      %2525 = vst [vmem:[%s2453 + $0x11c] sm:$0x1] %v2424
      %2526 = vst [vmem:[%s2453 + $0x120] sm:$0x1] %v2425
      %2527 = vst [vmem:[%s2453 + $0x124] sm:$0x1] %v2426
      %2528 = vst [vmem:[%s2453 + $0x128] sm:$0x1] %v2427
      %2529 = vst [vmem:[%s2453 + $0x12c] sm:$0x1] %v2428
      %2530 = vst [vmem:[%s2453 + $0x130] sm:$0x1] %v2429
      %2531 = vst [vmem:[%s2453 + $0x134] sm:$0x1] %v2430
      %2532 = vst [vmem:[%s2453 + $0x138] sm:$0x1] %v2431
      %2533 = vst [vmem:[%s2453 + $0x13c] sm:$0x1] %v2432
      %2534 = vst [vmem:[%s2453 + $0x140] sm:$0x1] %v2433
      %2535 = vst [vmem:[%s2453 + $0x144] sm:$0x1] %v2434
      %2536 = vst [vmem:[%s2453 + $0x148] sm:$0x1] %v2435
      %2537 = vst [vmem:[%s2453 + $0x14c] sm:$0x1] %v2436
      %2538 = vst [vmem:[%s2453 + $0x150] sm:$0x1] %v2437
      %2539 = vst [vmem:[%s2453 + $0x154] sm:$0x1] %v2438
      %2540 = vst [vmem:[%s2453 + $0x158] sm:$0x1] %v2439
      %2541 = vst [vmem:[%s2453 + $0x15c] sm:$0x1] %v2440
      %2542 = vst [vmem:[%s2453 + $0x160] sm:$0x1] %v2441
      %2543 = vst [vmem:[%s2453 + $0x164] sm:$0x1] %v2442
      %2544 = vst [vmem:[%s2453 + $0x168] sm:$0x1] %v2443
      %2545 = vst [vmem:[%s2453 + $0x16c] sm:$0x1] %v2444
      %2546 = vst [vmem:[%s2453 + $0x170] sm:$0x1] %v2445
      %2547 = vst [vmem:[%s2453 + $0x174] sm:$0x1] %v2446
      %2548 = vst [vmem:[%s2453 + $0x178] sm:$0x1] %v2447
      %2549 = vst [vmem:[%s2453 + $0x17c] sm:$0x1] %v2448
      %2550 = vst [vmem:[%s2453 + $0x180] sm:$0x1] %v2449
      %2551 = vst [vmem:[%s2453 + $0x184] sm:$0x1] %v2450
      %2552 = vst [vmem:[%s2453 + $0x188] sm:$0x1] %v2451
      %2553 = vst [vmem:[%s2453 + $0x18c] sm:$0x1] %v2452
      %v2554 = vld [vmem:[#allocation2] sm:$0x1]
      %v2555 = vld [vmem:[#allocation2 + $0x1] sm:$0x1]
      %v2556 = vld [vmem:[#allocation2 + $0x2] sm:$0x1]
      %v2557 = vld [vmem:[#allocation2 + $0x3] sm:$0x1]
      %v2558 = vld [vmem:[#allocation2 + $0x28] sm:$0x1]
      %v2559 = vld [vmem:[#allocation2 + $0x29] sm:$0x1]
      %v2560 = vld [vmem:[#allocation2 + $0x2a] sm:$0x1]
      %v2561 = vld [vmem:[#allocation2 + $0x2b] sm:$0x1]
      %v2562 = vld [vmem:[#allocation2 + $0x50] sm:$0x1]
      %v2563 = vld [vmem:[#allocation2 + $0x51] sm:$0x1]
      %v2564 = vld [vmem:[#allocation2 + $0x52] sm:$0x1]
      %v2565 = vld [vmem:[#allocation2 + $0x53] sm:$0x1]
      %v2566 = vld [vmem:[#allocation2 + $0x78] sm:$0x1]
      %v2567 = vld [vmem:[#allocation2 + $0x79] sm:$0x1]
      %v2568 = vld [vmem:[#allocation2 + $0x7a] sm:$0x1]
      %v2569 = vld [vmem:[#allocation2 + $0x7b] sm:$0x1]
      %v2570 = vld [vmem:[#allocation2 + $0xa0] sm:$0x1]
      %v2571 = vld [vmem:[#allocation2 + $0xa1] sm:$0x1]
      %v2572 = vld [vmem:[#allocation2 + $0xa2] sm:$0x1]
      %v2573 = vld [vmem:[#allocation2 + $0xa3] sm:$0x1]
      %v2574 = vld [vmem:[#allocation2 + $0xc8] sm:$0x1]
      %v2575 = vld [vmem:[#allocation2 + $0xc9] sm:$0x1]
      %v2576 = vld [vmem:[#allocation2 + $0xca] sm:$0x1]
      %v2577 = vld [vmem:[#allocation2 + $0xcb] sm:$0x1]
      %v2578 = vld [vmem:[#allocation2 + $0xf0] sm:$0x1]
      %v2579 = vld [vmem:[#allocation2 + $0xf1] sm:$0x1]
      %v2580 = vld [vmem:[#allocation2 + $0xf2] sm:$0x1]
      %v2581 = vld [vmem:[#allocation2 + $0xf3] sm:$0x1]
      %v2582 = vld [vmem:[#allocation2 + $0x118] sm:$0x1]
      %v2583 = vld [vmem:[#allocation2 + $0x119] sm:$0x1]
      %v2584 = vld [vmem:[#allocation2 + $0x11a] sm:$0x1]
      %v2585 = vld [vmem:[#allocation2 + $0x11b] sm:$0x1]
      %v2586 = vld [vmem:[#allocation2 + $0x140] sm:$0x1]
      %v2587 = vld [vmem:[#allocation2 + $0x141] sm:$0x1]
      %v2588 = vld [vmem:[#allocation2 + $0x142] sm:$0x1]
      %v2589 = vld [vmem:[#allocation2 + $0x143] sm:$0x1]
      %v2590 = vld [vmem:[#allocation2 + $0x168] sm:$0x1]
      %v2591 = vld [vmem:[#allocation2 + $0x169] sm:$0x1]
      %v2592 = vld [vmem:[#allocation2 + $0x16a] sm:$0x1]
      %v2593 = vld [vmem:[#allocation2 + $0x16b] sm:$0x1]
      %s2594 = scalar_lea.vmem [#allocation2], 4
      %v2595 = vld [vmem:[%s2594] sm:$0x1]
      %v2596 = vld [vmem:[%s2594 + $0x1] sm:$0x1]
      %v2597 = vld [vmem:[%s2594 + $0x2] sm:$0x1]
      %v2598 = vld [vmem:[%s2594 + $0x3] sm:$0x1]
      %v2599 = vld [vmem:[%s2594 + $0x28] sm:$0x1]
      %v2600 = vld [vmem:[%s2594 + $0x29] sm:$0x1]
      %v2601 = vld [vmem:[%s2594 + $0x2a] sm:$0x1]
      %v2602 = vld [vmem:[%s2594 + $0x2b] sm:$0x1]
      %v2603 = vld [vmem:[%s2594 + $0x50] sm:$0x1]
      %v2604 = vld [vmem:[%s2594 + $0x51] sm:$0x1]
      %v2605 = vld [vmem:[%s2594 + $0x52] sm:$0x1]
      %v2606 = vld [vmem:[%s2594 + $0x53] sm:$0x1]
      %v2607 = vld [vmem:[%s2594 + $0x78] sm:$0x1]
      %v2608 = vld [vmem:[%s2594 + $0x79] sm:$0x1]
      %v2609 = vld [vmem:[%s2594 + $0x7a] sm:$0x1]
      %v2610 = vld [vmem:[%s2594 + $0x7b] sm:$0x1]
      %v2611 = vld [vmem:[%s2594 + $0xa0] sm:$0x1]
      %v2612 = vld [vmem:[%s2594 + $0xa1] sm:$0x1]
      %v2613 = vld [vmem:[%s2594 + $0xa2] sm:$0x1]
      %v2614 = vld [vmem:[%s2594 + $0xa3] sm:$0x1]
      %v2615 = vld [vmem:[%s2594 + $0xc8] sm:$0x1]
      %v2616 = vld [vmem:[%s2594 + $0xc9] sm:$0x1]
      %v2617 = vld [vmem:[%s2594 + $0xca] sm:$0x1]
      %v2618 = vld [vmem:[%s2594 + $0xcb] sm:$0x1]
      %v2619 = vld [vmem:[%s2594 + $0xf0] sm:$0x1]
      %v2620 = vld [vmem:[%s2594 + $0xf1] sm:$0x1]
      %v2621 = vld [vmem:[%s2594 + $0xf2] sm:$0x1]
      %v2622 = vld [vmem:[%s2594 + $0xf3] sm:$0x1]
      %v2623 = vld [vmem:[%s2594 + $0x118] sm:$0x1]
      %v2624 = vld [vmem:[%s2594 + $0x119] sm:$0x1]
      %v2625 = vld [vmem:[%s2594 + $0x11a] sm:$0x1]
      %v2626 = vld [vmem:[%s2594 + $0x11b] sm:$0x1]
      %v2627 = vld [vmem:[%s2594 + $0x140] sm:$0x1]
      %v2628 = vld [vmem:[%s2594 + $0x141] sm:$0x1]
      %v2629 = vld [vmem:[%s2594 + $0x142] sm:$0x1]
      %v2630 = vld [vmem:[%s2594 + $0x143] sm:$0x1]
      %v2631 = vld [vmem:[%s2594 + $0x168] sm:$0x1]
      %v2632 = vld [vmem:[%s2594 + $0x169] sm:$0x1]
      %v2633 = vld [vmem:[%s2594 + $0x16a] sm:$0x1]
      %v2634 = vld [vmem:[%s2594 + $0x16b] sm:$0x1]
      %v2635 = vmax.f32 %v2554, %v2595
      %v2636 = vmax.f32 %v2555, %v2596
      %v2637 = vmax.f32 %v2556, %v2597
      %v2638 = vmax.f32 %v2557, %v2598
      %v2639 = vmax.f32 %v2558, %v2599
      %v2640 = vmax.f32 %v2559, %v2600
      %v2641 = vmax.f32 %v2560, %v2601
      %v2642 = vmax.f32 %v2561, %v2602
      %v2643 = vmax.f32 %v2562, %v2603
      %v2644 = vmax.f32 %v2563, %v2604
      %v2645 = vmax.f32 %v2564, %v2605
      %v2646 = vmax.f32 %v2565, %v2606
      %v2647 = vmax.f32 %v2566, %v2607
      %v2648 = vmax.f32 %v2567, %v2608
      %v2649 = vmax.f32 %v2568, %v2609
      %v2650 = vmax.f32 %v2569, %v2610
      %v2651 = vmax.f32 %v2570, %v2611
      %v2652 = vmax.f32 %v2571, %v2612
      %v2653 = vmax.f32 %v2572, %v2613
      %v2654 = vmax.f32 %v2573, %v2614
      %v2655 = vmax.f32 %v2574, %v2615
      %v2656 = vmax.f32 %v2575, %v2616
      %v2657 = vmax.f32 %v2576, %v2617
      %v2658 = vmax.f32 %v2577, %v2618
      %v2659 = vmax.f32 %v2578, %v2619
      %v2660 = vmax.f32 %v2579, %v2620
      %v2661 = vmax.f32 %v2580, %v2621
      %v2662 = vmax.f32 %v2581, %v2622
      %v2663 = vmax.f32 %v2582, %v2623
      %v2664 = vmax.f32 %v2583, %v2624
      %v2665 = vmax.f32 %v2584, %v2625
      %v2666 = vmax.f32 %v2585, %v2626
      %v2667 = vmax.f32 %v2586, %v2627
      %v2668 = vmax.f32 %v2587, %v2628
      %v2669 = vmax.f32 %v2588, %v2629
      %v2670 = vmax.f32 %v2589, %v2630
      %v2671 = vmax.f32 %v2590, %v2631
      %v2672 = vmax.f32 %v2591, %v2632
      %v2673 = vmax.f32 %v2592, %v2633
      %v2674 = vmax.f32 %v2593, %v2634
      %s2675 = scalar_lea.vmem [#allocation2], 8
      %v2676 = vld [vmem:[%s2675] sm:$0x1]
      %v2677 = vld [vmem:[%s2675 + $0x1] sm:$0x1]
      %v2678 = vld [vmem:[%s2675 + $0x2] sm:$0x1]
      %v2679 = vld [vmem:[%s2675 + $0x3] sm:$0x1]
      %v2680 = vld [vmem:[%s2675 + $0x28] sm:$0x1]
      %v2681 = vld [vmem:[%s2675 + $0x29] sm:$0x1]
      %v2682 = vld [vmem:[%s2675 + $0x2a] sm:$0x1]
      %v2683 = vld [vmem:[%s2675 + $0x2b] sm:$0x1]
      %v2684 = vld [vmem:[%s2675 + $0x50] sm:$0x1]
      %v2685 = vld [vmem:[%s2675 + $0x51] sm:$0x1]
      %v2686 = vld [vmem:[%s2675 + $0x52] sm:$0x1]
      %v2687 = vld [vmem:[%s2675 + $0x53] sm:$0x1]
      %v2688 = vld [vmem:[%s2675 + $0x78] sm:$0x1]
      %v2689 = vld [vmem:[%s2675 + $0x79] sm:$0x1]
      %v2690 = vld [vmem:[%s2675 + $0x7a] sm:$0x1]
      %v2691 = vld [vmem:[%s2675 + $0x7b] sm:$0x1]
      %v2692 = vld [vmem:[%s2675 + $0xa0] sm:$0x1]
      %v2693 = vld [vmem:[%s2675 + $0xa1] sm:$0x1]
      %v2694 = vld [vmem:[%s2675 + $0xa2] sm:$0x1]
      %v2695 = vld [vmem:[%s2675 + $0xa3] sm:$0x1]
      %v2696 = vld [vmem:[%s2675 + $0xc8] sm:$0x1]
      %v2697 = vld [vmem:[%s2675 + $0xc9] sm:$0x1]
      %v2698 = vld [vmem:[%s2675 + $0xca] sm:$0x1]
      %v2699 = vld [vmem:[%s2675 + $0xcb] sm:$0x1]
      %v2700 = vld [vmem:[%s2675 + $0xf0] sm:$0x1]
      %v2701 = vld [vmem:[%s2675 + $0xf1] sm:$0x1]
      %v2702 = vld [vmem:[%s2675 + $0xf2] sm:$0x1]
      %v2703 = vld [vmem:[%s2675 + $0xf3] sm:$0x1]
      %v2704 = vld [vmem:[%s2675 + $0x118] sm:$0x1]
      %v2705 = vld [vmem:[%s2675 + $0x119] sm:$0x1]
      %v2706 = vld [vmem:[%s2675 + $0x11a] sm:$0x1]
      %v2707 = vld [vmem:[%s2675 + $0x11b] sm:$0x1]
      %v2708 = vld [vmem:[%s2675 + $0x140] sm:$0x1]
      %v2709 = vld [vmem:[%s2675 + $0x141] sm:$0x1]
      %v2710 = vld [vmem:[%s2675 + $0x142] sm:$0x1]
      %v2711 = vld [vmem:[%s2675 + $0x143] sm:$0x1]
      %v2712 = vld [vmem:[%s2675 + $0x168] sm:$0x1]
      %v2713 = vld [vmem:[%s2675 + $0x169] sm:$0x1]
      %v2714 = vld [vmem:[%s2675 + $0x16a] sm:$0x1]
      %v2715 = vld [vmem:[%s2675 + $0x16b] sm:$0x1]
      %v2716 = vmax.f32 %v2635, %v2676
      %v2717 = vmax.f32 %v2636, %v2677
      %v2718 = vmax.f32 %v2637, %v2678
      %v2719 = vmax.f32 %v2638, %v2679
      %v2720 = vmax.f32 %v2639, %v2680
      %v2721 = vmax.f32 %v2640, %v2681
      %v2722 = vmax.f32 %v2641, %v2682
      %v2723 = vmax.f32 %v2642, %v2683
      %v2724 = vmax.f32 %v2643, %v2684
      %v2725 = vmax.f32 %v2644, %v2685
      %v2726 = vmax.f32 %v2645, %v2686
      %v2727 = vmax.f32 %v2646, %v2687
      %v2728 = vmax.f32 %v2647, %v2688
      %v2729 = vmax.f32 %v2648, %v2689
      %v2730 = vmax.f32 %v2649, %v2690
      %v2731 = vmax.f32 %v2650, %v2691
      %v2732 = vmax.f32 %v2651, %v2692
      %v2733 = vmax.f32 %v2652, %v2693
      %v2734 = vmax.f32 %v2653, %v2694
      %v2735 = vmax.f32 %v2654, %v2695
      %v2736 = vmax.f32 %v2655, %v2696
      %v2737 = vmax.f32 %v2656, %v2697
      %v2738 = vmax.f32 %v2657, %v2698
      %v2739 = vmax.f32 %v2658, %v2699
      %v2740 = vmax.f32 %v2659, %v2700
      %v2741 = vmax.f32 %v2660, %v2701
      %v2742 = vmax.f32 %v2661, %v2702
      %v2743 = vmax.f32 %v2662, %v2703
      %v2744 = vmax.f32 %v2663, %v2704
      %v2745 = vmax.f32 %v2664, %v2705
      %v2746 = vmax.f32 %v2665, %v2706
      %v2747 = vmax.f32 %v2666, %v2707
      %v2748 = vmax.f32 %v2667, %v2708
      %v2749 = vmax.f32 %v2668, %v2709
      %v2750 = vmax.f32 %v2669, %v2710
      %v2751 = vmax.f32 %v2670, %v2711
      %v2752 = vmax.f32 %v2671, %v2712
      %v2753 = vmax.f32 %v2672, %v2713
      %v2754 = vmax.f32 %v2673, %v2714
      %v2755 = vmax.f32 %v2674, %v2715
      %2756 = vst [vmem:[#allocation3] sm:$0x1] %v2716
      %2757 = vst [vmem:[#allocation3 + $0x1] sm:$0x1] %v2717
      %2758 = vst [vmem:[#allocation3 + $0x2] sm:$0x1] %v2718
      %2759 = vst [vmem:[#allocation3 + $0x3] sm:$0x1] %v2719
      %2760 = vst [vmem:[#allocation3 + $0x10] sm:$0x1] %v2720
      %2761 = vst [vmem:[#allocation3 + $0x11] sm:$0x1] %v2721
      %2762 = vst [vmem:[#allocation3 + $0x12] sm:$0x1] %v2722
      %2763 = vst [vmem:[#allocation3 + $0x13] sm:$0x1] %v2723
      %2764 = vst [vmem:[#allocation3 + $0x20] sm:$0x1] %v2724
      %2765 = vst [vmem:[#allocation3 + $0x21] sm:$0x1] %v2725
      %2766 = vst [vmem:[#allocation3 + $0x22] sm:$0x1] %v2726
      %2767 = vst [vmem:[#allocation3 + $0x23] sm:$0x1] %v2727
      %2768 = vst [vmem:[#allocation3 + $0x30] sm:$0x1] %v2728
      %2769 = vst [vmem:[#allocation3 + $0x31] sm:$0x1] %v2729
      %2770 = vst [vmem:[#allocation3 + $0x32] sm:$0x1] %v2730
      %2771 = vst [vmem:[#allocation3 + $0x33] sm:$0x1] %v2731
      %2772 = vst [vmem:[#allocation3 + $0x40] sm:$0x1] %v2732
      %2773 = vst [vmem:[#allocation3 + $0x41] sm:$0x1] %v2733
      %2774 = vst [vmem:[#allocation3 + $0x42] sm:$0x1] %v2734
      %2775 = vst [vmem:[#allocation3 + $0x43] sm:$0x1] %v2735
      %2776 = vst [vmem:[#allocation3 + $0x50] sm:$0x1] %v2736
      %2777 = vst [vmem:[#allocation3 + $0x51] sm:$0x1] %v2737
      %2778 = vst [vmem:[#allocation3 + $0x52] sm:$0x1] %v2738
      %2779 = vst [vmem:[#allocation3 + $0x53] sm:$0x1] %v2739
      %2780 = vst [vmem:[#allocation3 + $0x60] sm:$0x1] %v2740
      %2781 = vst [vmem:[#allocation3 + $0x61] sm:$0x1] %v2741
      %2782 = vst [vmem:[#allocation3 + $0x62] sm:$0x1] %v2742
      %2783 = vst [vmem:[#allocation3 + $0x63] sm:$0x1] %v2743
      %2784 = vst [vmem:[#allocation3 + $0x70] sm:$0x1] %v2744
      %2785 = vst [vmem:[#allocation3 + $0x71] sm:$0x1] %v2745
      %2786 = vst [vmem:[#allocation3 + $0x72] sm:$0x1] %v2746
      %2787 = vst [vmem:[#allocation3 + $0x73] sm:$0x1] %v2747
      %2788 = vst [vmem:[#allocation3 + $0x80] sm:$0x1] %v2748
      %2789 = vst [vmem:[#allocation3 + $0x81] sm:$0x1] %v2749
      %2790 = vst [vmem:[#allocation3 + $0x82] sm:$0x1] %v2750
      %2791 = vst [vmem:[#allocation3 + $0x83] sm:$0x1] %v2751
      %2792 = vst [vmem:[#allocation3 + $0x90] sm:$0x1] %v2752
      %2793 = vst [vmem:[#allocation3 + $0x91] sm:$0x1] %v2753
      %2794 = vst [vmem:[#allocation3 + $0x92] sm:$0x1] %v2754
      %2795 = vst [vmem:[#allocation3 + $0x93] sm:$0x1] %v2755
      %v2796 = vld [vmem:[%s2675] sm:$0x1]
      %v2797 = vld [vmem:[%s2675 + $0x1] sm:$0x1]
      %v2798 = vld [vmem:[%s2675 + $0x2] sm:$0x1]
      %v2799 = vld [vmem:[%s2675 + $0x3] sm:$0x1]
      %v2800 = vld [vmem:[%s2675 + $0x28] sm:$0x1]
      %v2801 = vld [vmem:[%s2675 + $0x29] sm:$0x1]
      %v2802 = vld [vmem:[%s2675 + $0x2a] sm:$0x1]
      %v2803 = vld [vmem:[%s2675 + $0x2b] sm:$0x1]
      %v2804 = vld [vmem:[%s2675 + $0x50] sm:$0x1]
      %v2805 = vld [vmem:[%s2675 + $0x51] sm:$0x1]
      %v2806 = vld [vmem:[%s2675 + $0x52] sm:$0x1]
      %v2807 = vld [vmem:[%s2675 + $0x53] sm:$0x1]
      %v2808 = vld [vmem:[%s2675 + $0x78] sm:$0x1]
      %v2809 = vld [vmem:[%s2675 + $0x79] sm:$0x1]
      %v2810 = vld [vmem:[%s2675 + $0x7a] sm:$0x1]
      %v2811 = vld [vmem:[%s2675 + $0x7b] sm:$0x1]
      %v2812 = vld [vmem:[%s2675 + $0xa0] sm:$0x1]
      %v2813 = vld [vmem:[%s2675 + $0xa1] sm:$0x1]
      %v2814 = vld [vmem:[%s2675 + $0xa2] sm:$0x1]
      %v2815 = vld [vmem:[%s2675 + $0xa3] sm:$0x1]
      %v2816 = vld [vmem:[%s2675 + $0xc8] sm:$0x1]
      %v2817 = vld [vmem:[%s2675 + $0xc9] sm:$0x1]
      %v2818 = vld [vmem:[%s2675 + $0xca] sm:$0x1]
      %v2819 = vld [vmem:[%s2675 + $0xcb] sm:$0x1]
      %v2820 = vld [vmem:[%s2675 + $0xf0] sm:$0x1]
      %v2821 = vld [vmem:[%s2675 + $0xf1] sm:$0x1]
      %v2822 = vld [vmem:[%s2675 + $0xf2] sm:$0x1]
      %v2823 = vld [vmem:[%s2675 + $0xf3] sm:$0x1]
      %v2824 = vld [vmem:[%s2675 + $0x118] sm:$0x1]
      %v2825 = vld [vmem:[%s2675 + $0x119] sm:$0x1]
      %v2826 = vld [vmem:[%s2675 + $0x11a] sm:$0x1]
      %v2827 = vld [vmem:[%s2675 + $0x11b] sm:$0x1]
      %v2828 = vld [vmem:[%s2675 + $0x140] sm:$0x1]
      %v2829 = vld [vmem:[%s2675 + $0x141] sm:$0x1]
      %v2830 = vld [vmem:[%s2675 + $0x142] sm:$0x1]
      %v2831 = vld [vmem:[%s2675 + $0x143] sm:$0x1]
      %v2832 = vld [vmem:[%s2675 + $0x168] sm:$0x1]
      %v2833 = vld [vmem:[%s2675 + $0x169] sm:$0x1]
      %v2834 = vld [vmem:[%s2675 + $0x16a] sm:$0x1]
      %v2835 = vld [vmem:[%s2675 + $0x16b] sm:$0x1]
      %s2836 = scalar_lea.vmem [#allocation2], 12
      %v2837 = vld [vmem:[%s2836] sm:$0x1]
      %v2838 = vld [vmem:[%s2836 + $0x1] sm:$0x1]
      %v2839 = vld [vmem:[%s2836 + $0x2] sm:$0x1]
      %v2840 = vld [vmem:[%s2836 + $0x3] sm:$0x1]
      %v2841 = vld [vmem:[%s2836 + $0x28] sm:$0x1]
      %v2842 = vld [vmem:[%s2836 + $0x29] sm:$0x1]
      %v2843 = vld [vmem:[%s2836 + $0x2a] sm:$0x1]
      %v2844 = vld [vmem:[%s2836 + $0x2b] sm:$0x1]
      %v2845 = vld [vmem:[%s2836 + $0x50] sm:$0x1]
      %v2846 = vld [vmem:[%s2836 + $0x51] sm:$0x1]
      %v2847 = vld [vmem:[%s2836 + $0x52] sm:$0x1]
      %v2848 = vld [vmem:[%s2836 + $0x53] sm:$0x1]
      %v2849 = vld [vmem:[%s2836 + $0x78] sm:$0x1]
      %v2850 = vld [vmem:[%s2836 + $0x79] sm:$0x1]
      %v2851 = vld [vmem:[%s2836 + $0x7a] sm:$0x1]
      %v2852 = vld [vmem:[%s2836 + $0x7b] sm:$0x1]
      %v2853 = vld [vmem:[%s2836 + $0xa0] sm:$0x1]
      %v2854 = vld [vmem:[%s2836 + $0xa1] sm:$0x1]
      %v2855 = vld [vmem:[%s2836 + $0xa2] sm:$0x1]
      %v2856 = vld [vmem:[%s2836 + $0xa3] sm:$0x1]
      %v2857 = vld [vmem:[%s2836 + $0xc8] sm:$0x1]
      %v2858 = vld [vmem:[%s2836 + $0xc9] sm:$0x1]
      %v2859 = vld [vmem:[%s2836 + $0xca] sm:$0x1]
      %v2860 = vld [vmem:[%s2836 + $0xcb] sm:$0x1]
      %v2861 = vld [vmem:[%s2836 + $0xf0] sm:$0x1]
      %v2862 = vld [vmem:[%s2836 + $0xf1] sm:$0x1]
      %v2863 = vld [vmem:[%s2836 + $0xf2] sm:$0x1]
      %v2864 = vld [vmem:[%s2836 + $0xf3] sm:$0x1]
      %v2865 = vld [vmem:[%s2836 + $0x118] sm:$0x1]
      %v2866 = vld [vmem:[%s2836 + $0x119] sm:$0x1]
      %v2867 = vld [vmem:[%s2836 + $0x11a] sm:$0x1]
      %v2868 = vld [vmem:[%s2836 + $0x11b] sm:$0x1]
      %v2869 = vld [vmem:[%s2836 + $0x140] sm:$0x1]
      %v2870 = vld [vmem:[%s2836 + $0x141] sm:$0x1]
      %v2871 = vld [vmem:[%s2836 + $0x142] sm:$0x1]
      %v2872 = vld [vmem:[%s2836 + $0x143] sm:$0x1]
      %v2873 = vld [vmem:[%s2836 + $0x168] sm:$0x1]
      %v2874 = vld [vmem:[%s2836 + $0x169] sm:$0x1]
      %v2875 = vld [vmem:[%s2836 + $0x16a] sm:$0x1]
      %v2876 = vld [vmem:[%s2836 + $0x16b] sm:$0x1]
      %v2877 = vmax.f32 %v2796, %v2837
      %v2878 = vmax.f32 %v2797, %v2838
      %v2879 = vmax.f32 %v2798, %v2839
      %v2880 = vmax.f32 %v2799, %v2840
      %v2881 = vmax.f32 %v2800, %v2841
      %v2882 = vmax.f32 %v2801, %v2842
      %v2883 = vmax.f32 %v2802, %v2843
      %v2884 = vmax.f32 %v2803, %v2844
      %v2885 = vmax.f32 %v2804, %v2845
      %v2886 = vmax.f32 %v2805, %v2846
      %v2887 = vmax.f32 %v2806, %v2847
      %v2888 = vmax.f32 %v2807, %v2848
      %v2889 = vmax.f32 %v2808, %v2849
      %v2890 = vmax.f32 %v2809, %v2850
      %v2891 = vmax.f32 %v2810, %v2851
      %v2892 = vmax.f32 %v2811, %v2852
      %v2893 = vmax.f32 %v2812, %v2853
      %v2894 = vmax.f32 %v2813, %v2854
      %v2895 = vmax.f32 %v2814, %v2855
      %v2896 = vmax.f32 %v2815, %v2856
      %v2897 = vmax.f32 %v2816, %v2857
      %v2898 = vmax.f32 %v2817, %v2858
      %v2899 = vmax.f32 %v2818, %v2859
      %v2900 = vmax.f32 %v2819, %v2860
      %v2901 = vmax.f32 %v2820, %v2861
      %v2902 = vmax.f32 %v2821, %v2862
      %v2903 = vmax.f32 %v2822, %v2863
      %v2904 = vmax.f32 %v2823, %v2864
      %v2905 = vmax.f32 %v2824, %v2865
      %v2906 = vmax.f32 %v2825, %v2866
      %v2907 = vmax.f32 %v2826, %v2867
      %v2908 = vmax.f32 %v2827, %v2868
      %v2909 = vmax.f32 %v2828, %v2869
      %v2910 = vmax.f32 %v2829, %v2870
      %v2911 = vmax.f32 %v2830, %v2871
      %v2912 = vmax.f32 %v2831, %v2872
      %v2913 = vmax.f32 %v2832, %v2873
      %v2914 = vmax.f32 %v2833, %v2874
      %v2915 = vmax.f32 %v2834, %v2875
      %v2916 = vmax.f32 %v2835, %v2876
      %s2917 = scalar_lea.vmem [#allocation2], 16
      %v2918 = vld [vmem:[%s2917] sm:$0x1]
      %v2919 = vld [vmem:[%s2917 + $0x1] sm:$0x1]
      %v2920 = vld [vmem:[%s2917 + $0x2] sm:$0x1]
      %v2921 = vld [vmem:[%s2917 + $0x3] sm:$0x1]
      %v2922 = vld [vmem:[%s2917 + $0x28] sm:$0x1]
      %v2923 = vld [vmem:[%s2917 + $0x29] sm:$0x1]
      %v2924 = vld [vmem:[%s2917 + $0x2a] sm:$0x1]
      %v2925 = vld [vmem:[%s2917 + $0x2b] sm:$0x1]
      %v2926 = vld [vmem:[%s2917 + $0x50] sm:$0x1]
      %v2927 = vld [vmem:[%s2917 + $0x51] sm:$0x1]
      %v2928 = vld [vmem:[%s2917 + $0x52] sm:$0x1]
      %v2929 = vld [vmem:[%s2917 + $0x53] sm:$0x1]
      %v2930 = vld [vmem:[%s2917 + $0x78] sm:$0x1]
      %v2931 = vld [vmem:[%s2917 + $0x79] sm:$0x1]
      %v2932 = vld [vmem:[%s2917 + $0x7a] sm:$0x1]
      %v2933 = vld [vmem:[%s2917 + $0x7b] sm:$0x1]
      %v2934 = vld [vmem:[%s2917 + $0xa0] sm:$0x1]
      %v2935 = vld [vmem:[%s2917 + $0xa1] sm:$0x1]
      %v2936 = vld [vmem:[%s2917 + $0xa2] sm:$0x1]
      %v2937 = vld [vmem:[%s2917 + $0xa3] sm:$0x1]
      %v2938 = vld [vmem:[%s2917 + $0xc8] sm:$0x1]
      %v2939 = vld [vmem:[%s2917 + $0xc9] sm:$0x1]
      %v2940 = vld [vmem:[%s2917 + $0xca] sm:$0x1]
      %v2941 = vld [vmem:[%s2917 + $0xcb] sm:$0x1]
      %v2942 = vld [vmem:[%s2917 + $0xf0] sm:$0x1]
      %v2943 = vld [vmem:[%s2917 + $0xf1] sm:$0x1]
      %v2944 = vld [vmem:[%s2917 + $0xf2] sm:$0x1]
      %v2945 = vld [vmem:[%s2917 + $0xf3] sm:$0x1]
      %v2946 = vld [vmem:[%s2917 + $0x118] sm:$0x1]
      %v2947 = vld [vmem:[%s2917 + $0x119] sm:$0x1]
      %v2948 = vld [vmem:[%s2917 + $0x11a] sm:$0x1]
      %v2949 = vld [vmem:[%s2917 + $0x11b] sm:$0x1]
      %v2950 = vld [vmem:[%s2917 + $0x140] sm:$0x1]
      %v2951 = vld [vmem:[%s2917 + $0x141] sm:$0x1]
      %v2952 = vld [vmem:[%s2917 + $0x142] sm:$0x1]
      %v2953 = vld [vmem:[%s2917 + $0x143] sm:$0x1]
      %v2954 = vld [vmem:[%s2917 + $0x168] sm:$0x1]
      %v2955 = vld [vmem:[%s2917 + $0x169] sm:$0x1]
      %v2956 = vld [vmem:[%s2917 + $0x16a] sm:$0x1]
      %v2957 = vld [vmem:[%s2917 + $0x16b] sm:$0x1]
      %v2958 = vmax.f32 %v2877, %v2918
      %v2959 = vmax.f32 %v2878, %v2919
      %v2960 = vmax.f32 %v2879, %v2920
      %v2961 = vmax.f32 %v2880, %v2921
      %v2962 = vmax.f32 %v2881, %v2922
      %v2963 = vmax.f32 %v2882, %v2923
      %v2964 = vmax.f32 %v2883, %v2924
      %v2965 = vmax.f32 %v2884, %v2925
      %v2966 = vmax.f32 %v2885, %v2926
      %v2967 = vmax.f32 %v2886, %v2927
      %v2968 = vmax.f32 %v2887, %v2928
      %v2969 = vmax.f32 %v2888, %v2929
      %v2970 = vmax.f32 %v2889, %v2930
      %v2971 = vmax.f32 %v2890, %v2931
      %v2972 = vmax.f32 %v2891, %v2932
      %v2973 = vmax.f32 %v2892, %v2933
      %v2974 = vmax.f32 %v2893, %v2934
      %v2975 = vmax.f32 %v2894, %v2935
      %v2976 = vmax.f32 %v2895, %v2936
      %v2977 = vmax.f32 %v2896, %v2937
      %v2978 = vmax.f32 %v2897, %v2938
      %v2979 = vmax.f32 %v2898, %v2939
      %v2980 = vmax.f32 %v2899, %v2940
      %v2981 = vmax.f32 %v2900, %v2941
      %v2982 = vmax.f32 %v2901, %v2942
      %v2983 = vmax.f32 %v2902, %v2943
      %v2984 = vmax.f32 %v2903, %v2944
      %v2985 = vmax.f32 %v2904, %v2945
      %v2986 = vmax.f32 %v2905, %v2946
      %v2987 = vmax.f32 %v2906, %v2947
      %v2988 = vmax.f32 %v2907, %v2948
      %v2989 = vmax.f32 %v2908, %v2949
      %v2990 = vmax.f32 %v2909, %v2950
      %v2991 = vmax.f32 %v2910, %v2951
      %v2992 = vmax.f32 %v2911, %v2952
      %v2993 = vmax.f32 %v2912, %v2953
      %v2994 = vmax.f32 %v2913, %v2954
      %v2995 = vmax.f32 %v2914, %v2955
      %v2996 = vmax.f32 %v2915, %v2956
      %v2997 = vmax.f32 %v2916, %v2957
      %s2998 = scalar_lea.vmem [#allocation3], 4
      %2999 = vst [vmem:[%s2998] sm:$0x1] %v2958
      %3000 = vst [vmem:[%s2998 + $0x1] sm:$0x1] %v2959
      %3001 = vst [vmem:[%s2998 + $0x2] sm:$0x1] %v2960
      %3002 = vst [vmem:[%s2998 + $0x3] sm:$0x1] %v2961
      %3003 = vst [vmem:[%s2998 + $0x10] sm:$0x1] %v2962
      %3004 = vst [vmem:[%s2998 + $0x11] sm:$0x1] %v2963
      %3005 = vst [vmem:[%s2998 + $0x12] sm:$0x1] %v2964
      %3006 = vst [vmem:[%s2998 + $0x13] sm:$0x1] %v2965
      %3007 = vst [vmem:[%s2998 + $0x20] sm:$0x1] %v2966
      %3008 = vst [vmem:[%s2998 + $0x21] sm:$0x1] %v2967
      %3009 = vst [vmem:[%s2998 + $0x22] sm:$0x1] %v2968
      %3010 = vst [vmem:[%s2998 + $0x23] sm:$0x1] %v2969
      %3011 = vst [vmem:[%s2998 + $0x30] sm:$0x1] %v2970
      %3012 = vst [vmem:[%s2998 + $0x31] sm:$0x1] %v2971
      %3013 = vst [vmem:[%s2998 + $0x32] sm:$0x1] %v2972
      %3014 = vst [vmem:[%s2998 + $0x33] sm:$0x1] %v2973
      %3015 = vst [vmem:[%s2998 + $0x40] sm:$0x1] %v2974
      %3016 = vst [vmem:[%s2998 + $0x41] sm:$0x1] %v2975
      %3017 = vst [vmem:[%s2998 + $0x42] sm:$0x1] %v2976
      %3018 = vst [vmem:[%s2998 + $0x43] sm:$0x1] %v2977
      %3019 = vst [vmem:[%s2998 + $0x50] sm:$0x1] %v2978
      %3020 = vst [vmem:[%s2998 + $0x51] sm:$0x1] %v2979
      %3021 = vst [vmem:[%s2998 + $0x52] sm:$0x1] %v2980
      %3022 = vst [vmem:[%s2998 + $0x53] sm:$0x1] %v2981
      %3023 = vst [vmem:[%s2998 + $0x60] sm:$0x1] %v2982
      %3024 = vst [vmem:[%s2998 + $0x61] sm:$0x1] %v2983
      %3025 = vst [vmem:[%s2998 + $0x62] sm:$0x1] %v2984
      %3026 = vst [vmem:[%s2998 + $0x63] sm:$0x1] %v2985
      %3027 = vst [vmem:[%s2998 + $0x70] sm:$0x1] %v2986
      %3028 = vst [vmem:[%s2998 + $0x71] sm:$0x1] %v2987
      %3029 = vst [vmem:[%s2998 + $0x72] sm:$0x1] %v2988
      %3030 = vst [vmem:[%s2998 + $0x73] sm:$0x1] %v2989
      %3031 = vst [vmem:[%s2998 + $0x80] sm:$0x1] %v2990
      %3032 = vst [vmem:[%s2998 + $0x81] sm:$0x1] %v2991
      %3033 = vst [vmem:[%s2998 + $0x82] sm:$0x1] %v2992
      %3034 = vst [vmem:[%s2998 + $0x83] sm:$0x1] %v2993
      %3035 = vst [vmem:[%s2998 + $0x90] sm:$0x1] %v2994
      %3036 = vst [vmem:[%s2998 + $0x91] sm:$0x1] %v2995
      %3037 = vst [vmem:[%s2998 + $0x92] sm:$0x1] %v2996
      %3038 = vst [vmem:[%s2998 + $0x93] sm:$0x1] %v2997
      %v3039 = vld [vmem:[%s2917] sm:$0x1]
      %v3040 = vld [vmem:[%s2917 + $0x1] sm:$0x1]
      %v3041 = vld [vmem:[%s2917 + $0x2] sm:$0x1]
      %v3042 = vld [vmem:[%s2917 + $0x3] sm:$0x1]
      %v3043 = vld [vmem:[%s2917 + $0x28] sm:$0x1]
      %v3044 = vld [vmem:[%s2917 + $0x29] sm:$0x1]
      %v3045 = vld [vmem:[%s2917 + $0x2a] sm:$0x1]
      %v3046 = vld [vmem:[%s2917 + $0x2b] sm:$0x1]
      %v3047 = vld [vmem:[%s2917 + $0x50] sm:$0x1]
      %v3048 = vld [vmem:[%s2917 + $0x51] sm:$0x1]
      %v3049 = vld [vmem:[%s2917 + $0x52] sm:$0x1]
      %v3050 = vld [vmem:[%s2917 + $0x53] sm:$0x1]
      %v3051 = vld [vmem:[%s2917 + $0x78] sm:$0x1]
      %v3052 = vld [vmem:[%s2917 + $0x79] sm:$0x1]
      %v3053 = vld [vmem:[%s2917 + $0x7a] sm:$0x1]
      %v3054 = vld [vmem:[%s2917 + $0x7b] sm:$0x1]
      %v3055 = vld [vmem:[%s2917 + $0xa0] sm:$0x1]
      %v3056 = vld [vmem:[%s2917 + $0xa1] sm:$0x1]
      %v3057 = vld [vmem:[%s2917 + $0xa2] sm:$0x1]
      %v3058 = vld [vmem:[%s2917 + $0xa3] sm:$0x1]
      %v3059 = vld [vmem:[%s2917 + $0xc8] sm:$0x1]
      %v3060 = vld [vmem:[%s2917 + $0xc9] sm:$0x1]
      %v3061 = vld [vmem:[%s2917 + $0xca] sm:$0x1]
      %v3062 = vld [vmem:[%s2917 + $0xcb] sm:$0x1]
      %v3063 = vld [vmem:[%s2917 + $0xf0] sm:$0x1]
      %v3064 = vld [vmem:[%s2917 + $0xf1] sm:$0x1]
      %v3065 = vld [vmem:[%s2917 + $0xf2] sm:$0x1]
      %v3066 = vld [vmem:[%s2917 + $0xf3] sm:$0x1]
      %v3067 = vld [vmem:[%s2917 + $0x118] sm:$0x1]
      %v3068 = vld [vmem:[%s2917 + $0x119] sm:$0x1]
      %v3069 = vld [vmem:[%s2917 + $0x11a] sm:$0x1]
      %v3070 = vld [vmem:[%s2917 + $0x11b] sm:$0x1]
      %v3071 = vld [vmem:[%s2917 + $0x140] sm:$0x1]
      %v3072 = vld [vmem:[%s2917 + $0x141] sm:$0x1]
      %v3073 = vld [vmem:[%s2917 + $0x142] sm:$0x1]
      %v3074 = vld [vmem:[%s2917 + $0x143] sm:$0x1]
      %v3075 = vld [vmem:[%s2917 + $0x168] sm:$0x1]
      %v3076 = vld [vmem:[%s2917 + $0x169] sm:$0x1]
      %v3077 = vld [vmem:[%s2917 + $0x16a] sm:$0x1]
      %v3078 = vld [vmem:[%s2917 + $0x16b] sm:$0x1]
      %s3079 = scalar_lea.vmem [#allocation2], 20
      %v3080 = vld [vmem:[%s3079] sm:$0x1]
      %v3081 = vld [vmem:[%s3079 + $0x1] sm:$0x1]
      %v3082 = vld [vmem:[%s3079 + $0x2] sm:$0x1]
      %v3083 = vld [vmem:[%s3079 + $0x3] sm:$0x1]
      %v3084 = vld [vmem:[%s3079 + $0x28] sm:$0x1]
      %v3085 = vld [vmem:[%s3079 + $0x29] sm:$0x1]
      %v3086 = vld [vmem:[%s3079 + $0x2a] sm:$0x1]
      %v3087 = vld [vmem:[%s3079 + $0x2b] sm:$0x1]
      %v3088 = vld [vmem:[%s3079 + $0x50] sm:$0x1]
      %v3089 = vld [vmem:[%s3079 + $0x51] sm:$0x1]
      %v3090 = vld [vmem:[%s3079 + $0x52] sm:$0x1]
      %v3091 = vld [vmem:[%s3079 + $0x53] sm:$0x1]
      %v3092 = vld [vmem:[%s3079 + $0x78] sm:$0x1]
      %v3093 = vld [vmem:[%s3079 + $0x79] sm:$0x1]
      %v3094 = vld [vmem:[%s3079 + $0x7a] sm:$0x1]
      %v3095 = vld [vmem:[%s3079 + $0x7b] sm:$0x1]
      %v3096 = vld [vmem:[%s3079 + $0xa0] sm:$0x1]
      %v3097 = vld [vmem:[%s3079 + $0xa1] sm:$0x1]
      %v3098 = vld [vmem:[%s3079 + $0xa2] sm:$0x1]
      %v3099 = vld [vmem:[%s3079 + $0xa3] sm:$0x1]
      %v3100 = vld [vmem:[%s3079 + $0xc8] sm:$0x1]
      %v3101 = vld [vmem:[%s3079 + $0xc9] sm:$0x1]
      %v3102 = vld [vmem:[%s3079 + $0xca] sm:$0x1]
      %v3103 = vld [vmem:[%s3079 + $0xcb] sm:$0x1]
      %v3104 = vld [vmem:[%s3079 + $0xf0] sm:$0x1]
      %v3105 = vld [vmem:[%s3079 + $0xf1] sm:$0x1]
      %v3106 = vld [vmem:[%s3079 + $0xf2] sm:$0x1]
      %v3107 = vld [vmem:[%s3079 + $0xf3] sm:$0x1]
      %v3108 = vld [vmem:[%s3079 + $0x118] sm:$0x1]
      %v3109 = vld [vmem:[%s3079 + $0x119] sm:$0x1]
      %v3110 = vld [vmem:[%s3079 + $0x11a] sm:$0x1]
      %v3111 = vld [vmem:[%s3079 + $0x11b] sm:$0x1]
      %v3112 = vld [vmem:[%s3079 + $0x140] sm:$0x1]
      %v3113 = vld [vmem:[%s3079 + $0x141] sm:$0x1]
      %v3114 = vld [vmem:[%s3079 + $0x142] sm:$0x1]
      %v3115 = vld [vmem:[%s3079 + $0x143] sm:$0x1]
      %v3116 = vld [vmem:[%s3079 + $0x168] sm:$0x1]
      %v3117 = vld [vmem:[%s3079 + $0x169] sm:$0x1]
      %v3118 = vld [vmem:[%s3079 + $0x16a] sm:$0x1]
      %v3119 = vld [vmem:[%s3079 + $0x16b] sm:$0x1]
      %v3120 = vmax.f32 %v3039, %v3080
      %v3121 = vmax.f32 %v3040, %v3081
      %v3122 = vmax.f32 %v3041, %v3082
      %v3123 = vmax.f32 %v3042, %v3083
      %v3124 = vmax.f32 %v3043, %v3084
      %v3125 = vmax.f32 %v3044, %v3085
      %v3126 = vmax.f32 %v3045, %v3086
      %v3127 = vmax.f32 %v3046, %v3087
      %v3128 = vmax.f32 %v3047, %v3088
      %v3129 = vmax.f32 %v3048, %v3089
      %v3130 = vmax.f32 %v3049, %v3090
      %v3131 = vmax.f32 %v3050, %v3091
      %v3132 = vmax.f32 %v3051, %v3092
      %v3133 = vmax.f32 %v3052, %v3093
      %v3134 = vmax.f32 %v3053, %v3094
      %v3135 = vmax.f32 %v3054, %v3095
      %v3136 = vmax.f32 %v3055, %v3096
      %v3137 = vmax.f32 %v3056, %v3097
      %v3138 = vmax.f32 %v3057, %v3098
      %v3139 = vmax.f32 %v3058, %v3099
      %v3140 = vmax.f32 %v3059, %v3100
      %v3141 = vmax.f32 %v3060, %v3101
      %v3142 = vmax.f32 %v3061, %v3102
      %v3143 = vmax.f32 %v3062, %v3103
      %v3144 = vmax.f32 %v3063, %v3104
      %v3145 = vmax.f32 %v3064, %v3105
      %v3146 = vmax.f32 %v3065, %v3106
      %v3147 = vmax.f32 %v3066, %v3107
      %v3148 = vmax.f32 %v3067, %v3108
      %v3149 = vmax.f32 %v3068, %v3109
      %v3150 = vmax.f32 %v3069, %v3110
      %v3151 = vmax.f32 %v3070, %v3111
      %v3152 = vmax.f32 %v3071, %v3112
      %v3153 = vmax.f32 %v3072, %v3113
      %v3154 = vmax.f32 %v3073, %v3114
      %v3155 = vmax.f32 %v3074, %v3115
      %v3156 = vmax.f32 %v3075, %v3116
      %v3157 = vmax.f32 %v3076, %v3117
      %v3158 = vmax.f32 %v3077, %v3118
      %v3159 = vmax.f32 %v3078, %v3119
      %s3160 = scalar_lea.vmem [#allocation2], 24
      %v3161 = vld [vmem:[%s3160] sm:$0x1]
      %v3162 = vld [vmem:[%s3160 + $0x1] sm:$0x1]
      %v3163 = vld [vmem:[%s3160 + $0x2] sm:$0x1]
      %v3164 = vld [vmem:[%s3160 + $0x3] sm:$0x1]
      %v3165 = vld [vmem:[%s3160 + $0x28] sm:$0x1]
      %v3166 = vld [vmem:[%s3160 + $0x29] sm:$0x1]
      %v3167 = vld [vmem:[%s3160 + $0x2a] sm:$0x1]
      %v3168 = vld [vmem:[%s3160 + $0x2b] sm:$0x1]
      %v3169 = vld [vmem:[%s3160 + $0x50] sm:$0x1]
      %v3170 = vld [vmem:[%s3160 + $0x51] sm:$0x1]
      %v3171 = vld [vmem:[%s3160 + $0x52] sm:$0x1]
      %v3172 = vld [vmem:[%s3160 + $0x53] sm:$0x1]
      %v3173 = vld [vmem:[%s3160 + $0x78] sm:$0x1]
      %v3174 = vld [vmem:[%s3160 + $0x79] sm:$0x1]
      %v3175 = vld [vmem:[%s3160 + $0x7a] sm:$0x1]
      %v3176 = vld [vmem:[%s3160 + $0x7b] sm:$0x1]
      %v3177 = vld [vmem:[%s3160 + $0xa0] sm:$0x1]
      %v3178 = vld [vmem:[%s3160 + $0xa1] sm:$0x1]
      %v3179 = vld [vmem:[%s3160 + $0xa2] sm:$0x1]
      %v3180 = vld [vmem:[%s3160 + $0xa3] sm:$0x1]
      %v3181 = vld [vmem:[%s3160 + $0xc8] sm:$0x1]
      %v3182 = vld [vmem:[%s3160 + $0xc9] sm:$0x1]
      %v3183 = vld [vmem:[%s3160 + $0xca] sm:$0x1]
      %v3184 = vld [vmem:[%s3160 + $0xcb] sm:$0x1]
      %v3185 = vld [vmem:[%s3160 + $0xf0] sm:$0x1]
      %v3186 = vld [vmem:[%s3160 + $0xf1] sm:$0x1]
      %v3187 = vld [vmem:[%s3160 + $0xf2] sm:$0x1]
      %v3188 = vld [vmem:[%s3160 + $0xf3] sm:$0x1]
      %v3189 = vld [vmem:[%s3160 + $0x118] sm:$0x1]
      %v3190 = vld [vmem:[%s3160 + $0x119] sm:$0x1]
      %v3191 = vld [vmem:[%s3160 + $0x11a] sm:$0x1]
      %v3192 = vld [vmem:[%s3160 + $0x11b] sm:$0x1]
      %v3193 = vld [vmem:[%s3160 + $0x140] sm:$0x1]
      %v3194 = vld [vmem:[%s3160 + $0x141] sm:$0x1]
      %v3195 = vld [vmem:[%s3160 + $0x142] sm:$0x1]
      %v3196 = vld [vmem:[%s3160 + $0x143] sm:$0x1]
      %v3197 = vld [vmem:[%s3160 + $0x168] sm:$0x1]
      %v3198 = vld [vmem:[%s3160 + $0x169] sm:$0x1]
      %v3199 = vld [vmem:[%s3160 + $0x16a] sm:$0x1]
      %v3200 = vld [vmem:[%s3160 + $0x16b] sm:$0x1]
      %v3201 = vmax.f32 %v3120, %v3161
      %v3202 = vmax.f32 %v3121, %v3162
      %v3203 = vmax.f32 %v3122, %v3163
      %v3204 = vmax.f32 %v3123, %v3164
      %v3205 = vmax.f32 %v3124, %v3165
      %v3206 = vmax.f32 %v3125, %v3166
      %v3207 = vmax.f32 %v3126, %v3167
      %v3208 = vmax.f32 %v3127, %v3168
      %v3209 = vmax.f32 %v3128, %v3169
      %v3210 = vmax.f32 %v3129, %v3170
      %v3211 = vmax.f32 %v3130, %v3171
      %v3212 = vmax.f32 %v3131, %v3172
      %v3213 = vmax.f32 %v3132, %v3173
      %v3214 = vmax.f32 %v3133, %v3174
      %v3215 = vmax.f32 %v3134, %v3175
      %v3216 = vmax.f32 %v3135, %v3176
      %v3217 = vmax.f32 %v3136, %v3177
      %v3218 = vmax.f32 %v3137, %v3178
      %v3219 = vmax.f32 %v3138, %v3179
      %v3220 = vmax.f32 %v3139, %v3180
      %v3221 = vmax.f32 %v3140, %v3181
      %v3222 = vmax.f32 %v3141, %v3182
      %v3223 = vmax.f32 %v3142, %v3183
      %v3224 = vmax.f32 %v3143, %v3184
      %v3225 = vmax.f32 %v3144, %v3185
      %v3226 = vmax.f32 %v3145, %v3186
      %v3227 = vmax.f32 %v3146, %v3187
      %v3228 = vmax.f32 %v3147, %v3188
      %v3229 = vmax.f32 %v3148, %v3189
      %v3230 = vmax.f32 %v3149, %v3190
      %v3231 = vmax.f32 %v3150, %v3191
      %v3232 = vmax.f32 %v3151, %v3192
      %v3233 = vmax.f32 %v3152, %v3193
      %v3234 = vmax.f32 %v3153, %v3194
      %v3235 = vmax.f32 %v3154, %v3195
      %v3236 = vmax.f32 %v3155, %v3196
      %v3237 = vmax.f32 %v3156, %v3197
      %v3238 = vmax.f32 %v3157, %v3198
      %v3239 = vmax.f32 %v3158, %v3199
      %v3240 = vmax.f32 %v3159, %v3200
      %s3241 = scalar_lea.vmem [#allocation3], 8
      %3242 = vst [vmem:[%s3241] sm:$0x1] %v3201
      %3243 = vst [vmem:[%s3241 + $0x1] sm:$0x1] %v3202
      %3244 = vst [vmem:[%s3241 + $0x2] sm:$0x1] %v3203
      %3245 = vst [vmem:[%s3241 + $0x3] sm:$0x1] %v3204
      %3246 = vst [vmem:[%s3241 + $0x10] sm:$0x1] %v3205
      %3247 = vst [vmem:[%s3241 + $0x11] sm:$0x1] %v3206
      %3248 = vst [vmem:[%s3241 + $0x12] sm:$0x1] %v3207
      %3249 = vst [vmem:[%s3241 + $0x13] sm:$0x1] %v3208
      %3250 = vst [vmem:[%s3241 + $0x20] sm:$0x1] %v3209
      %3251 = vst [vmem:[%s3241 + $0x21] sm:$0x1] %v3210
      %3252 = vst [vmem:[%s3241 + $0x22] sm:$0x1] %v3211
      %3253 = vst [vmem:[%s3241 + $0x23] sm:$0x1] %v3212
      %3254 = vst [vmem:[%s3241 + $0x30] sm:$0x1] %v3213
      %3255 = vst [vmem:[%s3241 + $0x31] sm:$0x1] %v3214
      %3256 = vst [vmem:[%s3241 + $0x32] sm:$0x1] %v3215
      %3257 = vst [vmem:[%s3241 + $0x33] sm:$0x1] %v3216
      %3258 = vst [vmem:[%s3241 + $0x40] sm:$0x1] %v3217
      %3259 = vst [vmem:[%s3241 + $0x41] sm:$0x1] %v3218
      %3260 = vst [vmem:[%s3241 + $0x42] sm:$0x1] %v3219
      %3261 = vst [vmem:[%s3241 + $0x43] sm:$0x1] %v3220
      %3262 = vst [vmem:[%s3241 + $0x50] sm:$0x1] %v3221
      %3263 = vst [vmem:[%s3241 + $0x51] sm:$0x1] %v3222
      %3264 = vst [vmem:[%s3241 + $0x52] sm:$0x1] %v3223
      %3265 = vst [vmem:[%s3241 + $0x53] sm:$0x1] %v3224
      %3266 = vst [vmem:[%s3241 + $0x60] sm:$0x1] %v3225
      %3267 = vst [vmem:[%s3241 + $0x61] sm:$0x1] %v3226
      %3268 = vst [vmem:[%s3241 + $0x62] sm:$0x1] %v3227
      %3269 = vst [vmem:[%s3241 + $0x63] sm:$0x1] %v3228
      %3270 = vst [vmem:[%s3241 + $0x70] sm:$0x1] %v3229
      %3271 = vst [vmem:[%s3241 + $0x71] sm:$0x1] %v3230
      %3272 = vst [vmem:[%s3241 + $0x72] sm:$0x1] %v3231
      %3273 = vst [vmem:[%s3241 + $0x73] sm:$0x1] %v3232
      %3274 = vst [vmem:[%s3241 + $0x80] sm:$0x1] %v3233
      %3275 = vst [vmem:[%s3241 + $0x81] sm:$0x1] %v3234
      %3276 = vst [vmem:[%s3241 + $0x82] sm:$0x1] %v3235
      %3277 = vst [vmem:[%s3241 + $0x83] sm:$0x1] %v3236
      %3278 = vst [vmem:[%s3241 + $0x90] sm:$0x1] %v3237
      %3279 = vst [vmem:[%s3241 + $0x91] sm:$0x1] %v3238
      %3280 = vst [vmem:[%s3241 + $0x92] sm:$0x1] %v3239
      %3281 = vst [vmem:[%s3241 + $0x93] sm:$0x1] %v3240
      %v3282 = vld [vmem:[%s3160] sm:$0x1]
      %v3283 = vld [vmem:[%s3160 + $0x1] sm:$0x1]
      %v3284 = vld [vmem:[%s3160 + $0x2] sm:$0x1]
      %v3285 = vld [vmem:[%s3160 + $0x3] sm:$0x1]
      %v3286 = vld [vmem:[%s3160 + $0x28] sm:$0x1]
      %v3287 = vld [vmem:[%s3160 + $0x29] sm:$0x1]
      %v3288 = vld [vmem:[%s3160 + $0x2a] sm:$0x1]
      %v3289 = vld [vmem:[%s3160 + $0x2b] sm:$0x1]
      %v3290 = vld [vmem:[%s3160 + $0x50] sm:$0x1]
      %v3291 = vld [vmem:[%s3160 + $0x51] sm:$0x1]
      %v3292 = vld [vmem:[%s3160 + $0x52] sm:$0x1]
      %v3293 = vld [vmem:[%s3160 + $0x53] sm:$0x1]
      %v3294 = vld [vmem:[%s3160 + $0x78] sm:$0x1]
      %v3295 = vld [vmem:[%s3160 + $0x79] sm:$0x1]
      %v3296 = vld [vmem:[%s3160 + $0x7a] sm:$0x1]
      %v3297 = vld [vmem:[%s3160 + $0x7b] sm:$0x1]
      %v3298 = vld [vmem:[%s3160 + $0xa0] sm:$0x1]
      %v3299 = vld [vmem:[%s3160 + $0xa1] sm:$0x1]
      %v3300 = vld [vmem:[%s3160 + $0xa2] sm:$0x1]
      %v3301 = vld [vmem:[%s3160 + $0xa3] sm:$0x1]
      %v3302 = vld [vmem:[%s3160 + $0xc8] sm:$0x1]
      %v3303 = vld [vmem:[%s3160 + $0xc9] sm:$0x1]
      %v3304 = vld [vmem:[%s3160 + $0xca] sm:$0x1]
      %v3305 = vld [vmem:[%s3160 + $0xcb] sm:$0x1]
      %v3306 = vld [vmem:[%s3160 + $0xf0] sm:$0x1]
      %v3307 = vld [vmem:[%s3160 + $0xf1] sm:$0x1]
      %v3308 = vld [vmem:[%s3160 + $0xf2] sm:$0x1]
      %v3309 = vld [vmem:[%s3160 + $0xf3] sm:$0x1]
      %v3310 = vld [vmem:[%s3160 + $0x118] sm:$0x1]
      %v3311 = vld [vmem:[%s3160 + $0x119] sm:$0x1]
      %v3312 = vld [vmem:[%s3160 + $0x11a] sm:$0x1]
      %v3313 = vld [vmem:[%s3160 + $0x11b] sm:$0x1]
      %v3314 = vld [vmem:[%s3160 + $0x140] sm:$0x1]
      %v3315 = vld [vmem:[%s3160 + $0x141] sm:$0x1]
      %v3316 = vld [vmem:[%s3160 + $0x142] sm:$0x1]
      %v3317 = vld [vmem:[%s3160 + $0x143] sm:$0x1]
      %v3318 = vld [vmem:[%s3160 + $0x168] sm:$0x1]
      %v3319 = vld [vmem:[%s3160 + $0x169] sm:$0x1]
      %v3320 = vld [vmem:[%s3160 + $0x16a] sm:$0x1]
      %v3321 = vld [vmem:[%s3160 + $0x16b] sm:$0x1]
      %s3322 = scalar_lea.vmem [#allocation2], 28
      %v3323 = vld [vmem:[%s3322] sm:$0x1]
      %v3324 = vld [vmem:[%s3322 + $0x1] sm:$0x1]
      %v3325 = vld [vmem:[%s3322 + $0x2] sm:$0x1]
      %v3326 = vld [vmem:[%s3322 + $0x3] sm:$0x1]
      %v3327 = vld [vmem:[%s3322 + $0x28] sm:$0x1]
      %v3328 = vld [vmem:[%s3322 + $0x29] sm:$0x1]
      %v3329 = vld [vmem:[%s3322 + $0x2a] sm:$0x1]
      %v3330 = vld [vmem:[%s3322 + $0x2b] sm:$0x1]
      %v3331 = vld [vmem:[%s3322 + $0x50] sm:$0x1]
      %v3332 = vld [vmem:[%s3322 + $0x51] sm:$0x1]
      %v3333 = vld [vmem:[%s3322 + $0x52] sm:$0x1]
      %v3334 = vld [vmem:[%s3322 + $0x53] sm:$0x1]
      %v3335 = vld [vmem:[%s3322 + $0x78] sm:$0x1]
      %v3336 = vld [vmem:[%s3322 + $0x79] sm:$0x1]
      %v3337 = vld [vmem:[%s3322 + $0x7a] sm:$0x1]
      %v3338 = vld [vmem:[%s3322 + $0x7b] sm:$0x1]
      %v3339 = vld [vmem:[%s3322 + $0xa0] sm:$0x1]
      %v3340 = vld [vmem:[%s3322 + $0xa1] sm:$0x1]
      %v3341 = vld [vmem:[%s3322 + $0xa2] sm:$0x1]
      %v3342 = vld [vmem:[%s3322 + $0xa3] sm:$0x1]
      %v3343 = vld [vmem:[%s3322 + $0xc8] sm:$0x1]
      %v3344 = vld [vmem:[%s3322 + $0xc9] sm:$0x1]
      %v3345 = vld [vmem:[%s3322 + $0xca] sm:$0x1]
      %v3346 = vld [vmem:[%s3322 + $0xcb] sm:$0x1]
      %v3347 = vld [vmem:[%s3322 + $0xf0] sm:$0x1]
      %v3348 = vld [vmem:[%s3322 + $0xf1] sm:$0x1]
      %v3349 = vld [vmem:[%s3322 + $0xf2] sm:$0x1]
      %v3350 = vld [vmem:[%s3322 + $0xf3] sm:$0x1]
      %v3351 = vld [vmem:[%s3322 + $0x118] sm:$0x1]
      %v3352 = vld [vmem:[%s3322 + $0x119] sm:$0x1]
      %v3353 = vld [vmem:[%s3322 + $0x11a] sm:$0x1]
      %v3354 = vld [vmem:[%s3322 + $0x11b] sm:$0x1]
      %v3355 = vld [vmem:[%s3322 + $0x140] sm:$0x1]
      %v3356 = vld [vmem:[%s3322 + $0x141] sm:$0x1]
      %v3357 = vld [vmem:[%s3322 + $0x142] sm:$0x1]
      %v3358 = vld [vmem:[%s3322 + $0x143] sm:$0x1]
      %v3359 = vld [vmem:[%s3322 + $0x168] sm:$0x1]
      %v3360 = vld [vmem:[%s3322 + $0x169] sm:$0x1]
      %v3361 = vld [vmem:[%s3322 + $0x16a] sm:$0x1]
      %v3362 = vld [vmem:[%s3322 + $0x16b] sm:$0x1]
      %v3363 = vmax.f32 %v3282, %v3323
      %v3364 = vmax.f32 %v3283, %v3324
      %v3365 = vmax.f32 %v3284, %v3325
      %v3366 = vmax.f32 %v3285, %v3326
      %v3367 = vmax.f32 %v3286, %v3327
      %v3368 = vmax.f32 %v3287, %v3328
      %v3369 = vmax.f32 %v3288, %v3329
      %v3370 = vmax.f32 %v3289, %v3330
      %v3371 = vmax.f32 %v3290, %v3331
      %v3372 = vmax.f32 %v3291, %v3332
      %v3373 = vmax.f32 %v3292, %v3333
      %v3374 = vmax.f32 %v3293, %v3334
      %v3375 = vmax.f32 %v3294, %v3335
      %v3376 = vmax.f32 %v3295, %v3336
      %v3377 = vmax.f32 %v3296, %v3337
      %v3378 = vmax.f32 %v3297, %v3338
      %v3379 = vmax.f32 %v3298, %v3339
      %v3380 = vmax.f32 %v3299, %v3340
      %v3381 = vmax.f32 %v3300, %v3341
      %v3382 = vmax.f32 %v3301, %v3342
      %v3383 = vmax.f32 %v3302, %v3343
      %v3384 = vmax.f32 %v3303, %v3344
      %v3385 = vmax.f32 %v3304, %v3345
      %v3386 = vmax.f32 %v3305, %v3346
      %v3387 = vmax.f32 %v3306, %v3347
      %v3388 = vmax.f32 %v3307, %v3348
      %v3389 = vmax.f32 %v3308, %v3349
      %v3390 = vmax.f32 %v3309, %v3350
      %v3391 = vmax.f32 %v3310, %v3351
      %v3392 = vmax.f32 %v3311, %v3352
      %v3393 = vmax.f32 %v3312, %v3353
      %v3394 = vmax.f32 %v3313, %v3354
      %v3395 = vmax.f32 %v3314, %v3355
      %v3396 = vmax.f32 %v3315, %v3356
      %v3397 = vmax.f32 %v3316, %v3357
      %v3398 = vmax.f32 %v3317, %v3358
      %v3399 = vmax.f32 %v3318, %v3359
      %v3400 = vmax.f32 %v3319, %v3360
      %v3401 = vmax.f32 %v3320, %v3361
      %v3402 = vmax.f32 %v3321, %v3362
      %s3403 = scalar_lea.vmem [#allocation2], 32
      %v3404 = vld [vmem:[%s3403] sm:$0x1]
      %v3405 = vld [vmem:[%s3403 + $0x1] sm:$0x1]
      %v3406 = vld [vmem:[%s3403 + $0x2] sm:$0x1]
      %v3407 = vld [vmem:[%s3403 + $0x3] sm:$0x1]
      %v3408 = vld [vmem:[%s3403 + $0x28] sm:$0x1]
      %v3409 = vld [vmem:[%s3403 + $0x29] sm:$0x1]
      %v3410 = vld [vmem:[%s3403 + $0x2a] sm:$0x1]
      %v3411 = vld [vmem:[%s3403 + $0x2b] sm:$0x1]
      %v3412 = vld [vmem:[%s3403 + $0x50] sm:$0x1]
      %v3413 = vld [vmem:[%s3403 + $0x51] sm:$0x1]
      %v3414 = vld [vmem:[%s3403 + $0x52] sm:$0x1]
      %v3415 = vld [vmem:[%s3403 + $0x53] sm:$0x1]
      %v3416 = vld [vmem:[%s3403 + $0x78] sm:$0x1]
      %v3417 = vld [vmem:[%s3403 + $0x79] sm:$0x1]
      %v3418 = vld [vmem:[%s3403 + $0x7a] sm:$0x1]
      %v3419 = vld [vmem:[%s3403 + $0x7b] sm:$0x1]
      %v3420 = vld [vmem:[%s3403 + $0xa0] sm:$0x1]
      %v3421 = vld [vmem:[%s3403 + $0xa1] sm:$0x1]
      %v3422 = vld [vmem:[%s3403 + $0xa2] sm:$0x1]
      %v3423 = vld [vmem:[%s3403 + $0xa3] sm:$0x1]
      %v3424 = vld [vmem:[%s3403 + $0xc8] sm:$0x1]
      %v3425 = vld [vmem:[%s3403 + $0xc9] sm:$0x1]
      %v3426 = vld [vmem:[%s3403 + $0xca] sm:$0x1]
      %v3427 = vld [vmem:[%s3403 + $0xcb] sm:$0x1]
      %v3428 = vld [vmem:[%s3403 + $0xf0] sm:$0x1]
      %v3429 = vld [vmem:[%s3403 + $0xf1] sm:$0x1]
      %v3430 = vld [vmem:[%s3403 + $0xf2] sm:$0x1]
      %v3431 = vld [vmem:[%s3403 + $0xf3] sm:$0x1]
      %v3432 = vld [vmem:[%s3403 + $0x118] sm:$0x1]
      %v3433 = vld [vmem:[%s3403 + $0x119] sm:$0x1]
      %v3434 = vld [vmem:[%s3403 + $0x11a] sm:$0x1]
      %v3435 = vld [vmem:[%s3403 + $0x11b] sm:$0x1]
      %v3436 = vld [vmem:[%s3403 + $0x140] sm:$0x1]
      %v3437 = vld [vmem:[%s3403 + $0x141] sm:$0x1]
      %v3438 = vld [vmem:[%s3403 + $0x142] sm:$0x1]
      %v3439 = vld [vmem:[%s3403 + $0x143] sm:$0x1]
      %v3440 = vld [vmem:[%s3403 + $0x168] sm:$0x1]
      %v3441 = vld [vmem:[%s3403 + $0x169] sm:$0x1]
      %v3442 = vld [vmem:[%s3403 + $0x16a] sm:$0x1]
      %v3443 = vld [vmem:[%s3403 + $0x16b] sm:$0x1]
      %v3444 = vmax.f32 %v3363, %v3404
      %v3445 = vmax.f32 %v3364, %v3405
      %v3446 = vmax.f32 %v3365, %v3406
      %v3447 = vmax.f32 %v3366, %v3407
      %v3448 = vmax.f32 %v3367, %v3408
      %v3449 = vmax.f32 %v3368, %v3409
      %v3450 = vmax.f32 %v3369, %v3410
      %v3451 = vmax.f32 %v3370, %v3411
      %v3452 = vmax.f32 %v3371, %v3412
      %v3453 = vmax.f32 %v3372, %v3413
      %v3454 = vmax.f32 %v3373, %v3414
      %v3455 = vmax.f32 %v3374, %v3415
      %v3456 = vmax.f32 %v3375, %v3416
      %v3457 = vmax.f32 %v3376, %v3417
      %v3458 = vmax.f32 %v3377, %v3418
      %v3459 = vmax.f32 %v3378, %v3419
      %v3460 = vmax.f32 %v3379, %v3420
      %v3461 = vmax.f32 %v3380, %v3421
      %v3462 = vmax.f32 %v3381, %v3422
      %v3463 = vmax.f32 %v3382, %v3423
      %v3464 = vmax.f32 %v3383, %v3424
      %v3465 = vmax.f32 %v3384, %v3425
      %v3466 = vmax.f32 %v3385, %v3426
      %v3467 = vmax.f32 %v3386, %v3427
      %v3468 = vmax.f32 %v3387, %v3428
      %v3469 = vmax.f32 %v3388, %v3429
      %v3470 = vmax.f32 %v3389, %v3430
      %v3471 = vmax.f32 %v3390, %v3431
      %v3472 = vmax.f32 %v3391, %v3432
      %v3473 = vmax.f32 %v3392, %v3433
      %v3474 = vmax.f32 %v3393, %v3434
      %v3475 = vmax.f32 %v3394, %v3435
      %v3476 = vmax.f32 %v3395, %v3436
      %v3477 = vmax.f32 %v3396, %v3437
      %v3478 = vmax.f32 %v3397, %v3438
      %v3479 = vmax.f32 %v3398, %v3439
      %v3480 = vmax.f32 %v3399, %v3440
      %v3481 = vmax.f32 %v3400, %v3441
      %v3482 = vmax.f32 %v3401, %v3442
      %v3483 = vmax.f32 %v3402, %v3443
      %s3484 = scalar_lea.vmem [#allocation3], 12
      %3485 = vst [vmem:[%s3484] sm:$0x1] %v3444
      %3486 = vst [vmem:[%s3484 + $0x1] sm:$0x1] %v3445
      %3487 = vst [vmem:[%s3484 + $0x2] sm:$0x1] %v3446
      %3488 = vst [vmem:[%s3484 + $0x3] sm:$0x1] %v3447
      %3489 = vst [vmem:[%s3484 + $0x10] sm:$0x1] %v3448
      %3490 = vst [vmem:[%s3484 + $0x11] sm:$0x1] %v3449
      %3491 = vst [vmem:[%s3484 + $0x12] sm:$0x1] %v3450
      %3492 = vst [vmem:[%s3484 + $0x13] sm:$0x1] %v3451
      %3493 = vst [vmem:[%s3484 + $0x20] sm:$0x1] %v3452
      %3494 = vst [vmem:[%s3484 + $0x21] sm:$0x1] %v3453
      %3495 = vst [vmem:[%s3484 + $0x22] sm:$0x1] %v3454
      %3496 = vst [vmem:[%s3484 + $0x23] sm:$0x1] %v3455
      %3497 = vst [vmem:[%s3484 + $0x30] sm:$0x1] %v3456
      %3498 = vst [vmem:[%s3484 + $0x31] sm:$0x1] %v3457
      %3499 = vst [vmem:[%s3484 + $0x32] sm:$0x1] %v3458
      %3500 = vst [vmem:[%s3484 + $0x33] sm:$0x1] %v3459
      %3501 = vst [vmem:[%s3484 + $0x40] sm:$0x1] %v3460
      %3502 = vst [vmem:[%s3484 + $0x41] sm:$0x1] %v3461
      %3503 = vst [vmem:[%s3484 + $0x42] sm:$0x1] %v3462
      %3504 = vst [vmem:[%s3484 + $0x43] sm:$0x1] %v3463
      %3505 = vst [vmem:[%s3484 + $0x50] sm:$0x1] %v3464
      %3506 = vst [vmem:[%s3484 + $0x51] sm:$0x1] %v3465
      %3507 = vst [vmem:[%s3484 + $0x52] sm:$0x1] %v3466
      %3508 = vst [vmem:[%s3484 + $0x53] sm:$0x1] %v3467
      %3509 = vst [vmem:[%s3484 + $0x60] sm:$0x1] %v3468
      %3510 = vst [vmem:[%s3484 + $0x61] sm:$0x1] %v3469
      %3511 = vst [vmem:[%s3484 + $0x62] sm:$0x1] %v3470
      %3512 = vst [vmem:[%s3484 + $0x63] sm:$0x1] %v3471
      %3513 = vst [vmem:[%s3484 + $0x70] sm:$0x1] %v3472
      %3514 = vst [vmem:[%s3484 + $0x71] sm:$0x1] %v3473
      %3515 = vst [vmem:[%s3484 + $0x72] sm:$0x1] %v3474
      %3516 = vst [vmem:[%s3484 + $0x73] sm:$0x1] %v3475
      %3517 = vst [vmem:[%s3484 + $0x80] sm:$0x1] %v3476
      %3518 = vst [vmem:[%s3484 + $0x81] sm:$0x1] %v3477
      %3519 = vst [vmem:[%s3484 + $0x82] sm:$0x1] %v3478
      %3520 = vst [vmem:[%s3484 + $0x83] sm:$0x1] %v3479
      %3521 = vst [vmem:[%s3484 + $0x90] sm:$0x1] %v3480
      %3522 = vst [vmem:[%s3484 + $0x91] sm:$0x1] %v3481
      %3523 = vst [vmem:[%s3484 + $0x92] sm:$0x1] %v3482
      %3524 = vst [vmem:[%s3484 + $0x93] sm:$0x1] %v3483
      %v3525 = vld [vmem:[#allocation3] sm:$0x1]
      %v3526 = vld [vmem:[#allocation3 + $0x1] sm:$0x1]
      %v3527 = vld [vmem:[#allocation3 + $0x2] sm:$0x1]
      %v3528 = vld [vmem:[#allocation3 + $0x3] sm:$0x1]
      %v3529 = vld [vmem:[#allocation3 + $0x4] sm:$0x1]
      %v3530 = vld [vmem:[#allocation3 + $0x5] sm:$0x1]
      %v3531 = vld [vmem:[#allocation3 + $0x6] sm:$0x1]
      %v3532 = vld [vmem:[#allocation3 + $0x7] sm:$0x1]
      %v3533 = vld [vmem:[#allocation3 + $0x8] sm:$0x1]
      %v3534 = vld [vmem:[#allocation3 + $0x9] sm:$0x1]
      %v3535 = vld [vmem:[#allocation3 + $0xa] sm:$0x1]
      %v3536 = vld [vmem:[#allocation3 + $0xb] sm:$0x1]
      %v3537 = vld [vmem:[#allocation3 + $0xc] sm:$0x1]
      %v3538 = vld [vmem:[#allocation3 + $0xd] sm:$0x1]
      %v3539 = vld [vmem:[#allocation3 + $0xe] sm:$0x1]
      %v3540 = vld [vmem:[#allocation3 + $0xf] sm:$0x1]
      %s3541 = scalar_lea.vmem [#allocation3], 16
      %v3542 = vld [vmem:[%s3541] sm:$0x1]
      %v3543 = vld [vmem:[%s3541 + $0x1] sm:$0x1]
      %v3544 = vld [vmem:[%s3541 + $0x2] sm:$0x1]
      %v3545 = vld [vmem:[%s3541 + $0x3] sm:$0x1]
      %v3546 = vld [vmem:[%s3541 + $0x4] sm:$0x1]
      %v3547 = vld [vmem:[%s3541 + $0x5] sm:$0x1]
      %v3548 = vld [vmem:[%s3541 + $0x6] sm:$0x1]
      %v3549 = vld [vmem:[%s3541 + $0x7] sm:$0x1]
      %v3550 = vld [vmem:[%s3541 + $0x8] sm:$0x1]
      %v3551 = vld [vmem:[%s3541 + $0x9] sm:$0x1]
      %v3552 = vld [vmem:[%s3541 + $0xa] sm:$0x1]
      %v3553 = vld [vmem:[%s3541 + $0xb] sm:$0x1]
      %v3554 = vld [vmem:[%s3541 + $0xc] sm:$0x1]
      %v3555 = vld [vmem:[%s3541 + $0xd] sm:$0x1]
      %v3556 = vld [vmem:[%s3541 + $0xe] sm:$0x1]
      %v3557 = vld [vmem:[%s3541 + $0xf] sm:$0x1]
      %v3558 = vmax.f32 %v3525, %v3542
      %v3559 = vmax.f32 %v3526, %v3543
      %v3560 = vmax.f32 %v3527, %v3544
      %v3561 = vmax.f32 %v3528, %v3545
      %v3562 = vmax.f32 %v3529, %v3546
      %v3563 = vmax.f32 %v3530, %v3547
      %v3564 = vmax.f32 %v3531, %v3548
      %v3565 = vmax.f32 %v3532, %v3549
      %v3566 = vmax.f32 %v3533, %v3550
      %v3567 = vmax.f32 %v3534, %v3551
      %v3568 = vmax.f32 %v3535, %v3552
      %v3569 = vmax.f32 %v3536, %v3553
      %v3570 = vmax.f32 %v3537, %v3554
      %v3571 = vmax.f32 %v3538, %v3555
      %v3572 = vmax.f32 %v3539, %v3556
      %v3573 = vmax.f32 %v3540, %v3557
      %s3574 = scalar_lea.vmem [#allocation3], 32
      %v3575 = vld [vmem:[%s3574] sm:$0x1]
      %v3576 = vld [vmem:[%s3574 + $0x1] sm:$0x1]
      %v3577 = vld [vmem:[%s3574 + $0x2] sm:$0x1]
      %v3578 = vld [vmem:[%s3574 + $0x3] sm:$0x1]
      %v3579 = vld [vmem:[%s3574 + $0x4] sm:$0x1]
      %v3580 = vld [vmem:[%s3574 + $0x5] sm:$0x1]
      %v3581 = vld [vmem:[%s3574 + $0x6] sm:$0x1]
      %v3582 = vld [vmem:[%s3574 + $0x7] sm:$0x1]
      %v3583 = vld [vmem:[%s3574 + $0x8] sm:$0x1]
      %v3584 = vld [vmem:[%s3574 + $0x9] sm:$0x1]
      %v3585 = vld [vmem:[%s3574 + $0xa] sm:$0x1]
      %v3586 = vld [vmem:[%s3574 + $0xb] sm:$0x1]
      %v3587 = vld [vmem:[%s3574 + $0xc] sm:$0x1]
      %v3588 = vld [vmem:[%s3574 + $0xd] sm:$0x1]
      %v3589 = vld [vmem:[%s3574 + $0xe] sm:$0x1]
      %v3590 = vld [vmem:[%s3574 + $0xf] sm:$0x1]
      %v3591 = vmax.f32 %v3558, %v3575
      %v3592 = vmax.f32 %v3559, %v3576
      %v3593 = vmax.f32 %v3560, %v3577
      %v3594 = vmax.f32 %v3561, %v3578
      %v3595 = vmax.f32 %v3562, %v3579
      %v3596 = vmax.f32 %v3563, %v3580
      %v3597 = vmax.f32 %v3564, %v3581
      %v3598 = vmax.f32 %v3565, %v3582
      %v3599 = vmax.f32 %v3566, %v3583
      %v3600 = vmax.f32 %v3567, %v3584
      %v3601 = vmax.f32 %v3568, %v3585
      %v3602 = vmax.f32 %v3569, %v3586
      %v3603 = vmax.f32 %v3570, %v3587
      %v3604 = vmax.f32 %v3571, %v3588
      %v3605 = vmax.f32 %v3572, %v3589
      %v3606 = vmax.f32 %v3573, %v3590
      %3607 = vst [vmem:[%s142] sm:$0x1] %v3591
      %3608 = vst [vmem:[%s142 + $0x1] sm:$0x1] %v3592
      %3609 = vst [vmem:[%s142 + $0x2] sm:$0x1] %v3593
      %3610 = vst [vmem:[%s142 + $0x3] sm:$0x1] %v3594
      %3611 = vst [vmem:[%s142 + $0x4] sm:$0x1] %v3595
      %3612 = vst [vmem:[%s142 + $0x5] sm:$0x1] %v3596
      %3613 = vst [vmem:[%s142 + $0x6] sm:$0x1] %v3597
      %3614 = vst [vmem:[%s142 + $0x7] sm:$0x1] %v3598
      %3615 = vst [vmem:[%s142 + $0x8] sm:$0x1] %v3599
      %3616 = vst [vmem:[%s142 + $0x9] sm:$0x1] %v3600
      %3617 = vst [vmem:[%s142 + $0xa] sm:$0x1] %v3601
      %3618 = vst [vmem:[%s142 + $0xb] sm:$0x1] %v3602
      %3619 = vst [vmem:[%s142 + $0xc] sm:$0x1] %v3603
      %3620 = vst [vmem:[%s142 + $0xd] sm:$0x1] %v3604
      %3621 = vst [vmem:[%s142 + $0xe] sm:$0x1] %v3605
      %3622 = vst [vmem:[%s142 + $0xf] sm:$0x1] %v3606
      %v3623 = vld [vmem:[%s3574] sm:$0x1]
      %v3624 = vld [vmem:[%s3574 + $0x1] sm:$0x1]
      %v3625 = vld [vmem:[%s3574 + $0x2] sm:$0x1]
      %v3626 = vld [vmem:[%s3574 + $0x3] sm:$0x1]
      %v3627 = vld [vmem:[%s3574 + $0x4] sm:$0x1]
      %v3628 = vld [vmem:[%s3574 + $0x5] sm:$0x1]
      %v3629 = vld [vmem:[%s3574 + $0x6] sm:$0x1]
      %v3630 = vld [vmem:[%s3574 + $0x7] sm:$0x1]
      %v3631 = vld [vmem:[%s3574 + $0x8] sm:$0x1]
      %v3632 = vld [vmem:[%s3574 + $0x9] sm:$0x1]
      %v3633 = vld [vmem:[%s3574 + $0xa] sm:$0x1]
      %v3634 = vld [vmem:[%s3574 + $0xb] sm:$0x1]
      %v3635 = vld [vmem:[%s3574 + $0xc] sm:$0x1]
      %v3636 = vld [vmem:[%s3574 + $0xd] sm:$0x1]
      %v3637 = vld [vmem:[%s3574 + $0xe] sm:$0x1]
      %v3638 = vld [vmem:[%s3574 + $0xf] sm:$0x1]
      %s3639 = scalar_lea.vmem [#allocation3], 48
      %v3640 = vld [vmem:[%s3639] sm:$0x1]
      %v3641 = vld [vmem:[%s3639 + $0x1] sm:$0x1]
      %v3642 = vld [vmem:[%s3639 + $0x2] sm:$0x1]
      %v3643 = vld [vmem:[%s3639 + $0x3] sm:$0x1]
      %v3644 = vld [vmem:[%s3639 + $0x4] sm:$0x1]
      %v3645 = vld [vmem:[%s3639 + $0x5] sm:$0x1]
      %v3646 = vld [vmem:[%s3639 + $0x6] sm:$0x1]
      %v3647 = vld [vmem:[%s3639 + $0x7] sm:$0x1]
      %v3648 = vld [vmem:[%s3639 + $0x8] sm:$0x1]
      %v3649 = vld [vmem:[%s3639 + $0x9] sm:$0x1]
      %v3650 = vld [vmem:[%s3639 + $0xa] sm:$0x1]
      %v3651 = vld [vmem:[%s3639 + $0xb] sm:$0x1]
      %v3652 = vld [vmem:[%s3639 + $0xc] sm:$0x1]
      %v3653 = vld [vmem:[%s3639 + $0xd] sm:$0x1]
      %v3654 = vld [vmem:[%s3639 + $0xe] sm:$0x1]
      %v3655 = vld [vmem:[%s3639 + $0xf] sm:$0x1]
      %v3656 = vmax.f32 %v3623, %v3640
      %v3657 = vmax.f32 %v3624, %v3641
      %v3658 = vmax.f32 %v3625, %v3642
      %v3659 = vmax.f32 %v3626, %v3643
      %v3660 = vmax.f32 %v3627, %v3644
      %v3661 = vmax.f32 %v3628, %v3645
      %v3662 = vmax.f32 %v3629, %v3646
      %v3663 = vmax.f32 %v3630, %v3647
      %v3664 = vmax.f32 %v3631, %v3648
      %v3665 = vmax.f32 %v3632, %v3649
      %v3666 = vmax.f32 %v3633, %v3650
      %v3667 = vmax.f32 %v3634, %v3651
      %v3668 = vmax.f32 %v3635, %v3652
      %v3669 = vmax.f32 %v3636, %v3653
      %v3670 = vmax.f32 %v3637, %v3654
      %v3671 = vmax.f32 %v3638, %v3655
      %s3672 = scalar_lea.vmem [#allocation3], 64
      %v3673 = vld [vmem:[%s3672] sm:$0x1]
      %v3674 = vld [vmem:[%s3672 + $0x1] sm:$0x1]
      %v3675 = vld [vmem:[%s3672 + $0x2] sm:$0x1]
      %v3676 = vld [vmem:[%s3672 + $0x3] sm:$0x1]
      %v3677 = vld [vmem:[%s3672 + $0x4] sm:$0x1]
      %v3678 = vld [vmem:[%s3672 + $0x5] sm:$0x1]
      %v3679 = vld [vmem:[%s3672 + $0x6] sm:$0x1]
      %v3680 = vld [vmem:[%s3672 + $0x7] sm:$0x1]
      %v3681 = vld [vmem:[%s3672 + $0x8] sm:$0x1]
      %v3682 = vld [vmem:[%s3672 + $0x9] sm:$0x1]
      %v3683 = vld [vmem:[%s3672 + $0xa] sm:$0x1]
      %v3684 = vld [vmem:[%s3672 + $0xb] sm:$0x1]
      %v3685 = vld [vmem:[%s3672 + $0xc] sm:$0x1]
      %v3686 = vld [vmem:[%s3672 + $0xd] sm:$0x1]
      %v3687 = vld [vmem:[%s3672 + $0xe] sm:$0x1]
      %v3688 = vld [vmem:[%s3672 + $0xf] sm:$0x1]
      %v3689 = vmax.f32 %v3656, %v3673
      %v3690 = vmax.f32 %v3657, %v3674
      %v3691 = vmax.f32 %v3658, %v3675
      %v3692 = vmax.f32 %v3659, %v3676
      %v3693 = vmax.f32 %v3660, %v3677
      %v3694 = vmax.f32 %v3661, %v3678
      %v3695 = vmax.f32 %v3662, %v3679
      %v3696 = vmax.f32 %v3663, %v3680
      %v3697 = vmax.f32 %v3664, %v3681
      %v3698 = vmax.f32 %v3665, %v3682
      %v3699 = vmax.f32 %v3666, %v3683
      %v3700 = vmax.f32 %v3667, %v3684
      %v3701 = vmax.f32 %v3668, %v3685
      %v3702 = vmax.f32 %v3669, %v3686
      %v3703 = vmax.f32 %v3670, %v3687
      %v3704 = vmax.f32 %v3671, %v3688
      %s3705 = scalar_lea.vmem %s142, 16
      %3706 = vst [vmem:[%s3705] sm:$0x1] %v3689
      %3707 = vst [vmem:[%s3705 + $0x1] sm:$0x1] %v3690
      %3708 = vst [vmem:[%s3705 + $0x2] sm:$0x1] %v3691
      %3709 = vst [vmem:[%s3705 + $0x3] sm:$0x1] %v3692
      %3710 = vst [vmem:[%s3705 + $0x4] sm:$0x1] %v3693
      %3711 = vst [vmem:[%s3705 + $0x5] sm:$0x1] %v3694
      %3712 = vst [vmem:[%s3705 + $0x6] sm:$0x1] %v3695
      %3713 = vst [vmem:[%s3705 + $0x7] sm:$0x1] %v3696
      %3714 = vst [vmem:[%s3705 + $0x8] sm:$0x1] %v3697
      %3715 = vst [vmem:[%s3705 + $0x9] sm:$0x1] %v3698
      %3716 = vst [vmem:[%s3705 + $0xa] sm:$0x1] %v3699
      %3717 = vst [vmem:[%s3705 + $0xb] sm:$0x1] %v3700
      %3718 = vst [vmem:[%s3705 + $0xc] sm:$0x1] %v3701
      %3719 = vst [vmem:[%s3705 + $0xd] sm:$0x1] %v3702
      %3720 = vst [vmem:[%s3705 + $0xe] sm:$0x1] %v3703
      %3721 = vst [vmem:[%s3705 + $0xf] sm:$0x1] %v3704
      %v3722 = vld [vmem:[%s3672] sm:$0x1]
      %v3723 = vld [vmem:[%s3672 + $0x1] sm:$0x1]
      %v3724 = vld [vmem:[%s3672 + $0x2] sm:$0x1]
      %v3725 = vld [vmem:[%s3672 + $0x3] sm:$0x1]
      %v3726 = vld [vmem:[%s3672 + $0x4] sm:$0x1]
      %v3727 = vld [vmem:[%s3672 + $0x5] sm:$0x1]
      %v3728 = vld [vmem:[%s3672 + $0x6] sm:$0x1]
      %v3729 = vld [vmem:[%s3672 + $0x7] sm:$0x1]
      %v3730 = vld [vmem:[%s3672 + $0x8] sm:$0x1]
      %v3731 = vld [vmem:[%s3672 + $0x9] sm:$0x1]
      %v3732 = vld [vmem:[%s3672 + $0xa] sm:$0x1]
      %v3733 = vld [vmem:[%s3672 + $0xb] sm:$0x1]
      %v3734 = vld [vmem:[%s3672 + $0xc] sm:$0x1]
      %v3735 = vld [vmem:[%s3672 + $0xd] sm:$0x1]
      %v3736 = vld [vmem:[%s3672 + $0xe] sm:$0x1]
      %v3737 = vld [vmem:[%s3672 + $0xf] sm:$0x1]
      %s3738 = scalar_lea.vmem [#allocation3], 80
      %v3739 = vld [vmem:[%s3738] sm:$0x1]
      %v3740 = vld [vmem:[%s3738 + $0x1] sm:$0x1]
      %v3741 = vld [vmem:[%s3738 + $0x2] sm:$0x1]
      %v3742 = vld [vmem:[%s3738 + $0x3] sm:$0x1]
      %v3743 = vld [vmem:[%s3738 + $0x4] sm:$0x1]
      %v3744 = vld [vmem:[%s3738 + $0x5] sm:$0x1]
      %v3745 = vld [vmem:[%s3738 + $0x6] sm:$0x1]
      %v3746 = vld [vmem:[%s3738 + $0x7] sm:$0x1]
      %v3747 = vld [vmem:[%s3738 + $0x8] sm:$0x1]
      %v3748 = vld [vmem:[%s3738 + $0x9] sm:$0x1]
      %v3749 = vld [vmem:[%s3738 + $0xa] sm:$0x1]
      %v3750 = vld [vmem:[%s3738 + $0xb] sm:$0x1]
      %v3751 = vld [vmem:[%s3738 + $0xc] sm:$0x1]
      %v3752 = vld [vmem:[%s3738 + $0xd] sm:$0x1]
      %v3753 = vld [vmem:[%s3738 + $0xe] sm:$0x1]
      %v3754 = vld [vmem:[%s3738 + $0xf] sm:$0x1]
      %v3755 = vmax.f32 %v3722, %v3739
      %v3756 = vmax.f32 %v3723, %v3740
      %v3757 = vmax.f32 %v3724, %v3741
      %v3758 = vmax.f32 %v3725, %v3742
      %v3759 = vmax.f32 %v3726, %v3743
      %v3760 = vmax.f32 %v3727, %v3744
      %v3761 = vmax.f32 %v3728, %v3745
      %v3762 = vmax.f32 %v3729, %v3746
      %v3763 = vmax.f32 %v3730, %v3747
      %v3764 = vmax.f32 %v3731, %v3748
      %v3765 = vmax.f32 %v3732, %v3749
      %v3766 = vmax.f32 %v3733, %v3750
      %v3767 = vmax.f32 %v3734, %v3751
      %v3768 = vmax.f32 %v3735, %v3752
      %v3769 = vmax.f32 %v3736, %v3753
      %v3770 = vmax.f32 %v3737, %v3754
      %s3771 = scalar_lea.vmem [#allocation3], 96
      %v3772 = vld [vmem:[%s3771] sm:$0x1]
      %v3773 = vld [vmem:[%s3771 + $0x1] sm:$0x1]
      %v3774 = vld [vmem:[%s3771 + $0x2] sm:$0x1]
      %v3775 = vld [vmem:[%s3771 + $0x3] sm:$0x1]
      %v3776 = vld [vmem:[%s3771 + $0x4] sm:$0x1]
      %v3777 = vld [vmem:[%s3771 + $0x5] sm:$0x1]
      %v3778 = vld [vmem:[%s3771 + $0x6] sm:$0x1]
      %v3779 = vld [vmem:[%s3771 + $0x7] sm:$0x1]
      %v3780 = vld [vmem:[%s3771 + $0x8] sm:$0x1]
      %v3781 = vld [vmem:[%s3771 + $0x9] sm:$0x1]
      %v3782 = vld [vmem:[%s3771 + $0xa] sm:$0x1]
      %v3783 = vld [vmem:[%s3771 + $0xb] sm:$0x1]
      %v3784 = vld [vmem:[%s3771 + $0xc] sm:$0x1]
      %v3785 = vld [vmem:[%s3771 + $0xd] sm:$0x1]
      %v3786 = vld [vmem:[%s3771 + $0xe] sm:$0x1]
      %v3787 = vld [vmem:[%s3771 + $0xf] sm:$0x1]
      %v3788 = vmax.f32 %v3755, %v3772
      %v3789 = vmax.f32 %v3756, %v3773
      %v3790 = vmax.f32 %v3757, %v3774
      %v3791 = vmax.f32 %v3758, %v3775
      %v3792 = vmax.f32 %v3759, %v3776
      %v3793 = vmax.f32 %v3760, %v3777
      %v3794 = vmax.f32 %v3761, %v3778
      %v3795 = vmax.f32 %v3762, %v3779
      %v3796 = vmax.f32 %v3763, %v3780
      %v3797 = vmax.f32 %v3764, %v3781
      %v3798 = vmax.f32 %v3765, %v3782
      %v3799 = vmax.f32 %v3766, %v3783
      %v3800 = vmax.f32 %v3767, %v3784
      %v3801 = vmax.f32 %v3768, %v3785
      %v3802 = vmax.f32 %v3769, %v3786
      %v3803 = vmax.f32 %v3770, %v3787
      %s3804 = scalar_lea.vmem %s142, 32
      %3805 = vst [vmem:[%s3804] sm:$0x1] %v3788
      %3806 = vst [vmem:[%s3804 + $0x1] sm:$0x1] %v3789
      %3807 = vst [vmem:[%s3804 + $0x2] sm:$0x1] %v3790
      %3808 = vst [vmem:[%s3804 + $0x3] sm:$0x1] %v3791
      %3809 = vst [vmem:[%s3804 + $0x4] sm:$0x1] %v3792
      %3810 = vst [vmem:[%s3804 + $0x5] sm:$0x1] %v3793
      %3811 = vst [vmem:[%s3804 + $0x6] sm:$0x1] %v3794
      %3812 = vst [vmem:[%s3804 + $0x7] sm:$0x1] %v3795
      %3813 = vst [vmem:[%s3804 + $0x8] sm:$0x1] %v3796
      %3814 = vst [vmem:[%s3804 + $0x9] sm:$0x1] %v3797
      %3815 = vst [vmem:[%s3804 + $0xa] sm:$0x1] %v3798
      %3816 = vst [vmem:[%s3804 + $0xb] sm:$0x1] %v3799
      %3817 = vst [vmem:[%s3804 + $0xc] sm:$0x1] %v3800
      %3818 = vst [vmem:[%s3804 + $0xd] sm:$0x1] %v3801
      %3819 = vst [vmem:[%s3804 + $0xe] sm:$0x1] %v3802
      %3820 = vst [vmem:[%s3804 + $0xf] sm:$0x1] %v3803
      %v3821 = vld [vmem:[%s3771] sm:$0x1]
      %v3822 = vld [vmem:[%s3771 + $0x1] sm:$0x1]
      %v3823 = vld [vmem:[%s3771 + $0x2] sm:$0x1]
      %v3824 = vld [vmem:[%s3771 + $0x3] sm:$0x1]
      %v3825 = vld [vmem:[%s3771 + $0x4] sm:$0x1]
      %v3826 = vld [vmem:[%s3771 + $0x5] sm:$0x1]
      %v3827 = vld [vmem:[%s3771 + $0x6] sm:$0x1]
      %v3828 = vld [vmem:[%s3771 + $0x7] sm:$0x1]
      %v3829 = vld [vmem:[%s3771 + $0x8] sm:$0x1]
      %v3830 = vld [vmem:[%s3771 + $0x9] sm:$0x1]
      %v3831 = vld [vmem:[%s3771 + $0xa] sm:$0x1]
      %v3832 = vld [vmem:[%s3771 + $0xb] sm:$0x1]
      %v3833 = vld [vmem:[%s3771 + $0xc] sm:$0x1]
      %v3834 = vld [vmem:[%s3771 + $0xd] sm:$0x1]
      %v3835 = vld [vmem:[%s3771 + $0xe] sm:$0x1]
      %v3836 = vld [vmem:[%s3771 + $0xf] sm:$0x1]
      %s3837 = scalar_lea.vmem [#allocation3], 112
      %v3838 = vld [vmem:[%s3837] sm:$0x1]
      %v3839 = vld [vmem:[%s3837 + $0x1] sm:$0x1]
      %v3840 = vld [vmem:[%s3837 + $0x2] sm:$0x1]
      %v3841 = vld [vmem:[%s3837 + $0x3] sm:$0x1]
      %v3842 = vld [vmem:[%s3837 + $0x4] sm:$0x1]
      %v3843 = vld [vmem:[%s3837 + $0x5] sm:$0x1]
      %v3844 = vld [vmem:[%s3837 + $0x6] sm:$0x1]
      %v3845 = vld [vmem:[%s3837 + $0x7] sm:$0x1]
      %v3846 = vld [vmem:[%s3837 + $0x8] sm:$0x1]
      %v3847 = vld [vmem:[%s3837 + $0x9] sm:$0x1]
      %v3848 = vld [vmem:[%s3837 + $0xa] sm:$0x1]
      %v3849 = vld [vmem:[%s3837 + $0xb] sm:$0x1]
      %v3850 = vld [vmem:[%s3837 + $0xc] sm:$0x1]
      %v3851 = vld [vmem:[%s3837 + $0xd] sm:$0x1]
      %v3852 = vld [vmem:[%s3837 + $0xe] sm:$0x1]
      %v3853 = vld [vmem:[%s3837 + $0xf] sm:$0x1]
      %v3854 = vmax.f32 %v3821, %v3838
      %v3855 = vmax.f32 %v3822, %v3839
      %v3856 = vmax.f32 %v3823, %v3840
      %v3857 = vmax.f32 %v3824, %v3841
      %v3858 = vmax.f32 %v3825, %v3842
      %v3859 = vmax.f32 %v3826, %v3843
      %v3860 = vmax.f32 %v3827, %v3844
      %v3861 = vmax.f32 %v3828, %v3845
      %v3862 = vmax.f32 %v3829, %v3846
      %v3863 = vmax.f32 %v3830, %v3847
      %v3864 = vmax.f32 %v3831, %v3848
      %v3865 = vmax.f32 %v3832, %v3849
      %v3866 = vmax.f32 %v3833, %v3850
      %v3867 = vmax.f32 %v3834, %v3851
      %v3868 = vmax.f32 %v3835, %v3852
      %v3869 = vmax.f32 %v3836, %v3853
      %s3870 = scalar_lea.vmem [#allocation3], 128
      %v3871 = vld [vmem:[%s3870] sm:$0x1]
      %v3872 = vld [vmem:[%s3870 + $0x1] sm:$0x1]
      %v3873 = vld [vmem:[%s3870 + $0x2] sm:$0x1]
      %v3874 = vld [vmem:[%s3870 + $0x3] sm:$0x1]
      %v3875 = vld [vmem:[%s3870 + $0x4] sm:$0x1]
      %v3876 = vld [vmem:[%s3870 + $0x5] sm:$0x1]
      %v3877 = vld [vmem:[%s3870 + $0x6] sm:$0x1]
      %v3878 = vld [vmem:[%s3870 + $0x7] sm:$0x1]
      %v3879 = vld [vmem:[%s3870 + $0x8] sm:$0x1]
      %v3880 = vld [vmem:[%s3870 + $0x9] sm:$0x1]
      %v3881 = vld [vmem:[%s3870 + $0xa] sm:$0x1]
      %v3882 = vld [vmem:[%s3870 + $0xb] sm:$0x1]
      %v3883 = vld [vmem:[%s3870 + $0xc] sm:$0x1]
      %v3884 = vld [vmem:[%s3870 + $0xd] sm:$0x1]
      %v3885 = vld [vmem:[%s3870 + $0xe] sm:$0x1]
      %v3886 = vld [vmem:[%s3870 + $0xf] sm:$0x1]
      %v3887 = vmax.f32 %v3854, %v3871
      %v3888 = vmax.f32 %v3855, %v3872
      %v3889 = vmax.f32 %v3856, %v3873
      %v3890 = vmax.f32 %v3857, %v3874
      %v3891 = vmax.f32 %v3858, %v3875
      %v3892 = vmax.f32 %v3859, %v3876
      %v3893 = vmax.f32 %v3860, %v3877
      %v3894 = vmax.f32 %v3861, %v3878
      %v3895 = vmax.f32 %v3862, %v3879
      %v3896 = vmax.f32 %v3863, %v3880
      %v3897 = vmax.f32 %v3864, %v3881
      %v3898 = vmax.f32 %v3865, %v3882
      %v3899 = vmax.f32 %v3866, %v3883
      %v3900 = vmax.f32 %v3867, %v3884
      %v3901 = vmax.f32 %v3868, %v3885
      %v3902 = vmax.f32 %v3869, %v3886
      %s3903 = scalar_lea.vmem %s142, 48
      %3904 = vst [vmem:[%s3903] sm:$0x1] %v3887
      %3905 = vst [vmem:[%s3903 + $0x1] sm:$0x1] %v3888
      %3906 = vst [vmem:[%s3903 + $0x2] sm:$0x1] %v3889
      %3907 = vst [vmem:[%s3903 + $0x3] sm:$0x1] %v3890
      %3908 = vst [vmem:[%s3903 + $0x4] sm:$0x1] %v3891
      %3909 = vst [vmem:[%s3903 + $0x5] sm:$0x1] %v3892
      %3910 = vst [vmem:[%s3903 + $0x6] sm:$0x1] %v3893
      %3911 = vst [vmem:[%s3903 + $0x7] sm:$0x1] %v3894
      %3912 = vst [vmem:[%s3903 + $0x8] sm:$0x1] %v3895
      %3913 = vst [vmem:[%s3903 + $0x9] sm:$0x1] %v3896
      %3914 = vst [vmem:[%s3903 + $0xa] sm:$0x1] %v3897
      %3915 = vst [vmem:[%s3903 + $0xb] sm:$0x1] %v3898
      %3916 = vst [vmem:[%s3903 + $0xc] sm:$0x1] %v3899
      %3917 = vst [vmem:[%s3903 + $0xd] sm:$0x1] %v3900
      %3918 = vst [vmem:[%s3903 + $0xe] sm:$0x1] %v3901
      %3919 = vst [vmem:[%s3903 + $0xf] sm:$0x1] %v3902
      %p3920 = scmp.lt.s32.totalorder %s16, 7
      %s3921 = scalar_select %p3920, %s16, 7
      %p3922 = scmp.lt.s32.totalorder %s17, 0
      %s3923 = scalar_select %p3922, %s17, 0
      %s3924 = smul.addr %s3921, 64
      %s3925 = sadd.s32 %s3923, %s3924
      %s3926 = scalar_lea.vmem %s1, %s3925
      // Predicated region
      $region25: #{maxpool4d_pallas.1} parent=23 // pred_check
        %p3927 = pneg %p72
      $region26: #{maxpool4d_pallas.1} parent=23 // pred_check_branch
        %3929 = sbr.rel (%p3927) target = $region28
      $region27: #{maxpool4d_pallas.1} parent=23 // pred_region
        _
      $region28: #{maxpool4d_pallas.1} parent=23 // pred_fallthru
        _
    $region24: #{maxpool4d_pallas.1} parent=5 // pred_fallthru
      _
    %p3930 = scmp.le.s32.totalorder 2, %s7
    // Predicated region
    $region29: #{maxpool4d_pallas.1} parent=5 // pred_check
      %p3931 = pneg %p3930
    $region30: #{maxpool4d_pallas.1} parent=5 // pred_check_branch
      %3933 = sbr.rel (%p3931) target = $region32
    $region31: #{maxpool4d_pallas.1} parent=5 // pred_region
      %s3934 = ssub.s32 %s7, 2
      // Predicated region
      $region33: #{maxpool4d_pallas.1} parent=31 // pred_check
        %p3935 = pneg %p78
      $region34: #{maxpool4d_pallas.1} parent=31 // pred_check_branch
        %3937 = sbr.rel (%p3935) target = $region36
      $region35: #{maxpool4d_pallas.1} parent=31 // pred_region
        %p3938 = scmp.lt.s32.totalorder %s18, 7
        %s3939 = scalar_select %p3938, %s18, 7
        %p3940 = scmp.lt.s32.totalorder %s19, 0
        %s3941 = scalar_select %p3940, %s19, 0
        %s3942 = smul.addr %s3939, 64
        %s3943 = sadd.s32 %s3941, %s3942
        %s3944 = scalar_lea.vmem %s1, %s3943
      $region36: #{maxpool4d_pallas.1} parent=31 // pred_fallthru
        _
    $region32: #{maxpool4d_pallas.1} parent=5 // pred_fallthru
      _
  $region6: #{maxpool4d_pallas.1} parent=0 // loop_footer
    %s11 = sadd.s32 1, %s7
  $region7: #{maxpool4d_pallas.1} parent=0 // loop_footer_branch
    %6 = sbr.rel target = $region3
  $region8: #{maxpool4d_pallas.1} parent=0 // loop_exit
    _

</llo_original>
